<compile_context>
chip_gen: v5e
topology: v5e:2x2
jax: 0.10.0
libtpu: 0.0.40
codegen_flags: <defaults>
</compile_context>

<pallas_src>
import jax
import jax.numpy as jnp
from jax.experimental import pallas as pl
from jax.experimental.pallas import tpu as pltpu


def _make_gcn_kernel(cin, cout, k, H, W, NB):
    p = (k - 1) // 2
    Wp = W + 2 * p          # per-sample padded slot width (lane axis)
    Wt = NB * Wp            # total packed lane width
    Wc = Wt - 2 * p         # width of the shifted-tap accumulators

    def kernel(x_ref, w1a, w1b, w2a, w2b, o_ref, xpad):
        f32 = jnp.float32

        # Zero the halo'd input scratch every step (safe under megacore
        # sharding of the "parallel" batch axis), then drop each of the NB
        # samples into its own lane slot.
        xpad[...] = jnp.zeros_like(xpad)
        for n in range(NB):
            off = n * Wp + p
            for ci in range(cin):
                xpad[ci, p:p + H, off:off + W] = x_ref[n, ci].astype(f32)

        # ---- stage 1: Cin -> Cout channel mix of both branches -------------
        # branch1 first conv is (1,k) horizontal: keep ALL padded rows so its
        #   (zero) halo rows become the vertical halo of the second conv.
        # branch2 first conv is (k,1) vertical: keep ALL padded columns so its
        #   (zero) halo columns become the horizontal halo of the second conv.
        acc1 = [jnp.zeros((H + 2 * p, Wc), f32) for _ in range(cout)]
        acc2 = [jnp.zeros((H, Wt), f32) for _ in range(cout)]
        for ci in range(cin):
            for t in range(k):
                xs_h = xpad[ci, :, t:t + Wc]        # shift along W (lanes)
                xs_v = xpad[ci, t:t + H, :]         # shift along H (sublanes)
                for co in range(cout):
                    widx = (t * cin + ci) * cout + co
                    acc1[co] = acc1[co] + w1a[widx] * xs_h
                    acc2[co] = acc2[co] + w2a[widx] * xs_v

        # ---- stage 2: Cout -> Cout second convs + final add -----------------
        out = [jnp.zeros((H, Wc), f32) for _ in range(cout)]
        for cm in range(cout):
            for t in range(k):
                xs_v = acc1[cm][t:t + H, :]          # branch1: (k,1) vertical
                xs_h = acc2[cm][:, t:t + Wc]         # branch2: (1,k) horizontal
                for co in range(cout):
                    widx = (t * cout + cm) * cout + co
                    out[co] = out[co] + w1b[widx] * xs_v + w2b[widx] * xs_h

        # Extract each sample's (H, W) window from the packed lane layout.
        for n in range(NB):
            off = n * Wp
            for co in range(cout):
                o_ref[n, co] = out[co][:, off:off + W].astype(o_ref.dtype)

    return kernel


def _torch_w_to_flat(w_oihw):
    """PyTorch Conv2d weight (Cout, Cin, kh, kw), kh==1 or kw==1
    -> flat (k*Cin*Cout,) f32 with index (t*Cin + ci)*Cout + co."""
    Cout, Cin, kh, kw = w_oihw.shape
    taps = jnp.transpose(w_oihw.reshape(Cout, Cin, kh * kw), (2, 1, 0))  # (k,Cin,Cout)
    return taps.reshape(-1).astype(jnp.float32)


def _pick_group(N, Cin, H, W, p, lane_budget=256, vmem_budget=8 * 1024 * 1024):
    """Largest divisor of N whose packed lane width / scratch fits the budget."""
    Wp = W + 2 * p
    best = 1
    for d in range(1, N + 1):
        if N % d:
            continue
        if d * Wp <= lane_budget and Cin * (H + 2 * p) * d * Wp * 4 <= vmem_budget:
            best = d
    return best


def global_conv_module(x_nchw, params, k):
    """Forward of _GlobalConvModule. x_nchw: (N, Cin, H, W) float32 -> (N, Cout, H, W)."""
    N, Cin, H, W = x_nchw.shape
    Cout = params["conv1_a"].shape[0]
    assert k % 2 == 1, "GCN expects odd kernel size"
    p = (k - 1) // 2

    NB = _pick_group(N, Cin, H, W, p)
    Wp = W + 2 * p

    w1a = _torch_w_to_flat(params["conv1_a"])
    w1b = _torch_w_to_flat(params["conv1_b"])
    w2a = _torch_w_to_flat(params["conv2_a"])
    w2b = _torch_w_to_flat(params["conv2_b"])

    kernel = _make_gcn_kernel(Cin, Cout, k, H, W, NB)
    smem_spec = pl.BlockSpec(memory_space=pltpu.MemorySpace.SMEM)

    return pl.pallas_call(
        kernel,
        out_shape=jax.ShapeDtypeStruct((N, Cout, H, W), x_nchw.dtype),
        grid_spec=pltpu.PrefetchScalarGridSpec(
            num_scalar_prefetch=0,
            grid=(N // NB,),
            in_specs=[
                pl.BlockSpec((NB, Cin, H, W), lambda g: (g, 0, 0, 0)),
                smem_spec, smem_spec, smem_spec, smem_spec,
            ],
            out_specs=pl.BlockSpec((NB, Cout, H, W), lambda g: (g, 0, 0, 0)),
            scratch_shapes=[
                pltpu.VMEM((Cin, H + 2 * p, NB * Wp), jnp.float32),  # packed padded input
            ],
        ),
        compiler_params=pltpu.CompilerParams(
            dimension_semantics=("parallel",),
        ),
    )(x_nchw, w1a, w1b, w2a, w2b)


# ----------------------------- reference ------------------------------------
def _ref_conv2d(x_nchw, w_oihw, pad_h, pad_w):
    return jax.lax.conv_general_dilated(
        x_nchw, w_oihw, window_strides=(1, 1),
        padding=((pad_h, pad_h), (pad_w, pad_w)),
        dimension_numbers=("NCHW", "OIHW", "NCHW"))


def _ref_forward(x, params, k):
    pad = (k - 1) // 2
    x1 = _ref_conv2d(x, params["conv1_a"], 0, pad)
    x1 = _ref_conv2d(x1, params["conv1_b"], pad, 0)
    x2 = _ref_conv2d(x, params["conv2_a"], pad, 0)
    x2 = _ref_conv2d(x2, params["conv2_b"], 0, pad)
    return x1 + x2


if __name__ == "__main__":
    N, Cin, H, W = 2, 4, 16, 16
    num_class = 3
    k = 7

    key = jax.random.PRNGKey(0)
    kx, k1a, k1b, k2a, k2b = jax.random.split(key, 5)

    x = jax.random.normal(kx, (N, Cin, H, W), dtype=jnp.float32)
    params = {
        # PyTorch Conv2d weight layout: (out_ch, in_ch, kh, kw), bias=False
        "conv1_a": 0.1 * jax.random.normal(k1a, (num_class, Cin, 1, k), jnp.float32),
        "conv1_b": 0.1 * jax.random.normal(k1b, (num_class, num_class, k, 1), jnp.float32),
        "conv2_a": 0.1 * jax.random.normal(k2a, (num_class, Cin, k, 1), jnp.float32),
        "conv2_b": 0.1 * jax.random.normal(k2b, (num_class, num_class, 1, k), jnp.float32),
    }

    y = jax.block_until_ready(global_conv_module(x, params, k))
    y_ref = jax.block_until_ready(_ref_forward(x, params, k))

    assert y.shape == (N, num_class, H, W), y.shape
    assert jnp.allclose(y, y_ref, atol=1e-4, rtol=1e-4), float(jnp.max(jnp.abs(y - y_ref)))
    print("KERNEL_OK")
</pallas_src>

<mosaic_0001>
module attributes {stable_mosaic.version = 11 : i64} {
  func.func @kernel(%arg0: i32, %arg1: memref<2x4x16x16xf32, #tpu.memory_space<vmem>>, %arg2: memref<84xf32, #tpu.memory_space<smem>>, %arg3: memref<63xf32, #tpu.memory_space<smem>>, %arg4: memref<84xf32, #tpu.memory_space<smem>>, %arg5: memref<63xf32, #tpu.memory_space<smem>>, %arg6: memref<2x3x16x16xf32, #tpu.memory_space<vmem>>, %arg7: memref<4x22x44xf32, #tpu.memory_space<vmem>>) attributes {dimension_semantics = [#tpu.dimension_semantics<parallel>], iteration_bounds = array<i64: 1>, scalar_prefetch = 0 : i64, scratch_operands = 1 : i64, tpu.core_type = #tpu.core_type<tc>, window_params = [{transform_indices = @transform_0, window_bounds = array<i64: 2, 4, 16, 16>}, {transform_indices = @transform_1, window_bounds = array<i64: 84>}, {transform_indices = @transform_2, window_bounds = array<i64: 63>}, {transform_indices = @transform_3, window_bounds = array<i64: 84>}, {transform_indices = @transform_4, window_bounds = array<i64: 63>}, {transform_indices = @transform_5, window_bounds = array<i64: 2, 3, 16, 16>}]} {
    %cst = arith.constant 0.000000e+00 : f32
    %0 = vector.broadcast %cst : f32 to vector<4x22x44xf32>
    %c0 = arith.constant 0 : index
    %c0_0 = arith.constant 0 : index
    %c0_1 = arith.constant 0 : index
    %1 = vector.load %arg7[%c0, %c0_0, %c0_1] : memref<4x22x44xf32, #tpu.memory_space<vmem>>, vector<4x22x44xf32>
    tpu.vector_store %arg7[%c0, %c0_0, %c0_1], %0 {strides = array<i32>} : memref<4x22x44xf32, #tpu.memory_space<vmem>>, vector<4x22x44xf32>,
    %c0_2 = arith.constant 0 : index
    %c0_3 = arith.constant 0 : index
    %c0_4 = arith.constant 0 : index
    %c0_5 = arith.constant 0 : index
    %2 = vector.load %arg1[%c0_2, %c0_3, %c0_4, %c0_5] : memref<2x4x16x16xf32, #tpu.memory_space<vmem>>, vector<1x1x16x16xf32>
    %3 = vector.shape_cast %2 : vector<1x1x16x16xf32> to vector<16x16xf32>
    %c0_6 = arith.constant 0 : index
    %c3 = arith.constant 3 : index
    %c3_7 = arith.constant 3 : index
    %4 = vector.load %arg7[%c0_6, %c3, %c3_7] : memref<4x22x44xf32, #tpu.memory_space<vmem>>, vector<1x16x16xf32>
    %5 = vector.shape_cast %4 : vector<1x16x16xf32> to vector<16x16xf32>
    %6 = vector.shape_cast %3 : vector<16x16xf32> to vector<1x16x16xf32>
    tpu.vector_store %arg7[%c0_6, %c3, %c3_7], %6 {strides = array<i32>} : memref<4x22x44xf32, #tpu.memory_space<vmem>>, vector<1x16x16xf32>,
    %c0_8 = arith.constant 0 : index
    %c1 = arith.constant 1 : index
    %c0_9 = arith.constant 0 : index
    %c0_10 = arith.constant 0 : index
    %7 = vector.load %arg1[%c0_8, %c1, %c0_9, %c0_10] : memref<2x4x16x16xf32, #tpu.memory_space<vmem>>, vector<1x1x16x16xf32>
    %8 = vector.shape_cast %7 : vector<1x1x16x16xf32> to vector<16x16xf32>
    %c1_11 = arith.constant 1 : index
    %c3_12 = arith.constant 3 : index
    %c3_13 = arith.constant 3 : index
    %9 = vector.load %arg7[%c1_11, %c3_12, %c3_13] : memref<4x22x44xf32, #tpu.memory_space<vmem>>, vector<1x16x16xf32>
    %10 = vector.shape_cast %9 : vector<1x16x16xf32> to vector<16x16xf32>
    %11 = vector.shape_cast %8 : vector<16x16xf32> to vector<1x16x16xf32>
    tpu.vector_store %arg7[%c1_11, %c3_12, %c3_13], %11 {strides = array<i32>} : memref<4x22x44xf32, #tpu.memory_space<vmem>>, vector<1x16x16xf32>,
    %c0_14 = arith.constant 0 : index
    %c2 = arith.constant 2 : index
    %c0_15 = arith.constant 0 : index
    %c0_16 = arith.constant 0 : index
    %12 = vector.load %arg1[%c0_14, %c2, %c0_15, %c0_16] : memref<2x4x16x16xf32, #tpu.memory_space<vmem>>, vector<1x1x16x16xf32>
    %13 = vector.shape_cast %12 : vector<1x1x16x16xf32> to vector<16x16xf32>
    %c2_17 = arith.constant 2 : index
    %c3_18 = arith.constant 3 : index
    %c3_19 = arith.constant 3 : index
    %14 = vector.load %arg7[%c2_17, %c3_18, %c3_19] : memref<4x22x44xf32, #tpu.memory_space<vmem>>, vector<1x16x16xf32>
    %15 = vector.shape_cast %14 : vector<1x16x16xf32> to vector<16x16xf32>
    %16 = vector.shape_cast %13 : vector<16x16xf32> to vector<1x16x16xf32>
    tpu.vector_store %arg7[%c2_17, %c3_18, %c3_19], %16 {strides = array<i32>} : memref<4x22x44xf32, #tpu.memory_space<vmem>>, vector<1x16x16xf32>,
    %c0_20 = arith.constant 0 : index
    %c3_21 = arith.constant 3 : index
    %c0_22 = arith.constant 0 : index
    %c0_23 = arith.constant 0 : index
    %17 = vector.load %arg1[%c0_20, %c3_21, %c0_22, %c0_23] : memref<2x4x16x16xf32, #tpu.memory_space<vmem>>, vector<1x1x16x16xf32>
    %18 = vector.shape_cast %17 : vector<1x1x16x16xf32> to vector<16x16xf32>
    %c3_24 = arith.constant 3 : index
    %c3_25 = arith.constant 3 : index
    %c3_26 = arith.constant 3 : index
    %19 = vector.load %arg7[%c3_24, %c3_25, %c3_26] : memref<4x22x44xf32, #tpu.memory_space<vmem>>, vector<1x16x16xf32>
    %20 = vector.shape_cast %19 : vector<1x16x16xf32> to vector<16x16xf32>
    %21 = vector.shape_cast %18 : vector<16x16xf32> to vector<1x16x16xf32>
    tpu.vector_store %arg7[%c3_24, %c3_25, %c3_26], %21 {strides = array<i32>} : memref<4x22x44xf32, #tpu.memory_space<vmem>>, vector<1x16x16xf32>,
    %c1_27 = arith.constant 1 : index
    %c0_28 = arith.constant 0 : index
    %c0_29 = arith.constant 0 : index
    %c0_30 = arith.constant 0 : index
    %22 = vector.load %arg1[%c1_27, %c0_28, %c0_29, %c0_30] : memref<2x4x16x16xf32, #tpu.memory_space<vmem>>, vector<1x1x16x16xf32>
    %23 = vector.shape_cast %22 : vector<1x1x16x16xf32> to vector<16x16xf32>
    %c0_31 = arith.constant 0 : index
    %c3_32 = arith.constant 3 : index
    %c25 = arith.constant 25 : index
    %24 = vector.load %arg7[%c0_31, %c3_32, %c25] : memref<4x22x44xf32, #tpu.memory_space<vmem>>, vector<1x16x16xf32>
    %25 = vector.shape_cast %24 : vector<1x16x16xf32> to vector<16x16xf32>
    %26 = vector.shape_cast %23 : vector<16x16xf32> to vector<1x16x16xf32>
    tpu.vector_store %arg7[%c0_31, %c3_32, %c25], %26 {strides = array<i32>} : memref<4x22x44xf32, #tpu.memory_space<vmem>>, vector<1x16x16xf32>,
    %c1_33 = arith.constant 1 : index
    %c1_34 = arith.constant 1 : index
    %c0_35 = arith.constant 0 : index
    %c0_36 = arith.constant 0 : index
    %27 = vector.load %arg1[%c1_33, %c1_34, %c0_35, %c0_36] : memref<2x4x16x16xf32, #tpu.memory_space<vmem>>, vector<1x1x16x16xf32>
    %28 = vector.shape_cast %27 : vector<1x1x16x16xf32> to vector<16x16xf32>
    %c1_37 = arith.constant 1 : index
    %c3_38 = arith.constant 3 : index
    %c25_39 = arith.constant 25 : index
    %29 = vector.load %arg7[%c1_37, %c3_38, %c25_39] : memref<4x22x44xf32, #tpu.memory_space<vmem>>, vector<1x16x16xf32>
    %30 = vector.shape_cast %29 : vector<1x16x16xf32> to vector<16x16xf32>
    %31 = vector.shape_cast %28 : vector<16x16xf32> to vector<1x16x16xf32>
    tpu.vector_store %arg7[%c1_37, %c3_38, %c25_39], %31 {strides = array<i32>} : memref<4x22x44xf32, #tpu.memory_space<vmem>>, vector<1x16x16xf32>,
    %c1_40 = arith.constant 1 : index
    %c2_41 = arith.constant 2 : index
    %c0_42 = arith.constant 0 : index
    %c0_43 = arith.constant 0 : index
    %32 = vector.load %arg1[%c1_40, %c2_41, %c0_42, %c0_43] : memref<2x4x16x16xf32, #tpu.memory_space<vmem>>, vector<1x1x16x16xf32>
    %33 = vector.shape_cast %32 : vector<1x1x16x16xf32> to vector<16x16xf32>
    %c2_44 = arith.constant 2 : index
    %c3_45 = arith.constant 3 : index
    %c25_46 = arith.constant 25 : index
    %34 = vector.load %arg7[%c2_44, %c3_45, %c25_46] : memref<4x22x44xf32, #tpu.memory_space<vmem>>, vector<1x16x16xf32>
    %35 = vector.shape_cast %34 : vector<1x16x16xf32> to vector<16x16xf32>
    %36 = vector.shape_cast %33 : vector<16x16xf32> to vector<1x16x16xf32>
    tpu.vector_store %arg7[%c2_44, %c3_45, %c25_46], %36 {strides = array<i32>} : memref<4x22x44xf32, #tpu.memory_space<vmem>>, vector<1x16x16xf32>,
    %c1_47 = arith.constant 1 : index
    %c3_48 = arith.constant 3 : index
    %c0_49 = arith.constant 0 : index
    %c0_50 = arith.constant 0 : index
    %37 = vector.load %arg1[%c1_47, %c3_48, %c0_49, %c0_50] : memref<2x4x16x16xf32, #tpu.memory_space<vmem>>, vector<1x1x16x16xf32>
    %38 = vector.shape_cast %37 : vector<1x1x16x16xf32> to vector<16x16xf32>
    %c3_51 = arith.constant 3 : index
    %c3_52 = arith.constant 3 : index
    %c25_53 = arith.constant 25 : index
    %39 = vector.load %arg7[%c3_51, %c3_52, %c25_53] : memref<4x22x44xf32, #tpu.memory_space<vmem>>, vector<1x16x16xf32>
    %40 = vector.shape_cast %39 : vector<1x16x16xf32> to vector<16x16xf32>
    %41 = vector.shape_cast %38 : vector<16x16xf32> to vector<1x16x16xf32>
    tpu.vector_store %arg7[%c3_51, %c3_52, %c25_53], %41 {strides = array<i32>} : memref<4x22x44xf32, #tpu.memory_space<vmem>>, vector<1x16x16xf32>,
    %cst_54 = arith.constant 0.000000e+00 : f32
    %42 = vector.broadcast %cst_54 : f32 to vector<22x38xf32>
    %cst_55 = arith.constant 0.000000e+00 : f32
    %43 = vector.broadcast %cst_55 : f32 to vector<22x38xf32>
    %cst_56 = arith.constant 0.000000e+00 : f32
    %44 = vector.broadcast %cst_56 : f32 to vector<22x38xf32>
    %cst_57 = arith.constant 0.000000e+00 : f32
    %45 = vector.broadcast %cst_57 : f32 to vector<16x44xf32>
    %cst_58 = arith.constant 0.000000e+00 : f32
    %46 = vector.broadcast %cst_58 : f32 to vector<16x44xf32>
    %cst_59 = arith.constant 0.000000e+00 : f32
    %47 = vector.broadcast %cst_59 : f32 to vector<16x44xf32>
    %c0_60 = arith.constant 0 : index
    %c0_61 = arith.constant 0 : index
    %c0_62 = arith.constant 0 : index
    %48 = vector.load %arg7[%c0_60, %c0_61, %c0_62] : memref<4x22x44xf32, #tpu.memory_space<vmem>>, vector<1x22x38xf32>
    %49 = vector.shape_cast %48 : vector<1x22x38xf32> to vector<22x38xf32>
    %c0_63 = arith.constant 0 : index
    %c0_64 = arith.constant 0 : index
    %c0_65 = arith.constant 0 : index
    %50 = vector.load %arg7[%c0_63, %c0_64, %c0_65] : memref<4x22x44xf32, #tpu.memory_space<vmem>>, vector<1x16x44xf32>
    %51 = vector.shape_cast %50 : vector<1x16x44xf32> to vector<16x44xf32>
    %c0_66 = arith.constant 0 : index
    %52 = memref.load %arg2[%c0_66] : memref<84xf32, #tpu.memory_space<smem>>
    %53 = vector.broadcast %52 : f32 to vector<22x38xf32>
    %54 = arith.mulf %53, %49 : vector<22x38xf32>
    %55 = arith.addf %42, %54 : vector<22x38xf32>
    %c0_67 = arith.constant 0 : index
    %56 = memref.load %arg4[%c0_67] : memref<84xf32, #tpu.memory_space<smem>>
    %57 = vector.broadcast %56 : f32 to vector<16x44xf32>
    %58 = arith.mulf %57, %51 : vector<16x44xf32>
    %59 = arith.addf %45, %58 : vector<16x44xf32>
    %c1_68 = arith.constant 1 : index
    %60 = memref.load %arg2[%c1_68] : memref<84xf32, #tpu.memory_space<smem>>
    %61 = vector.broadcast %60 : f32 to vector<22x38xf32>
    %62 = arith.mulf %61, %49 : vector<22x38xf32>
    %63 = arith.addf %43, %62 : vector<22x38xf32>
    %c1_69 = arith.constant 1 : index
    %64 = memref.load %arg4[%c1_69] : memref<84xf32, #tpu.memory_space<smem>>
    %65 = vector.broadcast %64 : f32 to vector<16x44xf32>
    %66 = arith.mulf %65, %51 : vector<16x44xf32>
    %67 = arith.addf %46, %66 : vector<16x44xf32>
    %c2_70 = arith.constant 2 : index
    %68 = memref.load %arg2[%c2_70] : memref<84xf32, #tpu.memory_space<smem>>
    %69 = vector.broadcast %68 : f32 to vector<22x38xf32>
    %70 = arith.mulf %69, %49 : vector<22x38xf32>
    %71 = arith.addf %44, %70 : vector<22x38xf32>
    %c2_71 = arith.constant 2 : index
    %72 = memref.load %arg4[%c2_71] : memref<84xf32, #tpu.memory_space<smem>>
    %73 = vector.broadcast %72 : f32 to vector<16x44xf32>
    %74 = arith.mulf %73, %51 : vector<16x44xf32>
    %75 = arith.addf %47, %74 : vector<16x44xf32>
    %c0_72 = arith.constant 0 : index
    %c0_73 = arith.constant 0 : index
    %c1_74 = arith.constant 1 : index
    %76 = vector.load %arg7[%c0_72, %c0_73, %c1_74] : memref<4x22x44xf32, #tpu.memory_space<vmem>>, vector<1x22x38xf32>
    %77 = vector.shape_cast %76 : vector<1x22x38xf32> to vector<22x38xf32>
    %c0_75 = arith.constant 0 : index
    %c1_76 = arith.constant 1 : index
    %c0_77 = arith.constant 0 : index
    %78 = vector.load %arg7[%c0_75, %c1_76, %c0_77] : memref<4x22x44xf32, #tpu.memory_space<vmem>>, vector<1x16x44xf32>
    %79 = vector.shape_cast %78 : vector<1x16x44xf32> to vector<16x44xf32>
    %c12 = arith.constant 12 : index
    %80 = memref.load %arg2[%c12] : memref<84xf32, #tpu.memory_space<smem>>
    %81 = vector.broadcast %80 : f32 to vector<22x38xf32>
    %82 = arith.mulf %81, %77 : vector<22x38xf32>
    %83 = arith.addf %55, %82 : vector<22x38xf32>
    %c12_78 = arith.constant 12 : index
    %84 = memref.load %arg4[%c12_78] : memref<84xf32, #tpu.memory_space<smem>>
    %85 = vector.broadcast %84 : f32 to vector<16x44xf32>
    %86 = arith.mulf %85, %79 : vector<16x44xf32>
    %87 = arith.addf %59, %86 : vector<16x44xf32>
    %c13 = arith.constant 13 : index
    %88 = memref.load %arg2[%c13] : memref<84xf32, #tpu.memory_space<smem>>
    %89 = vector.broadcast %88 : f32 to vector<22x38xf32>
    %90 = arith.mulf %89, %77 : vector<22x38xf32>
    %91 = arith.addf %63, %90 : vector<22x38xf32>
    %c13_79 = arith.constant 13 : index
    %92 = memref.load %arg4[%c13_79] : memref<84xf32, #tpu.memory_space<smem>>
    %93 = vector.broadcast %92 : f32 to vector<16x44xf32>
    %94 = arith.mulf %93, %79 : vector<16x44xf32>
    %95 = arith.addf %67, %94 : vector<16x44xf32>
    %c14 = arith.constant 14 : index
    %96 = memref.load %arg2[%c14] : memref<84xf32, #tpu.memory_space<smem>>
    %97 = vector.broadcast %96 : f32 to vector<22x38xf32>
    %98 = arith.mulf %97, %77 : vector<22x38xf32>
    %99 = arith.addf %71, %98 : vector<22x38xf32>
    %c14_80 = arith.constant 14 : index
    %100 = memref.load %arg4[%c14_80] : memref<84xf32, #tpu.memory_space<smem>>
    %101 = vector.broadcast %100 : f32 to vector<16x44xf32>
    %102 = arith.mulf %101, %79 : vector<16x44xf32>
    %103 = arith.addf %75, %102 : vector<16x44xf32>
    %c0_81 = arith.constant 0 : index
    %c0_82 = arith.constant 0 : index
    %c2_83 = arith.constant 2 : index
    %104 = vector.load %arg7[%c0_81, %c0_82, %c2_83] : memref<4x22x44xf32, #tpu.memory_space<vmem>>, vector<1x22x38xf32>
    %105 = vector.shape_cast %104 : vector<1x22x38xf32> to vector<22x38xf32>
    %c0_84 = arith.constant 0 : index
    %c2_85 = arith.constant 2 : index
    %c0_86 = arith.constant 0 : index
    %106 = vector.load %arg7[%c0_84, %c2_85, %c0_86] : memref<4x22x44xf32, #tpu.memory_space<vmem>>, vector<1x16x44xf32>
    %107 = vector.shape_cast %106 : vector<1x16x44xf32> to vector<16x44xf32>
    %c24 = arith.constant 24 : index
    %108 = memref.load %arg2[%c24] : memref<84xf32, #tpu.memory_space<smem>>
    %109 = vector.broadcast %108 : f32 to vector<22x38xf32>
    %110 = arith.mulf %109, %105 : vector<22x38xf32>
    %111 = arith.addf %83, %110 : vector<22x38xf32>
    %c24_87 = arith.constant 24 : index
    %112 = memref.load %arg4[%c24_87] : memref<84xf32, #tpu.memory_space<smem>>
    %113 = vector.broadcast %112 : f32 to vector<16x44xf32>
    %114 = arith.mulf %113, %107 : vector<16x44xf32>
    %115 = arith.addf %87, %114 : vector<16x44xf32>
    %c25_88 = arith.constant 25 : index
    %116 = memref.load %arg2[%c25_88] : memref<84xf32, #tpu.memory_space<smem>>
    %117 = vector.broadcast %116 : f32 to vector<22x38xf32>
    %118 = arith.mulf %117, %105 : vector<22x38xf32>
    %119 = arith.addf %91, %118 : vector<22x38xf32>
    %c25_89 = arith.constant 25 : index
    %120 = memref.load %arg4[%c25_89] : memref<84xf32, #tpu.memory_space<smem>>
    %121 = vector.broadcast %120 : f32 to vector<16x44xf32>
    %122 = arith.mulf %121, %107 : vector<16x44xf32>
    %123 = arith.addf %95, %122 : vector<16x44xf32>
    %c26 = arith.constant 26 : index
    %124 = memref.load %arg2[%c26] : memref<84xf32, #tpu.memory_space<smem>>
    %125 = vector.broadcast %124 : f32 to vector<22x38xf32>
    %126 = arith.mulf %125, %105 : vector<22x38xf32>
    %127 = arith.addf %99, %126 : vector<22x38xf32>
    %c26_90 = arith.constant 26 : index
    %128 = memref.load %arg4[%c26_90] : memref<84xf32, #tpu.memory_space<smem>>
    %129 = vector.broadcast %128 : f32 to vector<16x44xf32>
    %130 = arith.mulf %129, %107 : vector<16x44xf32>
    %131 = arith.addf %103, %130 : vector<16x44xf32>
    %c0_91 = arith.constant 0 : index
    %c0_92 = arith.constant 0 : index
    %c3_93 = arith.constant 3 : index
    %132 = vector.load %arg7[%c0_91, %c0_92, %c3_93] : memref<4x22x44xf32, #tpu.memory_space<vmem>>, vector<1x22x38xf32>
    %133 = vector.shape_cast %132 : vector<1x22x38xf32> to vector<22x38xf32>
    %c0_94 = arith.constant 0 : index
    %c3_95 = arith.constant 3 : index
    %c0_96 = arith.constant 0 : index
    %134 = vector.load %arg7[%c0_94, %c3_95, %c0_96] : memref<4x22x44xf32, #tpu.memory_space<vmem>>, vector<1x16x44xf32>
    %135 = vector.shape_cast %134 : vector<1x16x44xf32> to vector<16x44xf32>
    %c36 = arith.constant 36 : index
    %136 = memref.load %arg2[%c36] : memref<84xf32, #tpu.memory_space<smem>>
    %137 = vector.broadcast %136 : f32 to vector<22x38xf32>
    %138 = arith.mulf %137, %133 : vector<22x38xf32>
    %139 = arith.addf %111, %138 : vector<22x38xf32>
    %c36_97 = arith.constant 36 : index
    %140 = memref.load %arg4[%c36_97] : memref<84xf32, #tpu.memory_space<smem>>
    %141 = vector.broadcast %140 : f32 to vector<16x44xf32>
    %142 = arith.mulf %141, %135 : vector<16x44xf32>
    %143 = arith.addf %115, %142 : vector<16x44xf32>
    %c37 = arith.constant 37 : index
    %144 = memref.load %arg2[%c37] : memref<84xf32, #tpu.memory_space<smem>>
    %145 = vector.broadcast %144 : f32 to vector<22x38xf32>
    %146 = arith.mulf %145, %133 : vector<22x38xf32>
    %147 = arith.addf %119, %146 : vector<22x38xf32>
    %c37_98 = arith.constant 37 : index
    %148 = memref.load %arg4[%c37_98] : memref<84xf32, #tpu.memory_space<smem>>
    %149 = vector.broadcast %148 : f32 to vector<16x44xf32>
    %150 = arith.mulf %149, %135 : vector<16x44xf32>
    %151 = arith.addf %123, %150 : vector<16x44xf32>
    %c38 = arith.constant 38 : index
    %152 = memref.load %arg2[%c38] : memref<84xf32, #tpu.memory_space<smem>>
    %153 = vector.broadcast %152 : f32 to vector<22x38xf32>
    %154 = arith.mulf %153, %133 : vector<22x38xf32>
    %155 = arith.addf %127, %154 : vector<22x38xf32>
    %c38_99 = arith.constant 38 : index
    %156 = memref.load %arg4[%c38_99] : memref<84xf32, #tpu.memory_space<smem>>
    %157 = vector.broadcast %156 : f32 to vector<16x44xf32>
    %158 = arith.mulf %157, %135 : vector<16x44xf32>
    %159 = arith.addf %131, %158 : vector<16x44xf32>
    %c0_100 = arith.constant 0 : index
    %c0_101 = arith.constant 0 : index
    %c4 = arith.constant 4 : index
    %160 = vector.load %arg7[%c0_100, %c0_101, %c4] : memref<4x22x44xf32, #tpu.memory_space<vmem>>, vector<1x22x38xf32>
    %161 = vector.shape_cast %160 : vector<1x22x38xf32> to vector<22x38xf32>
    %c0_102 = arith.constant 0 : index
    %c4_103 = arith.constant 4 : index
    %c0_104 = arith.constant 0 : index
    %162 = vector.load %arg7[%c0_102, %c4_103, %c0_104] : memref<4x22x44xf32, #tpu.memory_space<vmem>>, vector<1x16x44xf32>
    %163 = vector.shape_cast %162 : vector<1x16x44xf32> to vector<16x44xf32>
    %c48 = arith.constant 48 : index
    %164 = memref.load %arg2[%c48] : memref<84xf32, #tpu.memory_space<smem>>
    %165 = vector.broadcast %164 : f32 to vector<22x38xf32>
    %166 = arith.mulf %165, %161 : vector<22x38xf32>
    %167 = arith.addf %139, %166 : vector<22x38xf32>
    %c48_105 = arith.constant 48 : index
    %168 = memref.load %arg4[%c48_105] : memref<84xf32, #tpu.memory_space<smem>>
    %169 = vector.broadcast %168 : f32 to vector<16x44xf32>
    %170 = arith.mulf %169, %163 : vector<16x44xf32>
    %171 = arith.addf %143, %170 : vector<16x44xf32>
    %c49 = arith.constant 49 : index
    %172 = memref.load %arg2[%c49] : memref<84xf32, #tpu.memory_space<smem>>
    %173 = vector.broadcast %172 : f32 to vector<22x38xf32>
    %174 = arith.mulf %173, %161 : vector<22x38xf32>
    %175 = arith.addf %147, %174 : vector<22x38xf32>
    %c49_106 = arith.constant 49 : index
    %176 = memref.load %arg4[%c49_106] : memref<84xf32, #tpu.memory_space<smem>>
    %177 = vector.broadcast %176 : f32 to vector<16x44xf32>
    %178 = arith.mulf %177, %163 : vector<16x44xf32>
    %179 = arith.addf %151, %178 : vector<16x44xf32>
    %c50 = arith.constant 50 : index
    %180 = memref.load %arg2[%c50] : memref<84xf32, #tpu.memory_space<smem>>
    %181 = vector.broadcast %180 : f32 to vector<22x38xf32>
    %182 = arith.mulf %181, %161 : vector<22x38xf32>
    %183 = arith.addf %155, %182 : vector<22x38xf32>
    %c50_107 = arith.constant 50 : index
    %184 = memref.load %arg4[%c50_107] : memref<84xf32, #tpu.memory_space<smem>>
    %185 = vector.broadcast %184 : f32 to vector<16x44xf32>
    %186 = arith.mulf %185, %163 : vector<16x44xf32>
    %187 = arith.addf %159, %186 : vector<16x44xf32>
    %c0_108 = arith.constant 0 : index
    %c0_109 = arith.constant 0 : index
    %c5 = arith.constant 5 : index
    %188 = vector.load %arg7[%c0_108, %c0_109, %c5] : memref<4x22x44xf32, #tpu.memory_space<vmem>>, vector<1x22x38xf32>
    %189 = vector.shape_cast %188 : vector<1x22x38xf32> to vector<22x38xf32>
    %c0_110 = arith.constant 0 : index
    %c5_111 = arith.constant 5 : index
    %c0_112 = arith.constant 0 : index
    %190 = vector.load %arg7[%c0_110, %c5_111, %c0_112] : memref<4x22x44xf32, #tpu.memory_space<vmem>>, vector<1x16x44xf32>
    %191 = vector.shape_cast %190 : vector<1x16x44xf32> to vector<16x44xf32>
    %c60 = arith.constant 60 : index
    %192 = memref.load %arg2[%c60] : memref<84xf32, #tpu.memory_space<smem>>
    %193 = vector.broadcast %192 : f32 to vector<22x38xf32>
    %194 = arith.mulf %193, %189 : vector<22x38xf32>
    %195 = arith.addf %167, %194 : vector<22x38xf32>
    %c60_113 = arith.constant 60 : index
    %196 = memref.load %arg4[%c60_113] : memref<84xf32, #tpu.memory_space<smem>>
    %197 = vector.broadcast %196 : f32 to vector<16x44xf32>
    %198 = arith.mulf %197, %191 : vector<16x44xf32>
    %199 = arith.addf %171, %198 : vector<16x44xf32>
    %c61 = arith.constant 61 : index
    %200 = memref.load %arg2[%c61] : memref<84xf32, #tpu.memory_space<smem>>
    %201 = vector.broadcast %200 : f32 to vector<22x38xf32>
    %202 = arith.mulf %201, %189 : vector<22x38xf32>
    %203 = arith.addf %175, %202 : vector<22x38xf32>
    %c61_114 = arith.constant 61 : index
    %204 = memref.load %arg4[%c61_114] : memref<84xf32, #tpu.memory_space<smem>>
    %205 = vector.broadcast %204 : f32 to vector<16x44xf32>
    %206 = arith.mulf %205, %191 : vector<16x44xf32>
    %207 = arith.addf %179, %206 : vector<16x44xf32>
    %c62 = arith.constant 62 : index
    %208 = memref.load %arg2[%c62] : memref<84xf32, #tpu.memory_space<smem>>
    %209 = vector.broadcast %208 : f32 to vector<22x38xf32>
    %210 = arith.mulf %209, %189 : vector<22x38xf32>
    %211 = arith.addf %183, %210 : vector<22x38xf32>
    %c62_115 = arith.constant 62 : index
    %212 = memref.load %arg4[%c62_115] : memref<84xf32, #tpu.memory_space<smem>>
    %213 = vector.broadcast %212 : f32 to vector<16x44xf32>
    %214 = arith.mulf %213, %191 : vector<16x44xf32>
    %215 = arith.addf %187, %214 : vector<16x44xf32>
    %c0_116 = arith.constant 0 : index
    %c0_117 = arith.constant 0 : index
    %c6 = arith.constant 6 : index
    %216 = vector.load %arg7[%c0_116, %c0_117, %c6] : memref<4x22x44xf32, #tpu.memory_space<vmem>>, vector<1x22x38xf32>
    %217 = vector.shape_cast %216 : vector<1x22x38xf32> to vector<22x38xf32>
    %c0_118 = arith.constant 0 : index
    %c6_119 = arith.constant 6 : index
    %c0_120 = arith.constant 0 : index
    %218 = vector.load %arg7[%c0_118, %c6_119, %c0_120] : memref<4x22x44xf32, #tpu.memory_space<vmem>>, vector<1x16x44xf32>
    %219 = vector.shape_cast %218 : vector<1x16x44xf32> to vector<16x44xf32>
    %c72 = arith.constant 72 : index
    %220 = memref.load %arg2[%c72] : memref<84xf32, #tpu.memory_space<smem>>
    %221 = vector.broadcast %220 : f32 to vector<22x38xf32>
    %222 = arith.mulf %221, %217 : vector<22x38xf32>
    %223 = arith.addf %195, %222 : vector<22x38xf32>
    %c72_121 = arith.constant 72 : index
    %224 = memref.load %arg4[%c72_121] : memref<84xf32, #tpu.memory_space<smem>>
    %225 = vector.broadcast %224 : f32 to vector<16x44xf32>
    %226 = arith.mulf %225, %219 : vector<16x44xf32>
    %227 = arith.addf %199, %226 : vector<16x44xf32>
    %c73 = arith.constant 73 : index
    %228 = memref.load %arg2[%c73] : memref<84xf32, #tpu.memory_space<smem>>
    %229 = vector.broadcast %228 : f32 to vector<22x38xf32>
    %230 = arith.mulf %229, %217 : vector<22x38xf32>
    %231 = arith.addf %203, %230 : vector<22x38xf32>
    %c73_122 = arith.constant 73 : index
    %232 = memref.load %arg4[%c73_122] : memref<84xf32, #tpu.memory_space<smem>>
    %233 = vector.broadcast %232 : f32 to vector<16x44xf32>
    %234 = arith.mulf %233, %219 : vector<16x44xf32>
    %235 = arith.addf %207, %234 : vector<16x44xf32>
    %c74 = arith.constant 74 : index
    %236 = memref.load %arg2[%c74] : memref<84xf32, #tpu.memory_space<smem>>
    %237 = vector.broadcast %236 : f32 to vector<22x38xf32>
    %238 = arith.mulf %237, %217 : vector<22x38xf32>
    %239 = arith.addf %211, %238 : vector<22x38xf32>
    %c74_123 = arith.constant 74 : index
    %240 = memref.load %arg4[%c74_123] : memref<84xf32, #tpu.memory_space<smem>>
    %241 = vector.broadcast %240 : f32 to vector<16x44xf32>
    %242 = arith.mulf %241, %219 : vector<16x44xf32>
    %243 = arith.addf %215, %242 : vector<16x44xf32>
    %c1_124 = arith.constant 1 : index
    %c0_125 = arith.constant 0 : index
    %c0_126 = arith.constant 0 : index
    %244 = vector.load %arg7[%c1_124, %c0_125, %c0_126] : memref<4x22x44xf32, #tpu.memory_space<vmem>>, vector<1x22x38xf32>
    %245 = vector.shape_cast %244 : vector<1x22x38xf32> to vector<22x38xf32>
    %c1_127 = arith.constant 1 : index
    %c0_128 = arith.constant 0 : index
    %c0_129 = arith.constant 0 : index
    %246 = vector.load %arg7[%c1_127, %c0_128, %c0_129] : memref<4x22x44xf32, #tpu.memory_space<vmem>>, vector<1x16x44xf32>
    %247 = vector.shape_cast %246 : vector<1x16x44xf32> to vector<16x44xf32>
    %c3_130 = arith.constant 3 : index
    %248 = memref.load %arg2[%c3_130] : memref<84xf32, #tpu.memory_space<smem>>
    %249 = vector.broadcast %248 : f32 to vector<22x38xf32>
    %250 = arith.mulf %249, %245 : vector<22x38xf32>
    %251 = arith.addf %223, %250 : vector<22x38xf32>
    %c3_131 = arith.constant 3 : index
    %252 = memref.load %arg4[%c3_131] : memref<84xf32, #tpu.memory_space<smem>>
    %253 = vector.broadcast %252 : f32 to vector<16x44xf32>
    %254 = arith.mulf %253, %247 : vector<16x44xf32>
    %255 = arith.addf %227, %254 : vector<16x44xf32>
    %c4_132 = arith.constant 4 : index
    %256 = memref.load %arg2[%c4_132] : memref<84xf32, #tpu.memory_space<smem>>
    %257 = vector.broadcast %256 : f32 to vector<22x38xf32>
    %258 = arith.mulf %257, %245 : vector<22x38xf32>
    %259 = arith.addf %231, %258 : vector<22x38xf32>
    %c4_133 = arith.constant 4 : index
    %260 = memref.load %arg4[%c4_133] : memref<84xf32, #tpu.memory_space<smem>>
    %261 = vector.broadcast %260 : f32 to vector<16x44xf32>
    %262 = arith.mulf %261, %247 : vector<16x44xf32>
    %263 = arith.addf %235, %262 : vector<16x44xf32>
    %c5_134 = arith.constant 5 : index
    %264 = memref.load %arg2[%c5_134] : memref<84xf32, #tpu.memory_space<smem>>
    %265 = vector.broadcast %264 : f32 to vector<22x38xf32>
    %266 = arith.mulf %265, %245 : vector<22x38xf32>
    %267 = arith.addf %239, %266 : vector<22x38xf32>
    %c5_135 = arith.constant 5 : index
    %268 = memref.load %arg4[%c5_135] : memref<84xf32, #tpu.memory_space<smem>>
    %269 = vector.broadcast %268 : f32 to vector<16x44xf32>
    %270 = arith.mulf %269, %247 : vector<16x44xf32>
    %271 = arith.addf %243, %270 : vector<16x44xf32>
    %c1_136 = arith.constant 1 : index
    %c0_137 = arith.constant 0 : index
    %c1_138 = arith.constant 1 : index
    %272 = vector.load %arg7[%c1_136, %c0_137, %c1_138] : memref<4x22x44xf32, #tpu.memory_space<vmem>>, vector<1x22x38xf32>
    %273 = vector.shape_cast %272 : vector<1x22x38xf32> to vector<22x38xf32>
    %c1_139 = arith.constant 1 : index
    %c1_140 = arith.constant 1 : index
    %c0_141 = arith.constant 0 : index
    %274 = vector.load %arg7[%c1_139, %c1_140, %c0_141] : memref<4x22x44xf32, #tpu.memory_space<vmem>>, vector<1x16x44xf32>
    %275 = vector.shape_cast %274 : vector<1x16x44xf32> to vector<16x44xf32>
    %c15 = arith.constant 15 : index
    %276 = memref.load %arg2[%c15] : memref<84xf32, #tpu.memory_space<smem>>
    %277 = vector.broadcast %276 : f32 to vector<22x38xf32>
    %278 = arith.mulf %277, %273 : vector<22x38xf32>
    %279 = arith.addf %251, %278 : vector<22x38xf32>
    %c15_142 = arith.constant 15 : index
    %280 = memref.load %arg4[%c15_142] : memref<84xf32, #tpu.memory_space<smem>>
    %281 = vector.broadcast %280 : f32 to vector<16x44xf32>
    %282 = arith.mulf %281, %275 : vector<16x44xf32>
    %283 = arith.addf %255, %282 : vector<16x44xf32>
    %c16 = arith.constant 16 : index
    %284 = memref.load %arg2[%c16] : memref<84xf32, #tpu.memory_space<smem>>
    %285 = vector.broadcast %284 : f32 to vector<22x38xf32>
    %286 = arith.mulf %285, %273 : vector<22x38xf32>
    %287 = arith.addf %259, %286 : vector<22x38xf32>
    %c16_143 = arith.constant 16 : index
    %288 = memref.load %arg4[%c16_143] : memref<84xf32, #tpu.memory_space<smem>>
    %289 = vector.broadcast %288 : f32 to vector<16x44xf32>
    %290 = arith.mulf %289, %275 : vector<16x44xf32>
    %291 = arith.addf %263, %290 : vector<16x44xf32>
    %c17 = arith.constant 17 : index
    %292 = memref.load %arg2[%c17] : memref<84xf32, #tpu.memory_space<smem>>
    %293 = vector.broadcast %292 : f32 to vector<22x38xf32>
    %294 = arith.mulf %293, %273 : vector<22x38xf32>
    %295 = arith.addf %267, %294 : vector<22x38xf32>
    %c17_144 = arith.constant 17 : index
    %296 = memref.load %arg4[%c17_144] : memref<84xf32, #tpu.memory_space<smem>>
    %297 = vector.broadcast %296 : f32 to vector<16x44xf32>
    %298 = arith.mulf %297, %275 : vector<16x44xf32>
    %299 = arith.addf %271, %298 : vector<16x44xf32>
    %c1_145 = arith.constant 1 : index
    %c0_146 = arith.constant 0 : index
    %c2_147 = arith.constant 2 : index
    %300 = vector.load %arg7[%c1_145, %c0_146, %c2_147] : memref<4x22x44xf32, #tpu.memory_space<vmem>>, vector<1x22x38xf32>
    %301 = vector.shape_cast %300 : vector<1x22x38xf32> to vector<22x38xf32>
    %c1_148 = arith.constant 1 : index
    %c2_149 = arith.constant 2 : index
    %c0_150 = arith.constant 0 : index
    %302 = vector.load %arg7[%c1_148, %c2_149, %c0_150] : memref<4x22x44xf32, #tpu.memory_space<vmem>>, vector<1x16x44xf32>
    %303 = vector.shape_cast %302 : vector<1x16x44xf32> to vector<16x44xf32>
    %c27 = arith.constant 27 : index
    %304 = memref.load %arg2[%c27] : memref<84xf32, #tpu.memory_space<smem>>
    %305 = vector.broadcast %304 : f32 to vector<22x38xf32>
    %306 = arith.mulf %305, %301 : vector<22x38xf32>
    %307 = arith.addf %279, %306 : vector<22x38xf32>
    %c27_151 = arith.constant 27 : index
    %308 = memref.load %arg4[%c27_151] : memref<84xf32, #tpu.memory_space<smem>>
    %309 = vector.broadcast %308 : f32 to vector<16x44xf32>
    %310 = arith.mulf %309, %303 : vector<16x44xf32>
    %311 = arith.addf %283, %310 : vector<16x44xf32>
    %c28 = arith.constant 28 : index
    %312 = memref.load %arg2[%c28] : memref<84xf32, #tpu.memory_space<smem>>
    %313 = vector.broadcast %312 : f32 to vector<22x38xf32>
    %314 = arith.mulf %313, %301 : vector<22x38xf32>
    %315 = arith.addf %287, %314 : vector<22x38xf32>
    %c28_152 = arith.constant 28 : index
    %316 = memref.load %arg4[%c28_152] : memref<84xf32, #tpu.memory_space<smem>>
    %317 = vector.broadcast %316 : f32 to vector<16x44xf32>
    %318 = arith.mulf %317, %303 : vector<16x44xf32>
    %319 = arith.addf %291, %318 : vector<16x44xf32>
    %c29 = arith.constant 29 : index
    %320 = memref.load %arg2[%c29] : memref<84xf32, #tpu.memory_space<smem>>
    %321 = vector.broadcast %320 : f32 to vector<22x38xf32>
    %322 = arith.mulf %321, %301 : vector<22x38xf32>
    %323 = arith.addf %295, %322 : vector<22x38xf32>
    %c29_153 = arith.constant 29 : index
    %324 = memref.load %arg4[%c29_153] : memref<84xf32, #tpu.memory_space<smem>>
    %325 = vector.broadcast %324 : f32 to vector<16x44xf32>
    %326 = arith.mulf %325, %303 : vector<16x44xf32>
    %327 = arith.addf %299, %326 : vector<16x44xf32>
    %c1_154 = arith.constant 1 : index
    %c0_155 = arith.constant 0 : index
    %c3_156 = arith.constant 3 : index
    %328 = vector.load %arg7[%c1_154, %c0_155, %c3_156] : memref<4x22x44xf32, #tpu.memory_space<vmem>>, vector<1x22x38xf32>
    %329 = vector.shape_cast %328 : vector<1x22x38xf32> to vector<22x38xf32>
    %c1_157 = arith.constant 1 : index
    %c3_158 = arith.constant 3 : index
    %c0_159 = arith.constant 0 : index
    %330 = vector.load %arg7[%c1_157, %c3_158, %c0_159] : memref<4x22x44xf32, #tpu.memory_space<vmem>>, vector<1x16x44xf32>
    %331 = vector.shape_cast %330 : vector<1x16x44xf32> to vector<16x44xf32>
    %c39 = arith.constant 39 : index
    %332 = memref.load %arg2[%c39] : memref<84xf32, #tpu.memory_space<smem>>
    %333 = vector.broadcast %332 : f32 to vector<22x38xf32>
    %334 = arith.mulf %333, %329 : vector<22x38xf32>
    %335 = arith.addf %307, %334 : vector<22x38xf32>
    %c39_160 = arith.constant 39 : index
    %336 = memref.load %arg4[%c39_160] : memref<84xf32, #tpu.memory_space<smem>>
    %337 = vector.broadcast %336 : f32 to vector<16x44xf32>
    %338 = arith.mulf %337, %331 : vector<16x44xf32>
    %339 = arith.addf %311, %338 : vector<16x44xf32>
    %c40 = arith.constant 40 : index
    %340 = memref.load %arg2[%c40] : memref<84xf32, #tpu.memory_space<smem>>
    %341 = vector.broadcast %340 : f32 to vector<22x38xf32>
    %342 = arith.mulf %341, %329 : vector<22x38xf32>
    %343 = arith.addf %315, %342 : vector<22x38xf32>
    %c40_161 = arith.constant 40 : index
    %344 = memref.load %arg4[%c40_161] : memref<84xf32, #tpu.memory_space<smem>>
    %345 = vector.broadcast %344 : f32 to vector<16x44xf32>
    %346 = arith.mulf %345, %331 : vector<16x44xf32>
    %347 = arith.addf %319, %346 : vector<16x44xf32>
    %c41 = arith.constant 41 : index
    %348 = memref.load %arg2[%c41] : memref<84xf32, #tpu.memory_space<smem>>
    %349 = vector.broadcast %348 : f32 to vector<22x38xf32>
    %350 = arith.mulf %349, %329 : vector<22x38xf32>
    %351 = arith.addf %323, %350 : vector<22x38xf32>
    %c41_162 = arith.constant 41 : index
    %352 = memref.load %arg4[%c41_162] : memref<84xf32, #tpu.memory_space<smem>>
    %353 = vector.broadcast %352 : f32 to vector<16x44xf32>
    %354 = arith.mulf %353, %331 : vector<16x44xf32>
    %355 = arith.addf %327, %354 : vector<16x44xf32>
    %c1_163 = arith.constant 1 : index
    %c0_164 = arith.constant 0 : index
    %c4_165 = arith.constant 4 : index
    %356 = vector.load %arg7[%c1_163, %c0_164, %c4_165] : memref<4x22x44xf32, #tpu.memory_space<vmem>>, vector<1x22x38xf32>
    %357 = vector.shape_cast %356 : vector<1x22x38xf32> to vector<22x38xf32>
    %c1_166 = arith.constant 1 : index
    %c4_167 = arith.constant 4 : index
    %c0_168 = arith.constant 0 : index
    %358 = vector.load %arg7[%c1_166, %c4_167, %c0_168] : memref<4x22x44xf32, #tpu.memory_space<vmem>>, vector<1x16x44xf32>
    %359 = vector.shape_cast %358 : vector<1x16x44xf32> to vector<16x44xf32>
    %c51 = arith.constant 51 : index
    %360 = memref.load %arg2[%c51] : memref<84xf32, #tpu.memory_space<smem>>
    %361 = vector.broadcast %360 : f32 to vector<22x38xf32>
    %362 = arith.mulf %361, %357 : vector<22x38xf32>
    %363 = arith.addf %335, %362 : vector<22x38xf32>
    %c51_169 = arith.constant 51 : index
    %364 = memref.load %arg4[%c51_169] : memref<84xf32, #tpu.memory_space<smem>>
    %365 = vector.broadcast %364 : f32 to vector<16x44xf32>
    %366 = arith.mulf %365, %359 : vector<16x44xf32>
    %367 = arith.addf %339, %366 : vector<16x44xf32>
    %c52 = arith.constant 52 : index
    %368 = memref.load %arg2[%c52] : memref<84xf32, #tpu.memory_space<smem>>
    %369 = vector.broadcast %368 : f32 to vector<22x38xf32>
    %370 = arith.mulf %369, %357 : vector<22x38xf32>
    %371 = arith.addf %343, %370 : vector<22x38xf32>
    %c52_170 = arith.constant 52 : index
    %372 = memref.load %arg4[%c52_170] : memref<84xf32, #tpu.memory_space<smem>>
    %373 = vector.broadcast %372 : f32 to vector<16x44xf32>
    %374 = arith.mulf %373, %359 : vector<16x44xf32>
    %375 = arith.addf %347, %374 : vector<16x44xf32>
    %c53 = arith.constant 53 : index
    %376 = memref.load %arg2[%c53] : memref<84xf32, #tpu.memory_space<smem>>
    %377 = vector.broadcast %376 : f32 to vector<22x38xf32>
    %378 = arith.mulf %377, %357 : vector<22x38xf32>
    %379 = arith.addf %351, %378 : vector<22x38xf32>
    %c53_171 = arith.constant 53 : index
    %380 = memref.load %arg4[%c53_171] : memref<84xf32, #tpu.memory_space<smem>>
    %381 = vector.broadcast %380 : f32 to vector<16x44xf32>
    %382 = arith.mulf %381, %359 : vector<16x44xf32>
    %383 = arith.addf %355, %382 : vector<16x44xf32>
    %c1_172 = arith.constant 1 : index
    %c0_173 = arith.constant 0 : index
    %c5_174 = arith.constant 5 : index
    %384 = vector.load %arg7[%c1_172, %c0_173, %c5_174] : memref<4x22x44xf32, #tpu.memory_space<vmem>>, vector<1x22x38xf32>
    %385 = vector.shape_cast %384 : vector<1x22x38xf32> to vector<22x38xf32>
    %c1_175 = arith.constant 1 : index
    %c5_176 = arith.constant 5 : index
    %c0_177 = arith.constant 0 : index
    %386 = vector.load %arg7[%c1_175, %c5_176, %c0_177] : memref<4x22x44xf32, #tpu.memory_space<vmem>>, vector<1x16x44xf32>
    %387 = vector.shape_cast %386 : vector<1x16x44xf32> to vector<16x44xf32>
    %c63 = arith.constant 63 : index
    %388 = memref.load %arg2[%c63] : memref<84xf32, #tpu.memory_space<smem>>
    %389 = vector.broadcast %388 : f32 to vector<22x38xf32>
    %390 = arith.mulf %389, %385 : vector<22x38xf32>
    %391 = arith.addf %363, %390 : vector<22x38xf32>
    %c63_178 = arith.constant 63 : index
    %392 = memref.load %arg4[%c63_178] : memref<84xf32, #tpu.memory_space<smem>>
    %393 = vector.broadcast %392 : f32 to vector<16x44xf32>
    %394 = arith.mulf %393, %387 : vector<16x44xf32>
    %395 = arith.addf %367, %394 : vector<16x44xf32>
    %c64 = arith.constant 64 : index
    %396 = memref.load %arg2[%c64] : memref<84xf32, #tpu.memory_space<smem>>
    %397 = vector.broadcast %396 : f32 to vector<22x38xf32>
    %398 = arith.mulf %397, %385 : vector<22x38xf32>
    %399 = arith.addf %371, %398 : vector<22x38xf32>
    %c64_179 = arith.constant 64 : index
    %400 = memref.load %arg4[%c64_179] : memref<84xf32, #tpu.memory_space<smem>>
    %401 = vector.broadcast %400 : f32 to vector<16x44xf32>
    %402 = arith.mulf %401, %387 : vector<16x44xf32>
    %403 = arith.addf %375, %402 : vector<16x44xf32>
    %c65 = arith.constant 65 : index
    %404 = memref.load %arg2[%c65] : memref<84xf32, #tpu.memory_space<smem>>
    %405 = vector.broadcast %404 : f32 to vector<22x38xf32>
    %406 = arith.mulf %405, %385 : vector<22x38xf32>
    %407 = arith.addf %379, %406 : vector<22x38xf32>
    %c65_180 = arith.constant 65 : index
    %408 = memref.load %arg4[%c65_180] : memref<84xf32, #tpu.memory_space<smem>>
    %409 = vector.broadcast %408 : f32 to vector<16x44xf32>
    %410 = arith.mulf %409, %387 : vector<16x44xf32>
    %411 = arith.addf %383, %410 : vector<16x44xf32>
    %c1_181 = arith.constant 1 : index
    %c0_182 = arith.constant 0 : index
    %c6_183 = arith.constant 6 : index
    %412 = vector.load %arg7[%c1_181, %c0_182, %c6_183] : memref<4x22x44xf32, #tpu.memory_space<vmem>>, vector<1x22x38xf32>
    %413 = vector.shape_cast %412 : vector<1x22x38xf32> to vector<22x38xf32>
    %c1_184 = arith.constant 1 : index
    %c6_185 = arith.constant 6 : index
    %c0_186 = arith.constant 0 : index
    %414 = vector.load %arg7[%c1_184, %c6_185, %c0_186] : memref<4x22x44xf32, #tpu.memory_space<vmem>>, vector<1x16x44xf32>
    %415 = vector.shape_cast %414 : vector<1x16x44xf32> to vector<16x44xf32>
    %c75 = arith.constant 75 : index
    %416 = memref.load %arg2[%c75] : memref<84xf32, #tpu.memory_space<smem>>
    %417 = vector.broadcast %416 : f32 to vector<22x38xf32>
    %418 = arith.mulf %417, %413 : vector<22x38xf32>
    %419 = arith.addf %391, %418 : vector<22x38xf32>
    %c75_187 = arith.constant 75 : index
    %420 = memref.load %arg4[%c75_187] : memref<84xf32, #tpu.memory_space<smem>>
    %421 = vector.broadcast %420 : f32 to vector<16x44xf32>
    %422 = arith.mulf %421, %415 : vector<16x44xf32>
    %423 = arith.addf %395, %422 : vector<16x44xf32>
    %c76 = arith.constant 76 : index
    %424 = memref.load %arg2[%c76] : memref<84xf32, #tpu.memory_space<smem>>
    %425 = vector.broadcast %424 : f32 to vector<22x38xf32>
    %426 = arith.mulf %425, %413 : vector<22x38xf32>
    %427 = arith.addf %399, %426 : vector<22x38xf32>
    %c76_188 = arith.constant 76 : index
    %428 = memref.load %arg4[%c76_188] : memref<84xf32, #tpu.memory_space<smem>>
    %429 = vector.broadcast %428 : f32 to vector<16x44xf32>
    %430 = arith.mulf %429, %415 : vector<16x44xf32>
    %431 = arith.addf %403, %430 : vector<16x44xf32>
    %c77 = arith.constant 77 : index
    %432 = memref.load %arg2[%c77] : memref<84xf32, #tpu.memory_space<smem>>
    %433 = vector.broadcast %432 : f32 to vector<22x38xf32>
    %434 = arith.mulf %433, %413 : vector<22x38xf32>
    %435 = arith.addf %407, %434 : vector<22x38xf32>
    %c77_189 = arith.constant 77 : index
    %436 = memref.load %arg4[%c77_189] : memref<84xf32, #tpu.memory_space<smem>>
    %437 = vector.broadcast %436 : f32 to vector<16x44xf32>
    %438 = arith.mulf %437, %415 : vector<16x44xf32>
    %439 = arith.addf %411, %438 : vector<16x44xf32>
    %c2_190 = arith.constant 2 : index
    %c0_191 = arith.constant 0 : index
    %c0_192 = arith.constant 0 : index
    %440 = vector.load %arg7[%c2_190, %c0_191, %c0_192] : memref<4x22x44xf32, #tpu.memory_space<vmem>>, vector<1x22x38xf32>
    %441 = vector.shape_cast %440 : vector<1x22x38xf32> to vector<22x38xf32>
    %c2_193 = arith.constant 2 : index
    %c0_194 = arith.constant 0 : index
    %c0_195 = arith.constant 0 : index
    %442 = vector.load %arg7[%c2_193, %c0_194, %c0_195] : memref<4x22x44xf32, #tpu.memory_space<vmem>>, vector<1x16x44xf32>
    %443 = vector.shape_cast %442 : vector<1x16x44xf32> to vector<16x44xf32>
    %c6_196 = arith.constant 6 : index
    %444 = memref.load %arg2[%c6_196] : memref<84xf32, #tpu.memory_space<smem>>
    %445 = vector.broadcast %444 : f32 to vector<22x38xf32>
    %446 = arith.mulf %445, %441 : vector<22x38xf32>
    %447 = arith.addf %419, %446 : vector<22x38xf32>
    %c6_197 = arith.constant 6 : index
    %448 = memref.load %arg4[%c6_197] : memref<84xf32, #tpu.memory_space<smem>>
    %449 = vector.broadcast %448 : f32 to vector<16x44xf32>
    %450 = arith.mulf %449, %443 : vector<16x44xf32>
    %451 = arith.addf %423, %450 : vector<16x44xf32>
    %c7 = arith.constant 7 : index
    %452 = memref.load %arg2[%c7] : memref<84xf32, #tpu.memory_space<smem>>
    %453 = vector.broadcast %452 : f32 to vector<22x38xf32>
    %454 = arith.mulf %453, %441 : vector<22x38xf32>
    %455 = arith.addf %427, %454 : vector<22x38xf32>
    %c7_198 = arith.constant 7 : index
    %456 = memref.load %arg4[%c7_198] : memref<84xf32, #tpu.memory_space<smem>>
    %457 = vector.broadcast %456 : f32 to vector<16x44xf32>
    %458 = arith.mulf %457, %443 : vector<16x44xf32>
    %459 = arith.addf %431, %458 : vector<16x44xf32>
    %c8 = arith.constant 8 : index
    %460 = memref.load %arg2[%c8] : memref<84xf32, #tpu.memory_space<smem>>
    %461 = vector.broadcast %460 : f32 to vector<22x38xf32>
    %462 = arith.mulf %461, %441 : vector<22x38xf32>
    %463 = arith.addf %435, %462 : vector<22x38xf32>
    %c8_199 = arith.constant 8 : index
    %464 = memref.load %arg4[%c8_199] : memref<84xf32, #tpu.memory_space<smem>>
    %465 = vector.broadcast %464 : f32 to vector<16x44xf32>
    %466 = arith.mulf %465, %443 : vector<16x44xf32>
    %467 = arith.addf %439, %466 : vector<16x44xf32>
    %c2_200 = arith.constant 2 : index
    %c0_201 = arith.constant 0 : index
    %c1_202 = arith.constant 1 : index
    %468 = vector.load %arg7[%c2_200, %c0_201, %c1_202] : memref<4x22x44xf32, #tpu.memory_space<vmem>>, vector<1x22x38xf32>
    %469 = vector.shape_cast %468 : vector<1x22x38xf32> to vector<22x38xf32>
    %c2_203 = arith.constant 2 : index
    %c1_204 = arith.constant 1 : index
    %c0_205 = arith.constant 0 : index
    %470 = vector.load %arg7[%c2_203, %c1_204, %c0_205] : memref<4x22x44xf32, #tpu.memory_space<vmem>>, vector<1x16x44xf32>
    %471 = vector.shape_cast %470 : vector<1x16x44xf32> to vector<16x44xf32>
    %c18 = arith.constant 18 : index
    %472 = memref.load %arg2[%c18] : memref<84xf32, #tpu.memory_space<smem>>
    %473 = vector.broadcast %472 : f32 to vector<22x38xf32>
    %474 = arith.mulf %473, %469 : vector<22x38xf32>
    %475 = arith.addf %447, %474 : vector<22x38xf32>
    %c18_206 = arith.constant 18 : index
    %476 = memref.load %arg4[%c18_206] : memref<84xf32, #tpu.memory_space<smem>>
    %477 = vector.broadcast %476 : f32 to vector<16x44xf32>
    %478 = arith.mulf %477, %471 : vector<16x44xf32>
    %479 = arith.addf %451, %478 : vector<16x44xf32>
    %c19 = arith.constant 19 : index
    %480 = memref.load %arg2[%c19] : memref<84xf32, #tpu.memory_space<smem>>
    %481 = vector.broadcast %480 : f32 to vector<22x38xf32>
    %482 = arith.mulf %481, %469 : vector<22x38xf32>
    %483 = arith.addf %455, %482 : vector<22x38xf32>
    %c19_207 = arith.constant 19 : index
    %484 = memref.load %arg4[%c19_207] : memref<84xf32, #tpu.memory_space<smem>>
    %485 = vector.broadcast %484 : f32 to vector<16x44xf32>
    %486 = arith.mulf %485, %471 : vector<16x44xf32>
    %487 = arith.addf %459, %486 : vector<16x44xf32>
    %c20 = arith.constant 20 : index
    %488 = memref.load %arg2[%c20] : memref<84xf32, #tpu.memory_space<smem>>
    %489 = vector.broadcast %488 : f32 to vector<22x38xf32>
    %490 = arith.mulf %489, %469 : vector<22x38xf32>
    %491 = arith.addf %463, %490 : vector<22x38xf32>
    %c20_208 = arith.constant 20 : index
    %492 = memref.load %arg4[%c20_208] : memref<84xf32, #tpu.memory_space<smem>>
    %493 = vector.broadcast %492 : f32 to vector<16x44xf32>
    %494 = arith.mulf %493, %471 : vector<16x44xf32>
    %495 = arith.addf %467, %494 : vector<16x44xf32>
    %c2_209 = arith.constant 2 : index
    %c0_210 = arith.constant 0 : index
    %c2_211 = arith.constant 2 : index
    %496 = vector.load %arg7[%c2_209, %c0_210, %c2_211] : memref<4x22x44xf32, #tpu.memory_space<vmem>>, vector<1x22x38xf32>
    %497 = vector.shape_cast %496 : vector<1x22x38xf32> to vector<22x38xf32>
    %c2_212 = arith.constant 2 : index
    %c2_213 = arith.constant 2 : index
    %c0_214 = arith.constant 0 : index
    %498 = vector.load %arg7[%c2_212, %c2_213, %c0_214] : memref<4x22x44xf32, #tpu.memory_space<vmem>>, vector<1x16x44xf32>
    %499 = vector.shape_cast %498 : vector<1x16x44xf32> to vector<16x44xf32>
    %c30 = arith.constant 30 : index
    %500 = memref.load %arg2[%c30] : memref<84xf32, #tpu.memory_space<smem>>
    %501 = vector.broadcast %500 : f32 to vector<22x38xf32>
    %502 = arith.mulf %501, %497 : vector<22x38xf32>
    %503 = arith.addf %475, %502 : vector<22x38xf32>
    %c30_215 = arith.constant 30 : index
    %504 = memref.load %arg4[%c30_215] : memref<84xf32, #tpu.memory_space<smem>>
    %505 = vector.broadcast %504 : f32 to vector<16x44xf32>
    %506 = arith.mulf %505, %499 : vector<16x44xf32>
    %507 = arith.addf %479, %506 : vector<16x44xf32>
    %c31 = arith.constant 31 : index
    %508 = memref.load %arg2[%c31] : memref<84xf32, #tpu.memory_space<smem>>
    %509 = vector.broadcast %508 : f32 to vector<22x38xf32>
    %510 = arith.mulf %509, %497 : vector<22x38xf32>
    %511 = arith.addf %483, %510 : vector<22x38xf32>
    %c31_216 = arith.constant 31 : index
    %512 = memref.load %arg4[%c31_216] : memref<84xf32, #tpu.memory_space<smem>>
    %513 = vector.broadcast %512 : f32 to vector<16x44xf32>
    %514 = arith.mulf %513, %499 : vector<16x44xf32>
    %515 = arith.addf %487, %514 : vector<16x44xf32>
    %c32 = arith.constant 32 : index
    %516 = memref.load %arg2[%c32] : memref<84xf32, #tpu.memory_space<smem>>
    %517 = vector.broadcast %516 : f32 to vector<22x38xf32>
    %518 = arith.mulf %517, %497 : vector<22x38xf32>
    %519 = arith.addf %491, %518 : vector<22x38xf32>
    %c32_217 = arith.constant 32 : index
    %520 = memref.load %arg4[%c32_217] : memref<84xf32, #tpu.memory_space<smem>>
    %521 = vector.broadcast %520 : f32 to vector<16x44xf32>
    %522 = arith.mulf %521, %499 : vector<16x44xf32>
    %523 = arith.addf %495, %522 : vector<16x44xf32>
    %c2_218 = arith.constant 2 : index
    %c0_219 = arith.constant 0 : index
    %c3_220 = arith.constant 3 : index
    %524 = vector.load %arg7[%c2_218, %c0_219, %c3_220] : memref<4x22x44xf32, #tpu.memory_space<vmem>>, vector<1x22x38xf32>
    %525 = vector.shape_cast %524 : vector<1x22x38xf32> to vector<22x38xf32>
    %c2_221 = arith.constant 2 : index
    %c3_222 = arith.constant 3 : index
    %c0_223 = arith.constant 0 : index
    %526 = vector.load %arg7[%c2_221, %c3_222, %c0_223] : memref<4x22x44xf32, #tpu.memory_space<vmem>>, vector<1x16x44xf32>
    %527 = vector.shape_cast %526 : vector<1x16x44xf32> to vector<16x44xf32>
    %c42 = arith.constant 42 : index
    %528 = memref.load %arg2[%c42] : memref<84xf32, #tpu.memory_space<smem>>
    %529 = vector.broadcast %528 : f32 to vector<22x38xf32>
    %530 = arith.mulf %529, %525 : vector<22x38xf32>
    %531 = arith.addf %503, %530 : vector<22x38xf32>
    %c42_224 = arith.constant 42 : index
    %532 = memref.load %arg4[%c42_224] : memref<84xf32, #tpu.memory_space<smem>>
    %533 = vector.broadcast %532 : f32 to vector<16x44xf32>
    %534 = arith.mulf %533, %527 : vector<16x44xf32>
    %535 = arith.addf %507, %534 : vector<16x44xf32>
    %c43 = arith.constant 43 : index
    %536 = memref.load %arg2[%c43] : memref<84xf32, #tpu.memory_space<smem>>
    %537 = vector.broadcast %536 : f32 to vector<22x38xf32>
    %538 = arith.mulf %537, %525 : vector<22x38xf32>
    %539 = arith.addf %511, %538 : vector<22x38xf32>
    %c43_225 = arith.constant 43 : index
    %540 = memref.load %arg4[%c43_225] : memref<84xf32, #tpu.memory_space<smem>>
    %541 = vector.broadcast %540 : f32 to vector<16x44xf32>
    %542 = arith.mulf %541, %527 : vector<16x44xf32>
    %543 = arith.addf %515, %542 : vector<16x44xf32>
    %c44 = arith.constant 44 : index
    %544 = memref.load %arg2[%c44] : memref<84xf32, #tpu.memory_space<smem>>
    %545 = vector.broadcast %544 : f32 to vector<22x38xf32>
    %546 = arith.mulf %545, %525 : vector<22x38xf32>
    %547 = arith.addf %519, %546 : vector<22x38xf32>
    %c44_226 = arith.constant 44 : index
    %548 = memref.load %arg4[%c44_226] : memref<84xf32, #tpu.memory_space<smem>>
    %549 = vector.broadcast %548 : f32 to vector<16x44xf32>
    %550 = arith.mulf %549, %527 : vector<16x44xf32>
    %551 = arith.addf %523, %550 : vector<16x44xf32>
    %c2_227 = arith.constant 2 : index
    %c0_228 = arith.constant 0 : index
    %c4_229 = arith.constant 4 : index
    %552 = vector.load %arg7[%c2_227, %c0_228, %c4_229] : memref<4x22x44xf32, #tpu.memory_space<vmem>>, vector<1x22x38xf32>
    %553 = vector.shape_cast %552 : vector<1x22x38xf32> to vector<22x38xf32>
    %c2_230 = arith.constant 2 : index
    %c4_231 = arith.constant 4 : index
    %c0_232 = arith.constant 0 : index
    %554 = vector.load %arg7[%c2_230, %c4_231, %c0_232] : memref<4x22x44xf32, #tpu.memory_space<vmem>>, vector<1x16x44xf32>
    %555 = vector.shape_cast %554 : vector<1x16x44xf32> to vector<16x44xf32>
    %c54 = arith.constant 54 : index
    %556 = memref.load %arg2[%c54] : memref<84xf32, #tpu.memory_space<smem>>
    %557 = vector.broadcast %556 : f32 to vector<22x38xf32>
    %558 = arith.mulf %557, %553 : vector<22x38xf32>
    %559 = arith.addf %531, %558 : vector<22x38xf32>
    %c54_233 = arith.constant 54 : index
    %560 = memref.load %arg4[%c54_233] : memref<84xf32, #tpu.memory_space<smem>>
    %561 = vector.broadcast %560 : f32 to vector<16x44xf32>
    %562 = arith.mulf %561, %555 : vector<16x44xf32>
    %563 = arith.addf %535, %562 : vector<16x44xf32>
    %c55 = arith.constant 55 : index
    %564 = memref.load %arg2[%c55] : memref<84xf32, #tpu.memory_space<smem>>
    %565 = vector.broadcast %564 : f32 to vector<22x38xf32>
    %566 = arith.mulf %565, %553 : vector<22x38xf32>
    %567 = arith.addf %539, %566 : vector<22x38xf32>
    %c55_234 = arith.constant 55 : index
    %568 = memref.load %arg4[%c55_234] : memref<84xf32, #tpu.memory_space<smem>>
    %569 = vector.broadcast %568 : f32 to vector<16x44xf32>
    %570 = arith.mulf %569, %555 : vector<16x44xf32>
    %571 = arith.addf %543, %570 : vector<16x44xf32>
    %c56 = arith.constant 56 : index
    %572 = memref.load %arg2[%c56] : memref<84xf32, #tpu.memory_space<smem>>
    %573 = vector.broadcast %572 : f32 to vector<22x38xf32>
    %574 = arith.mulf %573, %553 : vector<22x38xf32>
    %575 = arith.addf %547, %574 : vector<22x38xf32>
    %c56_235 = arith.constant 56 : index
    %576 = memref.load %arg4[%c56_235] : memref<84xf32, #tpu.memory_space<smem>>
    %577 = vector.broadcast %576 : f32 to vector<16x44xf32>
    %578 = arith.mulf %577, %555 : vector<16x44xf32>
    %579 = arith.addf %551, %578 : vector<16x44xf32>
    %c2_236 = arith.constant 2 : index
    %c0_237 = arith.constant 0 : index
    %c5_238 = arith.constant 5 : index
    %580 = vector.load %arg7[%c2_236, %c0_237, %c5_238] : memref<4x22x44xf32, #tpu.memory_space<vmem>>, vector<1x22x38xf32>
    %581 = vector.shape_cast %580 : vector<1x22x38xf32> to vector<22x38xf32>
    %c2_239 = arith.constant 2 : index
    %c5_240 = arith.constant 5 : index
    %c0_241 = arith.constant 0 : index
    %582 = vector.load %arg7[%c2_239, %c5_240, %c0_241] : memref<4x22x44xf32, #tpu.memory_space<vmem>>, vector<1x16x44xf32>
    %583 = vector.shape_cast %582 : vector<1x16x44xf32> to vector<16x44xf32>
    %c66 = arith.constant 66 : index
    %584 = memref.load %arg2[%c66] : memref<84xf32, #tpu.memory_space<smem>>
    %585 = vector.broadcast %584 : f32 to vector<22x38xf32>
    %586 = arith.mulf %585, %581 : vector<22x38xf32>
    %587 = arith.addf %559, %586 : vector<22x38xf32>
    %c66_242 = arith.constant 66 : index
    %588 = memref.load %arg4[%c66_242] : memref<84xf32, #tpu.memory_space<smem>>
    %589 = vector.broadcast %588 : f32 to vector<16x44xf32>
    %590 = arith.mulf %589, %583 : vector<16x44xf32>
    %591 = arith.addf %563, %590 : vector<16x44xf32>
    %c67 = arith.constant 67 : index
    %592 = memref.load %arg2[%c67] : memref<84xf32, #tpu.memory_space<smem>>
    %593 = vector.broadcast %592 : f32 to vector<22x38xf32>
    %594 = arith.mulf %593, %581 : vector<22x38xf32>
    %595 = arith.addf %567, %594 : vector<22x38xf32>
    %c67_243 = arith.constant 67 : index
    %596 = memref.load %arg4[%c67_243] : memref<84xf32, #tpu.memory_space<smem>>
    %597 = vector.broadcast %596 : f32 to vector<16x44xf32>
    %598 = arith.mulf %597, %583 : vector<16x44xf32>
    %599 = arith.addf %571, %598 : vector<16x44xf32>
    %c68 = arith.constant 68 : index
    %600 = memref.load %arg2[%c68] : memref<84xf32, #tpu.memory_space<smem>>
    %601 = vector.broadcast %600 : f32 to vector<22x38xf32>
    %602 = arith.mulf %601, %581 : vector<22x38xf32>
    %603 = arith.addf %575, %602 : vector<22x38xf32>
    %c68_244 = arith.constant 68 : index
    %604 = memref.load %arg4[%c68_244] : memref<84xf32, #tpu.memory_space<smem>>
    %605 = vector.broadcast %604 : f32 to vector<16x44xf32>
    %606 = arith.mulf %605, %583 : vector<16x44xf32>
    %607 = arith.addf %579, %606 : vector<16x44xf32>
    %c2_245 = arith.constant 2 : index
    %c0_246 = arith.constant 0 : index
    %c6_247 = arith.constant 6 : index
    %608 = vector.load %arg7[%c2_245, %c0_246, %c6_247] : memref<4x22x44xf32, #tpu.memory_space<vmem>>, vector<1x22x38xf32>
    %609 = vector.shape_cast %608 : vector<1x22x38xf32> to vector<22x38xf32>
    %c2_248 = arith.constant 2 : index
    %c6_249 = arith.constant 6 : index
    %c0_250 = arith.constant 0 : index
    %610 = vector.load %arg7[%c2_248, %c6_249, %c0_250] : memref<4x22x44xf32, #tpu.memory_space<vmem>>, vector<1x16x44xf32>
    %611 = vector.shape_cast %610 : vector<1x16x44xf32> to vector<16x44xf32>
    %c78 = arith.constant 78 : index
    %612 = memref.load %arg2[%c78] : memref<84xf32, #tpu.memory_space<smem>>
    %613 = vector.broadcast %612 : f32 to vector<22x38xf32>
    %614 = arith.mulf %613, %609 : vector<22x38xf32>
    %615 = arith.addf %587, %614 : vector<22x38xf32>
    %c78_251 = arith.constant 78 : index
    %616 = memref.load %arg4[%c78_251] : memref<84xf32, #tpu.memory_space<smem>>
    %617 = vector.broadcast %616 : f32 to vector<16x44xf32>
    %618 = arith.mulf %617, %611 : vector<16x44xf32>
    %619 = arith.addf %591, %618 : vector<16x44xf32>
    %c79 = arith.constant 79 : index
    %620 = memref.load %arg2[%c79] : memref<84xf32, #tpu.memory_space<smem>>
    %621 = vector.broadcast %620 : f32 to vector<22x38xf32>
    %622 = arith.mulf %621, %609 : vector<22x38xf32>
    %623 = arith.addf %595, %622 : vector<22x38xf32>
    %c79_252 = arith.constant 79 : index
    %624 = memref.load %arg4[%c79_252] : memref<84xf32, #tpu.memory_space<smem>>
    %625 = vector.broadcast %624 : f32 to vector<16x44xf32>
    %626 = arith.mulf %625, %611 : vector<16x44xf32>
    %627 = arith.addf %599, %626 : vector<16x44xf32>
    %c80 = arith.constant 80 : index
    %628 = memref.load %arg2[%c80] : memref<84xf32, #tpu.memory_space<smem>>
    %629 = vector.broadcast %628 : f32 to vector<22x38xf32>
    %630 = arith.mulf %629, %609 : vector<22x38xf32>
    %631 = arith.addf %603, %630 : vector<22x38xf32>
    %c80_253 = arith.constant 80 : index
    %632 = memref.load %arg4[%c80_253] : memref<84xf32, #tpu.memory_space<smem>>
    %633 = vector.broadcast %632 : f32 to vector<16x44xf32>
    %634 = arith.mulf %633, %611 : vector<16x44xf32>
    %635 = arith.addf %607, %634 : vector<16x44xf32>
    %c3_254 = arith.constant 3 : index
    %c0_255 = arith.constant 0 : index
    %c0_256 = arith.constant 0 : index
    %636 = vector.load %arg7[%c3_254, %c0_255, %c0_256] : memref<4x22x44xf32, #tpu.memory_space<vmem>>, vector<1x22x38xf32>
    %637 = vector.shape_cast %636 : vector<1x22x38xf32> to vector<22x38xf32>
    %c3_257 = arith.constant 3 : index
    %c0_258 = arith.constant 0 : index
    %c0_259 = arith.constant 0 : index
    %638 = vector.load %arg7[%c3_257, %c0_258, %c0_259] : memref<4x22x44xf32, #tpu.memory_space<vmem>>, vector<1x16x44xf32>
    %639 = vector.shape_cast %638 : vector<1x16x44xf32> to vector<16x44xf32>
    %c9 = arith.constant 9 : index
    %640 = memref.load %arg2[%c9] : memref<84xf32, #tpu.memory_space<smem>>
    %641 = vector.broadcast %640 : f32 to vector<22x38xf32>
    %642 = arith.mulf %641, %637 : vector<22x38xf32>
    %643 = arith.addf %615, %642 : vector<22x38xf32>
    %c9_260 = arith.constant 9 : index
    %644 = memref.load %arg4[%c9_260] : memref<84xf32, #tpu.memory_space<smem>>
    %645 = vector.broadcast %644 : f32 to vector<16x44xf32>
    %646 = arith.mulf %645, %639 : vector<16x44xf32>
    %647 = arith.addf %619, %646 : vector<16x44xf32>
    %c10 = arith.constant 10 : index
    %648 = memref.load %arg2[%c10] : memref<84xf32, #tpu.memory_space<smem>>
    %649 = vector.broadcast %648 : f32 to vector<22x38xf32>
    %650 = arith.mulf %649, %637 : vector<22x38xf32>
    %651 = arith.addf %623, %650 : vector<22x38xf32>
    %c10_261 = arith.constant 10 : index
    %652 = memref.load %arg4[%c10_261] : memref<84xf32, #tpu.memory_space<smem>>
    %653 = vector.broadcast %652 : f32 to vector<16x44xf32>
    %654 = arith.mulf %653, %639 : vector<16x44xf32>
    %655 = arith.addf %627, %654 : vector<16x44xf32>
    %c11 = arith.constant 11 : index
    %656 = memref.load %arg2[%c11] : memref<84xf32, #tpu.memory_space<smem>>
    %657 = vector.broadcast %656 : f32 to vector<22x38xf32>
    %658 = arith.mulf %657, %637 : vector<22x38xf32>
    %659 = arith.addf %631, %658 : vector<22x38xf32>
    %c11_262 = arith.constant 11 : index
    %660 = memref.load %arg4[%c11_262] : memref<84xf32, #tpu.memory_space<smem>>
    %661 = vector.broadcast %660 : f32 to vector<16x44xf32>
    %662 = arith.mulf %661, %639 : vector<16x44xf32>
    %663 = arith.addf %635, %662 : vector<16x44xf32>
    %c3_263 = arith.constant 3 : index
    %c0_264 = arith.constant 0 : index
    %c1_265 = arith.constant 1 : index
    %664 = vector.load %arg7[%c3_263, %c0_264, %c1_265] : memref<4x22x44xf32, #tpu.memory_space<vmem>>, vector<1x22x38xf32>
    %665 = vector.shape_cast %664 : vector<1x22x38xf32> to vector<22x38xf32>
    %c3_266 = arith.constant 3 : index
    %c1_267 = arith.constant 1 : index
    %c0_268 = arith.constant 0 : index
    %666 = vector.load %arg7[%c3_266, %c1_267, %c0_268] : memref<4x22x44xf32, #tpu.memory_space<vmem>>, vector<1x16x44xf32>
    %667 = vector.shape_cast %666 : vector<1x16x44xf32> to vector<16x44xf32>
    %c21 = arith.constant 21 : index
    %668 = memref.load %arg2[%c21] : memref<84xf32, #tpu.memory_space<smem>>
    %669 = vector.broadcast %668 : f32 to vector<22x38xf32>
    %670 = arith.mulf %669, %665 : vector<22x38xf32>
    %671 = arith.addf %643, %670 : vector<22x38xf32>
    %c21_269 = arith.constant 21 : index
    %672 = memref.load %arg4[%c21_269] : memref<84xf32, #tpu.memory_space<smem>>
    %673 = vector.broadcast %672 : f32 to vector<16x44xf32>
    %674 = arith.mulf %673, %667 : vector<16x44xf32>
    %675 = arith.addf %647, %674 : vector<16x44xf32>
    %c22 = arith.constant 22 : index
    %676 = memref.load %arg2[%c22] : memref<84xf32, #tpu.memory_space<smem>>
    %677 = vector.broadcast %676 : f32 to vector<22x38xf32>
    %678 = arith.mulf %677, %665 : vector<22x38xf32>
    %679 = arith.addf %651, %678 : vector<22x38xf32>
    %c22_270 = arith.constant 22 : index
    %680 = memref.load %arg4[%c22_270] : memref<84xf32, #tpu.memory_space<smem>>
    %681 = vector.broadcast %680 : f32 to vector<16x44xf32>
    %682 = arith.mulf %681, %667 : vector<16x44xf32>
    %683 = arith.addf %655, %682 : vector<16x44xf32>
    %c23 = arith.constant 23 : index
    %684 = memref.load %arg2[%c23] : memref<84xf32, #tpu.memory_space<smem>>
    %685 = vector.broadcast %684 : f32 to vector<22x38xf32>
    %686 = arith.mulf %685, %665 : vector<22x38xf32>
    %687 = arith.addf %659, %686 : vector<22x38xf32>
    %c23_271 = arith.constant 23 : index
    %688 = memref.load %arg4[%c23_271] : memref<84xf32, #tpu.memory_space<smem>>
    %689 = vector.broadcast %688 : f32 to vector<16x44xf32>
    %690 = arith.mulf %689, %667 : vector<16x44xf32>
    %691 = arith.addf %663, %690 : vector<16x44xf32>
    %c3_272 = arith.constant 3 : index
    %c0_273 = arith.constant 0 : index
    %c2_274 = arith.constant 2 : index
    %692 = vector.load %arg7[%c3_272, %c0_273, %c2_274] : memref<4x22x44xf32, #tpu.memory_space<vmem>>, vector<1x22x38xf32>
    %693 = vector.shape_cast %692 : vector<1x22x38xf32> to vector<22x38xf32>
    %c3_275 = arith.constant 3 : index
    %c2_276 = arith.constant 2 : index
    %c0_277 = arith.constant 0 : index
    %694 = vector.load %arg7[%c3_275, %c2_276, %c0_277] : memref<4x22x44xf32, #tpu.memory_space<vmem>>, vector<1x16x44xf32>
    %695 = vector.shape_cast %694 : vector<1x16x44xf32> to vector<16x44xf32>
    %c33 = arith.constant 33 : index
    %696 = memref.load %arg2[%c33] : memref<84xf32, #tpu.memory_space<smem>>
    %697 = vector.broadcast %696 : f32 to vector<22x38xf32>
    %698 = arith.mulf %697, %693 : vector<22x38xf32>
    %699 = arith.addf %671, %698 : vector<22x38xf32>
    %c33_278 = arith.constant 33 : index
    %700 = memref.load %arg4[%c33_278] : memref<84xf32, #tpu.memory_space<smem>>
    %701 = vector.broadcast %700 : f32 to vector<16x44xf32>
    %702 = arith.mulf %701, %695 : vector<16x44xf32>
    %703 = arith.addf %675, %702 : vector<16x44xf32>
    %c34 = arith.constant 34 : index
    %704 = memref.load %arg2[%c34] : memref<84xf32, #tpu.memory_space<smem>>
    %705 = vector.broadcast %704 : f32 to vector<22x38xf32>
    %706 = arith.mulf %705, %693 : vector<22x38xf32>
    %707 = arith.addf %679, %706 : vector<22x38xf32>
    %c34_279 = arith.constant 34 : index
    %708 = memref.load %arg4[%c34_279] : memref<84xf32, #tpu.memory_space<smem>>
    %709 = vector.broadcast %708 : f32 to vector<16x44xf32>
    %710 = arith.mulf %709, %695 : vector<16x44xf32>
    %711 = arith.addf %683, %710 : vector<16x44xf32>
    %c35 = arith.constant 35 : index
    %712 = memref.load %arg2[%c35] : memref<84xf32, #tpu.memory_space<smem>>
    %713 = vector.broadcast %712 : f32 to vector<22x38xf32>
    %714 = arith.mulf %713, %693 : vector<22x38xf32>
    %715 = arith.addf %687, %714 : vector<22x38xf32>
    %c35_280 = arith.constant 35 : index
    %716 = memref.load %arg4[%c35_280] : memref<84xf32, #tpu.memory_space<smem>>
    %717 = vector.broadcast %716 : f32 to vector<16x44xf32>
    %718 = arith.mulf %717, %695 : vector<16x44xf32>
    %719 = arith.addf %691, %718 : vector<16x44xf32>
    %c3_281 = arith.constant 3 : index
    %c0_282 = arith.constant 0 : index
    %c3_283 = arith.constant 3 : index
    %720 = vector.load %arg7[%c3_281, %c0_282, %c3_283] : memref<4x22x44xf32, #tpu.memory_space<vmem>>, vector<1x22x38xf32>
    %721 = vector.shape_cast %720 : vector<1x22x38xf32> to vector<22x38xf32>
    %c3_284 = arith.constant 3 : index
    %c3_285 = arith.constant 3 : index
    %c0_286 = arith.constant 0 : index
    %722 = vector.load %arg7[%c3_284, %c3_285, %c0_286] : memref<4x22x44xf32, #tpu.memory_space<vmem>>, vector<1x16x44xf32>
    %723 = vector.shape_cast %722 : vector<1x16x44xf32> to vector<16x44xf32>
    %c45 = arith.constant 45 : index
    %724 = memref.load %arg2[%c45] : memref<84xf32, #tpu.memory_space<smem>>
    %725 = vector.broadcast %724 : f32 to vector<22x38xf32>
    %726 = arith.mulf %725, %721 : vector<22x38xf32>
    %727 = arith.addf %699, %726 : vector<22x38xf32>
    %c45_287 = arith.constant 45 : index
    %728 = memref.load %arg4[%c45_287] : memref<84xf32, #tpu.memory_space<smem>>
    %729 = vector.broadcast %728 : f32 to vector<16x44xf32>
    %730 = arith.mulf %729, %723 : vector<16x44xf32>
    %731 = arith.addf %703, %730 : vector<16x44xf32>
    %c46 = arith.constant 46 : index
    %732 = memref.load %arg2[%c46] : memref<84xf32, #tpu.memory_space<smem>>
    %733 = vector.broadcast %732 : f32 to vector<22x38xf32>
    %734 = arith.mulf %733, %721 : vector<22x38xf32>
    %735 = arith.addf %707, %734 : vector<22x38xf32>
    %c46_288 = arith.constant 46 : index
    %736 = memref.load %arg4[%c46_288] : memref<84xf32, #tpu.memory_space<smem>>
    %737 = vector.broadcast %736 : f32 to vector<16x44xf32>
    %738 = arith.mulf %737, %723 : vector<16x44xf32>
    %739 = arith.addf %711, %738 : vector<16x44xf32>
    %c47 = arith.constant 47 : index
    %740 = memref.load %arg2[%c47] : memref<84xf32, #tpu.memory_space<smem>>
    %741 = vector.broadcast %740 : f32 to vector<22x38xf32>
    %742 = arith.mulf %741, %721 : vector<22x38xf32>
    %743 = arith.addf %715, %742 : vector<22x38xf32>
    %c47_289 = arith.constant 47 : index
    %744 = memref.load %arg4[%c47_289] : memref<84xf32, #tpu.memory_space<smem>>
    %745 = vector.broadcast %744 : f32 to vector<16x44xf32>
    %746 = arith.mulf %745, %723 : vector<16x44xf32>
    %747 = arith.addf %719, %746 : vector<16x44xf32>
    %c3_290 = arith.constant 3 : index
    %c0_291 = arith.constant 0 : index
    %c4_292 = arith.constant 4 : index
    %748 = vector.load %arg7[%c3_290, %c0_291, %c4_292] : memref<4x22x44xf32, #tpu.memory_space<vmem>>, vector<1x22x38xf32>
    %749 = vector.shape_cast %748 : vector<1x22x38xf32> to vector<22x38xf32>
    %c3_293 = arith.constant 3 : index
    %c4_294 = arith.constant 4 : index
    %c0_295 = arith.constant 0 : index
    %750 = vector.load %arg7[%c3_293, %c4_294, %c0_295] : memref<4x22x44xf32, #tpu.memory_space<vmem>>, vector<1x16x44xf32>
    %751 = vector.shape_cast %750 : vector<1x16x44xf32> to vector<16x44xf32>
    %c57 = arith.constant 57 : index
    %752 = memref.load %arg2[%c57] : memref<84xf32, #tpu.memory_space<smem>>
    %753 = vector.broadcast %752 : f32 to vector<22x38xf32>
    %754 = arith.mulf %753, %749 : vector<22x38xf32>
    %755 = arith.addf %727, %754 : vector<22x38xf32>
    %c57_296 = arith.constant 57 : index
    %756 = memref.load %arg4[%c57_296] : memref<84xf32, #tpu.memory_space<smem>>
    %757 = vector.broadcast %756 : f32 to vector<16x44xf32>
    %758 = arith.mulf %757, %751 : vector<16x44xf32>
    %759 = arith.addf %731, %758 : vector<16x44xf32>
    %c58 = arith.constant 58 : index
    %760 = memref.load %arg2[%c58] : memref<84xf32, #tpu.memory_space<smem>>
    %761 = vector.broadcast %760 : f32 to vector<22x38xf32>
    %762 = arith.mulf %761, %749 : vector<22x38xf32>
    %763 = arith.addf %735, %762 : vector<22x38xf32>
    %c58_297 = arith.constant 58 : index
    %764 = memref.load %arg4[%c58_297] : memref<84xf32, #tpu.memory_space<smem>>
    %765 = vector.broadcast %764 : f32 to vector<16x44xf32>
    %766 = arith.mulf %765, %751 : vector<16x44xf32>
    %767 = arith.addf %739, %766 : vector<16x44xf32>
    %c59 = arith.constant 59 : index
    %768 = memref.load %arg2[%c59] : memref<84xf32, #tpu.memory_space<smem>>
    %769 = vector.broadcast %768 : f32 to vector<22x38xf32>
    %770 = arith.mulf %769, %749 : vector<22x38xf32>
    %771 = arith.addf %743, %770 : vector<22x38xf32>
    %c59_298 = arith.constant 59 : index
    %772 = memref.load %arg4[%c59_298] : memref<84xf32, #tpu.memory_space<smem>>
    %773 = vector.broadcast %772 : f32 to vector<16x44xf32>
    %774 = arith.mulf %773, %751 : vector<16x44xf32>
    %775 = arith.addf %747, %774 : vector<16x44xf32>
    %c3_299 = arith.constant 3 : index
    %c0_300 = arith.constant 0 : index
    %c5_301 = arith.constant 5 : index
    %776 = vector.load %arg7[%c3_299, %c0_300, %c5_301] : memref<4x22x44xf32, #tpu.memory_space<vmem>>, vector<1x22x38xf32>
    %777 = vector.shape_cast %776 : vector<1x22x38xf32> to vector<22x38xf32>
    %c3_302 = arith.constant 3 : index
    %c5_303 = arith.constant 5 : index
    %c0_304 = arith.constant 0 : index
    %778 = vector.load %arg7[%c3_302, %c5_303, %c0_304] : memref<4x22x44xf32, #tpu.memory_space<vmem>>, vector<1x16x44xf32>
    %779 = vector.shape_cast %778 : vector<1x16x44xf32> to vector<16x44xf32>
    %c69 = arith.constant 69 : index
    %780 = memref.load %arg2[%c69] : memref<84xf32, #tpu.memory_space<smem>>
    %781 = vector.broadcast %780 : f32 to vector<22x38xf32>
    %782 = arith.mulf %781, %777 : vector<22x38xf32>
    %783 = arith.addf %755, %782 : vector<22x38xf32>
    %c69_305 = arith.constant 69 : index
    %784 = memref.load %arg4[%c69_305] : memref<84xf32, #tpu.memory_space<smem>>
    %785 = vector.broadcast %784 : f32 to vector<16x44xf32>
    %786 = arith.mulf %785, %779 : vector<16x44xf32>
    %787 = arith.addf %759, %786 : vector<16x44xf32>
    %c70 = arith.constant 70 : index
    %788 = memref.load %arg2[%c70] : memref<84xf32, #tpu.memory_space<smem>>
    %789 = vector.broadcast %788 : f32 to vector<22x38xf32>
    %790 = arith.mulf %789, %777 : vector<22x38xf32>
    %791 = arith.addf %763, %790 : vector<22x38xf32>
    %c70_306 = arith.constant 70 : index
    %792 = memref.load %arg4[%c70_306] : memref<84xf32, #tpu.memory_space<smem>>
    %793 = vector.broadcast %792 : f32 to vector<16x44xf32>
    %794 = arith.mulf %793, %779 : vector<16x44xf32>
    %795 = arith.addf %767, %794 : vector<16x44xf32>
    %c71 = arith.constant 71 : index
    %796 = memref.load %arg2[%c71] : memref<84xf32, #tpu.memory_space<smem>>
    %797 = vector.broadcast %796 : f32 to vector<22x38xf32>
    %798 = arith.mulf %797, %777 : vector<22x38xf32>
    %799 = arith.addf %771, %798 : vector<22x38xf32>
    %c71_307 = arith.constant 71 : index
    %800 = memref.load %arg4[%c71_307] : memref<84xf32, #tpu.memory_space<smem>>
    %801 = vector.broadcast %800 : f32 to vector<16x44xf32>
    %802 = arith.mulf %801, %779 : vector<16x44xf32>
    %803 = arith.addf %775, %802 : vector<16x44xf32>
    %c3_308 = arith.constant 3 : index
    %c0_309 = arith.constant 0 : index
    %c6_310 = arith.constant 6 : index
    %804 = vector.load %arg7[%c3_308, %c0_309, %c6_310] : memref<4x22x44xf32, #tpu.memory_space<vmem>>, vector<1x22x38xf32>
    %805 = vector.shape_cast %804 : vector<1x22x38xf32> to vector<22x38xf32>
    %c3_311 = arith.constant 3 : index
    %c6_312 = arith.constant 6 : index
    %c0_313 = arith.constant 0 : index
    %806 = vector.load %arg7[%c3_311, %c6_312, %c0_313] : memref<4x22x44xf32, #tpu.memory_space<vmem>>, vector<1x16x44xf32>
    %807 = vector.shape_cast %806 : vector<1x16x44xf32> to vector<16x44xf32>
    %c81 = arith.constant 81 : index
    %808 = memref.load %arg2[%c81] : memref<84xf32, #tpu.memory_space<smem>>
    %809 = vector.broadcast %808 : f32 to vector<22x38xf32>
    %810 = arith.mulf %809, %805 : vector<22x38xf32>
    %811 = arith.addf %783, %810 : vector<22x38xf32>
    %c81_314 = arith.constant 81 : index
    %812 = memref.load %arg4[%c81_314] : memref<84xf32, #tpu.memory_space<smem>>
    %813 = vector.broadcast %812 : f32 to vector<16x44xf32>
    %814 = arith.mulf %813, %807 : vector<16x44xf32>
    %815 = arith.addf %787, %814 : vector<16x44xf32>
    %c82 = arith.constant 82 : index
    %816 = memref.load %arg2[%c82] : memref<84xf32, #tpu.memory_space<smem>>
    %817 = vector.broadcast %816 : f32 to vector<22x38xf32>
    %818 = arith.mulf %817, %805 : vector<22x38xf32>
    %819 = arith.addf %791, %818 : vector<22x38xf32>
    %c82_315 = arith.constant 82 : index
    %820 = memref.load %arg4[%c82_315] : memref<84xf32, #tpu.memory_space<smem>>
    %821 = vector.broadcast %820 : f32 to vector<16x44xf32>
    %822 = arith.mulf %821, %807 : vector<16x44xf32>
    %823 = arith.addf %795, %822 : vector<16x44xf32>
    %c83 = arith.constant 83 : index
    %824 = memref.load %arg2[%c83] : memref<84xf32, #tpu.memory_space<smem>>
    %825 = vector.broadcast %824 : f32 to vector<22x38xf32>
    %826 = arith.mulf %825, %805 : vector<22x38xf32>
    %827 = arith.addf %799, %826 : vector<22x38xf32>
    %c83_316 = arith.constant 83 : index
    %828 = memref.load %arg4[%c83_316] : memref<84xf32, #tpu.memory_space<smem>>
    %829 = vector.broadcast %828 : f32 to vector<16x44xf32>
    %830 = arith.mulf %829, %807 : vector<16x44xf32>
    %831 = arith.addf %803, %830 : vector<16x44xf32>
    %cst_317 = arith.constant 0.000000e+00 : f32
    %832 = vector.broadcast %cst_317 : f32 to vector<16x38xf32>
    %cst_318 = arith.constant 0.000000e+00 : f32
    %833 = vector.broadcast %cst_318 : f32 to vector<16x38xf32>
    %cst_319 = arith.constant 0.000000e+00 : f32
    %834 = vector.broadcast %cst_319 : f32 to vector<16x38xf32>
    %835 = vector.extract_strided_slice %811 {offsets = [0, 0], sizes = [16, 38], strides = [1, 1]} : vector<22x38xf32> to vector<16x38xf32>
    %836 = vector.extract_strided_slice %815 {offsets = [0, 0], sizes = [16, 38], strides = [1, 1]} : vector<16x44xf32> to vector<16x38xf32>
    %c0_320 = arith.constant 0 : index
    %837 = memref.load %arg3[%c0_320] : memref<63xf32, #tpu.memory_space<smem>>
    %838 = vector.broadcast %837 : f32 to vector<16x38xf32>
    %839 = arith.mulf %838, %835 : vector<16x38xf32>
    %840 = arith.addf %832, %839 : vector<16x38xf32>
    %c0_321 = arith.constant 0 : index
    %841 = memref.load %arg5[%c0_321] : memref<63xf32, #tpu.memory_space<smem>>
    %842 = vector.broadcast %841 : f32 to vector<16x38xf32>
    %843 = arith.mulf %842, %836 : vector<16x38xf32>
    %844 = arith.addf %840, %843 : vector<16x38xf32>
    %c1_322 = arith.constant 1 : index
    %845 = memref.load %arg3[%c1_322] : memref<63xf32, #tpu.memory_space<smem>>
    %846 = vector.broadcast %845 : f32 to vector<16x38xf32>
    %847 = arith.mulf %846, %835 : vector<16x38xf32>
    %848 = arith.addf %833, %847 : vector<16x38xf32>
    %c1_323 = arith.constant 1 : index
    %849 = memref.load %arg5[%c1_323] : memref<63xf32, #tpu.memory_space<smem>>
    %850 = vector.broadcast %849 : f32 to vector<16x38xf32>
    %851 = arith.mulf %850, %836 : vector<16x38xf32>
    %852 = arith.addf %848, %851 : vector<16x38xf32>
    %c2_324 = arith.constant 2 : index
    %853 = memref.load %arg3[%c2_324] : memref<63xf32, #tpu.memory_space<smem>>
    %854 = vector.broadcast %853 : f32 to vector<16x38xf32>
    %855 = arith.mulf %854, %835 : vector<16x38xf32>
    %856 = arith.addf %834, %855 : vector<16x38xf32>
    %c2_325 = arith.constant 2 : index
    %857 = memref.load %arg5[%c2_325] : memref<63xf32, #tpu.memory_space<smem>>
    %858 = vector.broadcast %857 : f32 to vector<16x38xf32>
    %859 = arith.mulf %858, %836 : vector<16x38xf32>
    %860 = arith.addf %856, %859 : vector<16x38xf32>
    %861 = vector.extract_strided_slice %811 {offsets = [1, 0], sizes = [16, 38], strides = [1, 1]} : vector<22x38xf32> to vector<16x38xf32>
    %862 = vector.extract_strided_slice %815 {offsets = [0, 1], sizes = [16, 38], strides = [1, 1]} : vector<16x44xf32> to vector<16x38xf32>
    %c9_326 = arith.constant 9 : index
    %863 = memref.load %arg3[%c9_326] : memref<63xf32, #tpu.memory_space<smem>>
    %864 = vector.broadcast %863 : f32 to vector<16x38xf32>
    %865 = arith.mulf %864, %861 : vector<16x38xf32>
    %866 = arith.addf %844, %865 : vector<16x38xf32>
    %c9_327 = arith.constant 9 : index
    %867 = memref.load %arg5[%c9_327] : memref<63xf32, #tpu.memory_space<smem>>
    %868 = vector.broadcast %867 : f32 to vector<16x38xf32>
    %869 = arith.mulf %868, %862 : vector<16x38xf32>
    %870 = arith.addf %866, %869 : vector<16x38xf32>
    %c10_328 = arith.constant 10 : index
    %871 = memref.load %arg3[%c10_328] : memref<63xf32, #tpu.memory_space<smem>>
    %872 = vector.broadcast %871 : f32 to vector<16x38xf32>
    %873 = arith.mulf %872, %861 : vector<16x38xf32>
    %874 = arith.addf %852, %873 : vector<16x38xf32>
    %c10_329 = arith.constant 10 : index
    %875 = memref.load %arg5[%c10_329] : memref<63xf32, #tpu.memory_space<smem>>
    %876 = vector.broadcast %875 : f32 to vector<16x38xf32>
    %877 = arith.mulf %876, %862 : vector<16x38xf32>
    %878 = arith.addf %874, %877 : vector<16x38xf32>
    %c11_330 = arith.constant 11 : index
    %879 = memref.load %arg3[%c11_330] : memref<63xf32, #tpu.memory_space<smem>>
    %880 = vector.broadcast %879 : f32 to vector<16x38xf32>
    %881 = arith.mulf %880, %861 : vector<16x38xf32>
    %882 = arith.addf %860, %881 : vector<16x38xf32>
    %c11_331 = arith.constant 11 : index
    %883 = memref.load %arg5[%c11_331] : memref<63xf32, #tpu.memory_space<smem>>
    %884 = vector.broadcast %883 : f32 to vector<16x38xf32>
    %885 = arith.mulf %884, %862 : vector<16x38xf32>
    %886 = arith.addf %882, %885 : vector<16x38xf32>
    %887 = vector.extract_strided_slice %811 {offsets = [2, 0], sizes = [16, 38], strides = [1, 1]} : vector<22x38xf32> to vector<16x38xf32>
    %888 = vector.extract_strided_slice %815 {offsets = [0, 2], sizes = [16, 38], strides = [1, 1]} : vector<16x44xf32> to vector<16x38xf32>
    %c18_332 = arith.constant 18 : index
    %889 = memref.load %arg3[%c18_332] : memref<63xf32, #tpu.memory_space<smem>>
    %890 = vector.broadcast %889 : f32 to vector<16x38xf32>
    %891 = arith.mulf %890, %887 : vector<16x38xf32>
    %892 = arith.addf %870, %891 : vector<16x38xf32>
    %c18_333 = arith.constant 18 : index
    %893 = memref.load %arg5[%c18_333] : memref<63xf32, #tpu.memory_space<smem>>
    %894 = vector.broadcast %893 : f32 to vector<16x38xf32>
    %895 = arith.mulf %894, %888 : vector<16x38xf32>
    %896 = arith.addf %892, %895 : vector<16x38xf32>
    %c19_334 = arith.constant 19 : index
    %897 = memref.load %arg3[%c19_334] : memref<63xf32, #tpu.memory_space<smem>>
    %898 = vector.broadcast %897 : f32 to vector<16x38xf32>
    %899 = arith.mulf %898, %887 : vector<16x38xf32>
    %900 = arith.addf %878, %899 : vector<16x38xf32>
    %c19_335 = arith.constant 19 : index
    %901 = memref.load %arg5[%c19_335] : memref<63xf32, #tpu.memory_space<smem>>
    %902 = vector.broadcast %901 : f32 to vector<16x38xf32>
    %903 = arith.mulf %902, %888 : vector<16x38xf32>
    %904 = arith.addf %900, %903 : vector<16x38xf32>
    %c20_336 = arith.constant 20 : index
    %905 = memref.load %arg3[%c20_336] : memref<63xf32, #tpu.memory_space<smem>>
    %906 = vector.broadcast %905 : f32 to vector<16x38xf32>
    %907 = arith.mulf %906, %887 : vector<16x38xf32>
    %908 = arith.addf %886, %907 : vector<16x38xf32>
    %c20_337 = arith.constant 20 : index
    %909 = memref.load %arg5[%c20_337] : memref<63xf32, #tpu.memory_space<smem>>
    %910 = vector.broadcast %909 : f32 to vector<16x38xf32>
    %911 = arith.mulf %910, %888 : vector<16x38xf32>
    %912 = arith.addf %908, %911 : vector<16x38xf32>
    %913 = vector.extract_strided_slice %811 {offsets = [3, 0], sizes = [16, 38], strides = [1, 1]} : vector<22x38xf32> to vector<16x38xf32>
    %914 = vector.extract_strided_slice %815 {offsets = [0, 3], sizes = [16, 38], strides = [1, 1]} : vector<16x44xf32> to vector<16x38xf32>
    %c27_338 = arith.constant 27 : index
    %915 = memref.load %arg3[%c27_338] : memref<63xf32, #tpu.memory_space<smem>>
    %916 = vector.broadcast %915 : f32 to vector<16x38xf32>
    %917 = arith.mulf %916, %913 : vector<16x38xf32>
    %918 = arith.addf %896, %917 : vector<16x38xf32>
    %c27_339 = arith.constant 27 : index
    %919 = memref.load %arg5[%c27_339] : memref<63xf32, #tpu.memory_space<smem>>
    %920 = vector.broadcast %919 : f32 to vector<16x38xf32>
    %921 = arith.mulf %920, %914 : vector<16x38xf32>
    %922 = arith.addf %918, %921 : vector<16x38xf32>
    %c28_340 = arith.constant 28 : index
    %923 = memref.load %arg3[%c28_340] : memref<63xf32, #tpu.memory_space<smem>>
    %924 = vector.broadcast %923 : f32 to vector<16x38xf32>
    %925 = arith.mulf %924, %913 : vector<16x38xf32>
    %926 = arith.addf %904, %925 : vector<16x38xf32>
    %c28_341 = arith.constant 28 : index
    %927 = memref.load %arg5[%c28_341] : memref<63xf32, #tpu.memory_space<smem>>
    %928 = vector.broadcast %927 : f32 to vector<16x38xf32>
    %929 = arith.mulf %928, %914 : vector<16x38xf32>
    %930 = arith.addf %926, %929 : vector<16x38xf32>
    %c29_342 = arith.constant 29 : index
    %931 = memref.load %arg3[%c29_342] : memref<63xf32, #tpu.memory_space<smem>>
    %932 = vector.broadcast %931 : f32 to vector<16x38xf32>
    %933 = arith.mulf %932, %913 : vector<16x38xf32>
    %934 = arith.addf %912, %933 : vector<16x38xf32>
    %c29_343 = arith.constant 29 : index
    %935 = memref.load %arg5[%c29_343] : memref<63xf32, #tpu.memory_space<smem>>
    %936 = vector.broadcast %935 : f32 to vector<16x38xf32>
    %937 = arith.mulf %936, %914 : vector<16x38xf32>
    %938 = arith.addf %934, %937 : vector<16x38xf32>
    %939 = vector.extract_strided_slice %811 {offsets = [4, 0], sizes = [16, 38], strides = [1, 1]} : vector<22x38xf32> to vector<16x38xf32>
    %940 = vector.extract_strided_slice %815 {offsets = [0, 4], sizes = [16, 38], strides = [1, 1]} : vector<16x44xf32> to vector<16x38xf32>
    %c36_344 = arith.constant 36 : index
    %941 = memref.load %arg3[%c36_344] : memref<63xf32, #tpu.memory_space<smem>>
    %942 = vector.broadcast %941 : f32 to vector<16x38xf32>
    %943 = arith.mulf %942, %939 : vector<16x38xf32>
    %944 = arith.addf %922, %943 : vector<16x38xf32>
    %c36_345 = arith.constant 36 : index
    %945 = memref.load %arg5[%c36_345] : memref<63xf32, #tpu.memory_space<smem>>
    %946 = vector.broadcast %945 : f32 to vector<16x38xf32>
    %947 = arith.mulf %946, %940 : vector<16x38xf32>
    %948 = arith.addf %944, %947 : vector<16x38xf32>
    %c37_346 = arith.constant 37 : index
    %949 = memref.load %arg3[%c37_346] : memref<63xf32, #tpu.memory_space<smem>>
    %950 = vector.broadcast %949 : f32 to vector<16x38xf32>
    %951 = arith.mulf %950, %939 : vector<16x38xf32>
    %952 = arith.addf %930, %951 : vector<16x38xf32>
    %c37_347 = arith.constant 37 : index
    %953 = memref.load %arg5[%c37_347] : memref<63xf32, #tpu.memory_space<smem>>
    %954 = vector.broadcast %953 : f32 to vector<16x38xf32>
    %955 = arith.mulf %954, %940 : vector<16x38xf32>
    %956 = arith.addf %952, %955 : vector<16x38xf32>
    %c38_348 = arith.constant 38 : index
    %957 = memref.load %arg3[%c38_348] : memref<63xf32, #tpu.memory_space<smem>>
    %958 = vector.broadcast %957 : f32 to vector<16x38xf32>
    %959 = arith.mulf %958, %939 : vector<16x38xf32>
    %960 = arith.addf %938, %959 : vector<16x38xf32>
    %c38_349 = arith.constant 38 : index
    %961 = memref.load %arg5[%c38_349] : memref<63xf32, #tpu.memory_space<smem>>
    %962 = vector.broadcast %961 : f32 to vector<16x38xf32>
    %963 = arith.mulf %962, %940 : vector<16x38xf32>
    %964 = arith.addf %960, %963 : vector<16x38xf32>
    %965 = vector.extract_strided_slice %811 {offsets = [5, 0], sizes = [16, 38], strides = [1, 1]} : vector<22x38xf32> to vector<16x38xf32>
    %966 = vector.extract_strided_slice %815 {offsets = [0, 5], sizes = [16, 38], strides = [1, 1]} : vector<16x44xf32> to vector<16x38xf32>
    %c45_350 = arith.constant 45 : index
    %967 = memref.load %arg3[%c45_350] : memref<63xf32, #tpu.memory_space<smem>>
    %968 = vector.broadcast %967 : f32 to vector<16x38xf32>
    %969 = arith.mulf %968, %965 : vector<16x38xf32>
    %970 = arith.addf %948, %969 : vector<16x38xf32>
    %c45_351 = arith.constant 45 : index
    %971 = memref.load %arg5[%c45_351] : memref<63xf32, #tpu.memory_space<smem>>
    %972 = vector.broadcast %971 : f32 to vector<16x38xf32>
    %973 = arith.mulf %972, %966 : vector<16x38xf32>
    %974 = arith.addf %970, %973 : vector<16x38xf32>
    %c46_352 = arith.constant 46 : index
    %975 = memref.load %arg3[%c46_352] : memref<63xf32, #tpu.memory_space<smem>>
    %976 = vector.broadcast %975 : f32 to vector<16x38xf32>
    %977 = arith.mulf %976, %965 : vector<16x38xf32>
    %978 = arith.addf %956, %977 : vector<16x38xf32>
    %c46_353 = arith.constant 46 : index
    %979 = memref.load %arg5[%c46_353] : memref<63xf32, #tpu.memory_space<smem>>
    %980 = vector.broadcast %979 : f32 to vector<16x38xf32>
    %981 = arith.mulf %980, %966 : vector<16x38xf32>
    %982 = arith.addf %978, %981 : vector<16x38xf32>
    %c47_354 = arith.constant 47 : index
    %983 = memref.load %arg3[%c47_354] : memref<63xf32, #tpu.memory_space<smem>>
    %984 = vector.broadcast %983 : f32 to vector<16x38xf32>
    %985 = arith.mulf %984, %965 : vector<16x38xf32>
    %986 = arith.addf %964, %985 : vector<16x38xf32>
    %c47_355 = arith.constant 47 : index
    %987 = memref.load %arg5[%c47_355] : memref<63xf32, #tpu.memory_space<smem>>
    %988 = vector.broadcast %987 : f32 to vector<16x38xf32>
    %989 = arith.mulf %988, %966 : vector<16x38xf32>
    %990 = arith.addf %986, %989 : vector<16x38xf32>
    %991 = vector.extract_strided_slice %811 {offsets = [6, 0], sizes = [16, 38], strides = [1, 1]} : vector<22x38xf32> to vector<16x38xf32>
    %992 = vector.extract_strided_slice %815 {offsets = [0, 6], sizes = [16, 38], strides = [1, 1]} : vector<16x44xf32> to vector<16x38xf32>
    %c54_356 = arith.constant 54 : index
    %993 = memref.load %arg3[%c54_356] : memref<63xf32, #tpu.memory_space<smem>>
    %994 = vector.broadcast %993 : f32 to vector<16x38xf32>
    %995 = arith.mulf %994, %991 : vector<16x38xf32>
    %996 = arith.addf %974, %995 : vector<16x38xf32>
    %c54_357 = arith.constant 54 : index
    %997 = memref.load %arg5[%c54_357] : memref<63xf32, #tpu.memory_space<smem>>
    %998 = vector.broadcast %997 : f32 to vector<16x38xf32>
    %999 = arith.mulf %998, %992 : vector<16x38xf32>
    %1000 = arith.addf %996, %999 : vector<16x38xf32>
    %c55_358 = arith.constant 55 : index
    %1001 = memref.load %arg3[%c55_358] : memref<63xf32, #tpu.memory_space<smem>>
    %1002 = vector.broadcast %1001 : f32 to vector<16x38xf32>
    %1003 = arith.mulf %1002, %991 : vector<16x38xf32>
    %1004 = arith.addf %982, %1003 : vector<16x38xf32>
    %c55_359 = arith.constant 55 : index
    %1005 = memref.load %arg5[%c55_359] : memref<63xf32, #tpu.memory_space<smem>>
    %1006 = vector.broadcast %1005 : f32 to vector<16x38xf32>
    %1007 = arith.mulf %1006, %992 : vector<16x38xf32>
    %1008 = arith.addf %1004, %1007 : vector<16x38xf32>
    %c56_360 = arith.constant 56 : index
    %1009 = memref.load %arg3[%c56_360] : memref<63xf32, #tpu.memory_space<smem>>
    %1010 = vector.broadcast %1009 : f32 to vector<16x38xf32>
    %1011 = arith.mulf %1010, %991 : vector<16x38xf32>
    %1012 = arith.addf %990, %1011 : vector<16x38xf32>
    %c56_361 = arith.constant 56 : index
    %1013 = memref.load %arg5[%c56_361] : memref<63xf32, #tpu.memory_space<smem>>
    %1014 = vector.broadcast %1013 : f32 to vector<16x38xf32>
    %1015 = arith.mulf %1014, %992 : vector<16x38xf32>
    %1016 = arith.addf %1012, %1015 : vector<16x38xf32>
    %1017 = vector.extract_strided_slice %819 {offsets = [0, 0], sizes = [16, 38], strides = [1, 1]} : vector<22x38xf32> to vector<16x38xf32>
    %1018 = vector.extract_strided_slice %823 {offsets = [0, 0], sizes = [16, 38], strides = [1, 1]} : vector<16x44xf32> to vector<16x38xf32>
    %c3_362 = arith.constant 3 : index
    %1019 = memref.load %arg3[%c3_362] : memref<63xf32, #tpu.memory_space<smem>>
    %1020 = vector.broadcast %1019 : f32 to vector<16x38xf32>
    %1021 = arith.mulf %1020, %1017 : vector<16x38xf32>
    %1022 = arith.addf %1000, %1021 : vector<16x38xf32>
    %c3_363 = arith.constant 3 : index
    %1023 = memref.load %arg5[%c3_363] : memref<63xf32, #tpu.memory_space<smem>>
    %1024 = vector.broadcast %1023 : f32 to vector<16x38xf32>
    %1025 = arith.mulf %1024, %1018 : vector<16x38xf32>
    %1026 = arith.addf %1022, %1025 : vector<16x38xf32>
    %c4_364 = arith.constant 4 : index
    %1027 = memref.load %arg3[%c4_364] : memref<63xf32, #tpu.memory_space<smem>>
    %1028 = vector.broadcast %1027 : f32 to vector<16x38xf32>
    %1029 = arith.mulf %1028, %1017 : vector<16x38xf32>
    %1030 = arith.addf %1008, %1029 : vector<16x38xf32>
    %c4_365 = arith.constant 4 : index
    %1031 = memref.load %arg5[%c4_365] : memref<63xf32, #tpu.memory_space<smem>>
    %1032 = vector.broadcast %1031 : f32 to vector<16x38xf32>
    %1033 = arith.mulf %1032, %1018 : vector<16x38xf32>
    %1034 = arith.addf %1030, %1033 : vector<16x38xf32>
    %c5_366 = arith.constant 5 : index
    %1035 = memref.load %arg3[%c5_366] : memref<63xf32, #tpu.memory_space<smem>>
    %1036 = vector.broadcast %1035 : f32 to vector<16x38xf32>
    %1037 = arith.mulf %1036, %1017 : vector<16x38xf32>
    %1038 = arith.addf %1016, %1037 : vector<16x38xf32>
    %c5_367 = arith.constant 5 : index
    %1039 = memref.load %arg5[%c5_367] : memref<63xf32, #tpu.memory_space<smem>>
    %1040 = vector.broadcast %1039 : f32 to vector<16x38xf32>
    %1041 = arith.mulf %1040, %1018 : vector<16x38xf32>
    %1042 = arith.addf %1038, %1041 : vector<16x38xf32>
    %1043 = vector.extract_strided_slice %819 {offsets = [1, 0], sizes = [16, 38], strides = [1, 1]} : vector<22x38xf32> to vector<16x38xf32>
    %1044 = vector.extract_strided_slice %823 {offsets = [0, 1], sizes = [16, 38], strides = [1, 1]} : vector<16x44xf32> to vector<16x38xf32>
    %c12_368 = arith.constant 12 : index
    %1045 = memref.load %arg3[%c12_368] : memref<63xf32, #tpu.memory_space<smem>>
    %1046 = vector.broadcast %1045 : f32 to vector<16x38xf32>
    %1047 = arith.mulf %1046, %1043 : vector<16x38xf32>
    %1048 = arith.addf %1026, %1047 : vector<16x38xf32>
    %c12_369 = arith.constant 12 : index
    %1049 = memref.load %arg5[%c12_369] : memref<63xf32, #tpu.memory_space<smem>>
    %1050 = vector.broadcast %1049 : f32 to vector<16x38xf32>
    %1051 = arith.mulf %1050, %1044 : vector<16x38xf32>
    %1052 = arith.addf %1048, %1051 : vector<16x38xf32>
    %c13_370 = arith.constant 13 : index
    %1053 = memref.load %arg3[%c13_370] : memref<63xf32, #tpu.memory_space<smem>>
    %1054 = vector.broadcast %1053 : f32 to vector<16x38xf32>
    %1055 = arith.mulf %1054, %1043 : vector<16x38xf32>
    %1056 = arith.addf %1034, %1055 : vector<16x38xf32>
    %c13_371 = arith.constant 13 : index
    %1057 = memref.load %arg5[%c13_371] : memref<63xf32, #tpu.memory_space<smem>>
    %1058 = vector.broadcast %1057 : f32 to vector<16x38xf32>
    %1059 = arith.mulf %1058, %1044 : vector<16x38xf32>
    %1060 = arith.addf %1056, %1059 : vector<16x38xf32>
    %c14_372 = arith.constant 14 : index
    %1061 = memref.load %arg3[%c14_372] : memref<63xf32, #tpu.memory_space<smem>>
    %1062 = vector.broadcast %1061 : f32 to vector<16x38xf32>
    %1063 = arith.mulf %1062, %1043 : vector<16x38xf32>
    %1064 = arith.addf %1042, %1063 : vector<16x38xf32>
    %c14_373 = arith.constant 14 : index
    %1065 = memref.load %arg5[%c14_373] : memref<63xf32, #tpu.memory_space<smem>>
    %1066 = vector.broadcast %1065 : f32 to vector<16x38xf32>
    %1067 = arith.mulf %1066, %1044 : vector<16x38xf32>
    %1068 = arith.addf %1064, %1067 : vector<16x38xf32>
    %1069 = vector.extract_strided_slice %819 {offsets = [2, 0], sizes = [16, 38], strides = [1, 1]} : vector<22x38xf32> to vector<16x38xf32>
    %1070 = vector.extract_strided_slice %823 {offsets = [0, 2], sizes = [16, 38], strides = [1, 1]} : vector<16x44xf32> to vector<16x38xf32>
    %c21_374 = arith.constant 21 : index
    %1071 = memref.load %arg3[%c21_374] : memref<63xf32, #tpu.memory_space<smem>>
    %1072 = vector.broadcast %1071 : f32 to vector<16x38xf32>
    %1073 = arith.mulf %1072, %1069 : vector<16x38xf32>
    %1074 = arith.addf %1052, %1073 : vector<16x38xf32>
    %c21_375 = arith.constant 21 : index
    %1075 = memref.load %arg5[%c21_375] : memref<63xf32, #tpu.memory_space<smem>>
    %1076 = vector.broadcast %1075 : f32 to vector<16x38xf32>
    %1077 = arith.mulf %1076, %1070 : vector<16x38xf32>
    %1078 = arith.addf %1074, %1077 : vector<16x38xf32>
    %c22_376 = arith.constant 22 : index
    %1079 = memref.load %arg3[%c22_376] : memref<63xf32, #tpu.memory_space<smem>>
    %1080 = vector.broadcast %1079 : f32 to vector<16x38xf32>
    %1081 = arith.mulf %1080, %1069 : vector<16x38xf32>
    %1082 = arith.addf %1060, %1081 : vector<16x38xf32>
    %c22_377 = arith.constant 22 : index
    %1083 = memref.load %arg5[%c22_377] : memref<63xf32, #tpu.memory_space<smem>>
    %1084 = vector.broadcast %1083 : f32 to vector<16x38xf32>
    %1085 = arith.mulf %1084, %1070 : vector<16x38xf32>
    %1086 = arith.addf %1082, %1085 : vector<16x38xf32>
    %c23_378 = arith.constant 23 : index
    %1087 = memref.load %arg3[%c23_378] : memref<63xf32, #tpu.memory_space<smem>>
    %1088 = vector.broadcast %1087 : f32 to vector<16x38xf32>
    %1089 = arith.mulf %1088, %1069 : vector<16x38xf32>
    %1090 = arith.addf %1068, %1089 : vector<16x38xf32>
    %c23_379 = arith.constant 23 : index
    %1091 = memref.load %arg5[%c23_379] : memref<63xf32, #tpu.memory_space<smem>>
    %1092 = vector.broadcast %1091 : f32 to vector<16x38xf32>
    %1093 = arith.mulf %1092, %1070 : vector<16x38xf32>
    %1094 = arith.addf %1090, %1093 : vector<16x38xf32>
    %1095 = vector.extract_strided_slice %819 {offsets = [3, 0], sizes = [16, 38], strides = [1, 1]} : vector<22x38xf32> to vector<16x38xf32>
    %1096 = vector.extract_strided_slice %823 {offsets = [0, 3], sizes = [16, 38], strides = [1, 1]} : vector<16x44xf32> to vector<16x38xf32>
    %c30_380 = arith.constant 30 : index
    %1097 = memref.load %arg3[%c30_380] : memref<63xf32, #tpu.memory_space<smem>>
    %1098 = vector.broadcast %1097 : f32 to vector<16x38xf32>
    %1099 = arith.mulf %1098, %1095 : vector<16x38xf32>
    %1100 = arith.addf %1078, %1099 : vector<16x38xf32>
    %c30_381 = arith.constant 30 : index
    %1101 = memref.load %arg5[%c30_381] : memref<63xf32, #tpu.memory_space<smem>>
    %1102 = vector.broadcast %1101 : f32 to vector<16x38xf32>
    %1103 = arith.mulf %1102, %1096 : vector<16x38xf32>
    %1104 = arith.addf %1100, %1103 : vector<16x38xf32>
    %c31_382 = arith.constant 31 : index
    %1105 = memref.load %arg3[%c31_382] : memref<63xf32, #tpu.memory_space<smem>>
    %1106 = vector.broadcast %1105 : f32 to vector<16x38xf32>
    %1107 = arith.mulf %1106, %1095 : vector<16x38xf32>
    %1108 = arith.addf %1086, %1107 : vector<16x38xf32>
    %c31_383 = arith.constant 31 : index
    %1109 = memref.load %arg5[%c31_383] : memref<63xf32, #tpu.memory_space<smem>>
    %1110 = vector.broadcast %1109 : f32 to vector<16x38xf32>
    %1111 = arith.mulf %1110, %1096 : vector<16x38xf32>
    %1112 = arith.addf %1108, %1111 : vector<16x38xf32>
    %c32_384 = arith.constant 32 : index
    %1113 = memref.load %arg3[%c32_384] : memref<63xf32, #tpu.memory_space<smem>>
    %1114 = vector.broadcast %1113 : f32 to vector<16x38xf32>
    %1115 = arith.mulf %1114, %1095 : vector<16x38xf32>
    %1116 = arith.addf %1094, %1115 : vector<16x38xf32>
    %c32_385 = arith.constant 32 : index
    %1117 = memref.load %arg5[%c32_385] : memref<63xf32, #tpu.memory_space<smem>>
    %1118 = vector.broadcast %1117 : f32 to vector<16x38xf32>
    %1119 = arith.mulf %1118, %1096 : vector<16x38xf32>
    %1120 = arith.addf %1116, %1119 : vector<16x38xf32>
    %1121 = vector.extract_strided_slice %819 {offsets = [4, 0], sizes = [16, 38], strides = [1, 1]} : vector<22x38xf32> to vector<16x38xf32>
    %1122 = vector.extract_strided_slice %823 {offsets = [0, 4], sizes = [16, 38], strides = [1, 1]} : vector<16x44xf32> to vector<16x38xf32>
    %c39_386 = arith.constant 39 : index
    %1123 = memref.load %arg3[%c39_386] : memref<63xf32, #tpu.memory_space<smem>>
    %1124 = vector.broadcast %1123 : f32 to vector<16x38xf32>
    %1125 = arith.mulf %1124, %1121 : vector<16x38xf32>
    %1126 = arith.addf %1104, %1125 : vector<16x38xf32>
    %c39_387 = arith.constant 39 : index
    %1127 = memref.load %arg5[%c39_387] : memref<63xf32, #tpu.memory_space<smem>>
    %1128 = vector.broadcast %1127 : f32 to vector<16x38xf32>
    %1129 = arith.mulf %1128, %1122 : vector<16x38xf32>
    %1130 = arith.addf %1126, %1129 : vector<16x38xf32>
    %c40_388 = arith.constant 40 : index
    %1131 = memref.load %arg3[%c40_388] : memref<63xf32, #tpu.memory_space<smem>>
    %1132 = vector.broadcast %1131 : f32 to vector<16x38xf32>
    %1133 = arith.mulf %1132, %1121 : vector<16x38xf32>
    %1134 = arith.addf %1112, %1133 : vector<16x38xf32>
    %c40_389 = arith.constant 40 : index
    %1135 = memref.load %arg5[%c40_389] : memref<63xf32, #tpu.memory_space<smem>>
    %1136 = vector.broadcast %1135 : f32 to vector<16x38xf32>
    %1137 = arith.mulf %1136, %1122 : vector<16x38xf32>
    %1138 = arith.addf %1134, %1137 : vector<16x38xf32>
    %c41_390 = arith.constant 41 : index
    %1139 = memref.load %arg3[%c41_390] : memref<63xf32, #tpu.memory_space<smem>>
    %1140 = vector.broadcast %1139 : f32 to vector<16x38xf32>
    %1141 = arith.mulf %1140, %1121 : vector<16x38xf32>
    %1142 = arith.addf %1120, %1141 : vector<16x38xf32>
    %c41_391 = arith.constant 41 : index
    %1143 = memref.load %arg5[%c41_391] : memref<63xf32, #tpu.memory_space<smem>>
    %1144 = vector.broadcast %1143 : f32 to vector<16x38xf32>
    %1145 = arith.mulf %1144, %1122 : vector<16x38xf32>
    %1146 = arith.addf %1142, %1145 : vector<16x38xf32>
    %1147 = vector.extract_strided_slice %819 {offsets = [5, 0], sizes = [16, 38], strides = [1, 1]} : vector<22x38xf32> to vector<16x38xf32>
    %1148 = vector.extract_strided_slice %823 {offsets = [0, 5], sizes = [16, 38], strides = [1, 1]} : vector<16x44xf32> to vector<16x38xf32>
    %c48_392 = arith.constant 48 : index
    %1149 = memref.load %arg3[%c48_392] : memref<63xf32, #tpu.memory_space<smem>>
    %1150 = vector.broadcast %1149 : f32 to vector<16x38xf32>
    %1151 = arith.mulf %1150, %1147 : vector<16x38xf32>
    %1152 = arith.addf %1130, %1151 : vector<16x38xf32>
    %c48_393 = arith.constant 48 : index
    %1153 = memref.load %arg5[%c48_393] : memref<63xf32, #tpu.memory_space<smem>>
    %1154 = vector.broadcast %1153 : f32 to vector<16x38xf32>
    %1155 = arith.mulf %1154, %1148 : vector<16x38xf32>
    %1156 = arith.addf %1152, %1155 : vector<16x38xf32>
    %c49_394 = arith.constant 49 : index
    %1157 = memref.load %arg3[%c49_394] : memref<63xf32, #tpu.memory_space<smem>>
    %1158 = vector.broadcast %1157 : f32 to vector<16x38xf32>
    %1159 = arith.mulf %1158, %1147 : vector<16x38xf32>
    %1160 = arith.addf %1138, %1159 : vector<16x38xf32>
    %c49_395 = arith.constant 49 : index
    %1161 = memref.load %arg5[%c49_395] : memref<63xf32, #tpu.memory_space<smem>>
    %1162 = vector.broadcast %1161 : f32 to vector<16x38xf32>
    %1163 = arith.mulf %1162, %1148 : vector<16x38xf32>
    %1164 = arith.addf %1160, %1163 : vector<16x38xf32>
    %c50_396 = arith.constant 50 : index
    %1165 = memref.load %arg3[%c50_396] : memref<63xf32, #tpu.memory_space<smem>>
    %1166 = vector.broadcast %1165 : f32 to vector<16x38xf32>
    %1167 = arith.mulf %1166, %1147 : vector<16x38xf32>
    %1168 = arith.addf %1146, %1167 : vector<16x38xf32>
    %c50_397 = arith.constant 50 : index
    %1169 = memref.load %arg5[%c50_397] : memref<63xf32, #tpu.memory_space<smem>>
    %1170 = vector.broadcast %1169 : f32 to vector<16x38xf32>
    %1171 = arith.mulf %1170, %1148 : vector<16x38xf32>
    %1172 = arith.addf %1168, %1171 : vector<16x38xf32>
    %1173 = vector.extract_strided_slice %819 {offsets = [6, 0], sizes = [16, 38], strides = [1, 1]} : vector<22x38xf32> to vector<16x38xf32>
    %1174 = vector.extract_strided_slice %823 {offsets = [0, 6], sizes = [16, 38], strides = [1, 1]} : vector<16x44xf32> to vector<16x38xf32>
    %c57_398 = arith.constant 57 : index
    %1175 = memref.load %arg3[%c57_398] : memref<63xf32, #tpu.memory_space<smem>>
    %1176 = vector.broadcast %1175 : f32 to vector<16x38xf32>
    %1177 = arith.mulf %1176, %1173 : vector<16x38xf32>
    %1178 = arith.addf %1156, %1177 : vector<16x38xf32>
    %c57_399 = arith.constant 57 : index
    %1179 = memref.load %arg5[%c57_399] : memref<63xf32, #tpu.memory_space<smem>>
    %1180 = vector.broadcast %1179 : f32 to vector<16x38xf32>
    %1181 = arith.mulf %1180, %1174 : vector<16x38xf32>
    %1182 = arith.addf %1178, %1181 : vector<16x38xf32>
    %c58_400 = arith.constant 58 : index
    %1183 = memref.load %arg3[%c58_400] : memref<63xf32, #tpu.memory_space<smem>>
    %1184 = vector.broadcast %1183 : f32 to vector<16x38xf32>
    %1185 = arith.mulf %1184, %1173 : vector<16x38xf32>
    %1186 = arith.addf %1164, %1185 : vector<16x38xf32>
    %c58_401 = arith.constant 58 : index
    %1187 = memref.load %arg5[%c58_401] : memref<63xf32, #tpu.memory_space<smem>>
    %1188 = vector.broadcast %1187 : f32 to vector<16x38xf32>
    %1189 = arith.mulf %1188, %1174 : vector<16x38xf32>
    %1190 = arith.addf %1186, %1189 : vector<16x38xf32>
    %c59_402 = arith.constant 59 : index
    %1191 = memref.load %arg3[%c59_402] : memref<63xf32, #tpu.memory_space<smem>>
    %1192 = vector.broadcast %1191 : f32 to vector<16x38xf32>
    %1193 = arith.mulf %1192, %1173 : vector<16x38xf32>
    %1194 = arith.addf %1172, %1193 : vector<16x38xf32>
    %c59_403 = arith.constant 59 : index
    %1195 = memref.load %arg5[%c59_403] : memref<63xf32, #tpu.memory_space<smem>>
    %1196 = vector.broadcast %1195 : f32 to vector<16x38xf32>
    %1197 = arith.mulf %1196, %1174 : vector<16x38xf32>
    %1198 = arith.addf %1194, %1197 : vector<16x38xf32>
    %1199 = vector.extract_strided_slice %827 {offsets = [0, 0], sizes = [16, 38], strides = [1, 1]} : vector<22x38xf32> to vector<16x38xf32>
    %1200 = vector.extract_strided_slice %831 {offsets = [0, 0], sizes = [16, 38], strides = [1, 1]} : vector<16x44xf32> to vector<16x38xf32>
    %c6_404 = arith.constant 6 : index
    %1201 = memref.load %arg3[%c6_404] : memref<63xf32, #tpu.memory_space<smem>>
    %1202 = vector.broadcast %1201 : f32 to vector<16x38xf32>
    %1203 = arith.mulf %1202, %1199 : vector<16x38xf32>
    %1204 = arith.addf %1182, %1203 : vector<16x38xf32>
    %c6_405 = arith.constant 6 : index
    %1205 = memref.load %arg5[%c6_405] : memref<63xf32, #tpu.memory_space<smem>>
    %1206 = vector.broadcast %1205 : f32 to vector<16x38xf32>
    %1207 = arith.mulf %1206, %1200 : vector<16x38xf32>
    %1208 = arith.addf %1204, %1207 : vector<16x38xf32>
    %c7_406 = arith.constant 7 : index
    %1209 = memref.load %arg3[%c7_406] : memref<63xf32, #tpu.memory_space<smem>>
    %1210 = vector.broadcast %1209 : f32 to vector<16x38xf32>
    %1211 = arith.mulf %1210, %1199 : vector<16x38xf32>
    %1212 = arith.addf %1190, %1211 : vector<16x38xf32>
    %c7_407 = arith.constant 7 : index
    %1213 = memref.load %arg5[%c7_407] : memref<63xf32, #tpu.memory_space<smem>>
    %1214 = vector.broadcast %1213 : f32 to vector<16x38xf32>
    %1215 = arith.mulf %1214, %1200 : vector<16x38xf32>
    %1216 = arith.addf %1212, %1215 : vector<16x38xf32>
    %c8_408 = arith.constant 8 : index
    %1217 = memref.load %arg3[%c8_408] : memref<63xf32, #tpu.memory_space<smem>>
    %1218 = vector.broadcast %1217 : f32 to vector<16x38xf32>
    %1219 = arith.mulf %1218, %1199 : vector<16x38xf32>
    %1220 = arith.addf %1198, %1219 : vector<16x38xf32>
    %c8_409 = arith.constant 8 : index
    %1221 = memref.load %arg5[%c8_409] : memref<63xf32, #tpu.memory_space<smem>>
    %1222 = vector.broadcast %1221 : f32 to vector<16x38xf32>
    %1223 = arith.mulf %1222, %1200 : vector<16x38xf32>
    %1224 = arith.addf %1220, %1223 : vector<16x38xf32>
    %1225 = vector.extract_strided_slice %827 {offsets = [1, 0], sizes = [16, 38], strides = [1, 1]} : vector<22x38xf32> to vector<16x38xf32>
    %1226 = vector.extract_strided_slice %831 {offsets = [0, 1], sizes = [16, 38], strides = [1, 1]} : vector<16x44xf32> to vector<16x38xf32>
    %c15_410 = arith.constant 15 : index
    %1227 = memref.load %arg3[%c15_410] : memref<63xf32, #tpu.memory_space<smem>>
    %1228 = vector.broadcast %1227 : f32 to vector<16x38xf32>
    %1229 = arith.mulf %1228, %1225 : vector<16x38xf32>
    %1230 = arith.addf %1208, %1229 : vector<16x38xf32>
    %c15_411 = arith.constant 15 : index
    %1231 = memref.load %arg5[%c15_411] : memref<63xf32, #tpu.memory_space<smem>>
    %1232 = vector.broadcast %1231 : f32 to vector<16x38xf32>
    %1233 = arith.mulf %1232, %1226 : vector<16x38xf32>
    %1234 = arith.addf %1230, %1233 : vector<16x38xf32>
    %c16_412 = arith.constant 16 : index
    %1235 = memref.load %arg3[%c16_412] : memref<63xf32, #tpu.memory_space<smem>>
    %1236 = vector.broadcast %1235 : f32 to vector<16x38xf32>
    %1237 = arith.mulf %1236, %1225 : vector<16x38xf32>
    %1238 = arith.addf %1216, %1237 : vector<16x38xf32>
    %c16_413 = arith.constant 16 : index
    %1239 = memref.load %arg5[%c16_413] : memref<63xf32, #tpu.memory_space<smem>>
    %1240 = vector.broadcast %1239 : f32 to vector<16x38xf32>
    %1241 = arith.mulf %1240, %1226 : vector<16x38xf32>
    %1242 = arith.addf %1238, %1241 : vector<16x38xf32>
    %c17_414 = arith.constant 17 : index
    %1243 = memref.load %arg3[%c17_414] : memref<63xf32, #tpu.memory_space<smem>>
    %1244 = vector.broadcast %1243 : f32 to vector<16x38xf32>
    %1245 = arith.mulf %1244, %1225 : vector<16x38xf32>
    %1246 = arith.addf %1224, %1245 : vector<16x38xf32>
    %c17_415 = arith.constant 17 : index
    %1247 = memref.load %arg5[%c17_415] : memref<63xf32, #tpu.memory_space<smem>>
    %1248 = vector.broadcast %1247 : f32 to vector<16x38xf32>
    %1249 = arith.mulf %1248, %1226 : vector<16x38xf32>
    %1250 = arith.addf %1246, %1249 : vector<16x38xf32>
    %1251 = vector.extract_strided_slice %827 {offsets = [2, 0], sizes = [16, 38], strides = [1, 1]} : vector<22x38xf32> to vector<16x38xf32>
    %1252 = vector.extract_strided_slice %831 {offsets = [0, 2], sizes = [16, 38], strides = [1, 1]} : vector<16x44xf32> to vector<16x38xf32>
    %c24_416 = arith.constant 24 : index
    %1253 = memref.load %arg3[%c24_416] : memref<63xf32, #tpu.memory_space<smem>>
    %1254 = vector.broadcast %1253 : f32 to vector<16x38xf32>
    %1255 = arith.mulf %1254, %1251 : vector<16x38xf32>
    %1256 = arith.addf %1234, %1255 : vector<16x38xf32>
    %c24_417 = arith.constant 24 : index
    %1257 = memref.load %arg5[%c24_417] : memref<63xf32, #tpu.memory_space<smem>>
    %1258 = vector.broadcast %1257 : f32 to vector<16x38xf32>
    %1259 = arith.mulf %1258, %1252 : vector<16x38xf32>
    %1260 = arith.addf %1256, %1259 : vector<16x38xf32>
    %c25_418 = arith.constant 25 : index
    %1261 = memref.load %arg3[%c25_418] : memref<63xf32, #tpu.memory_space<smem>>
    %1262 = vector.broadcast %1261 : f32 to vector<16x38xf32>
    %1263 = arith.mulf %1262, %1251 : vector<16x38xf32>
    %1264 = arith.addf %1242, %1263 : vector<16x38xf32>
    %c25_419 = arith.constant 25 : index
    %1265 = memref.load %arg5[%c25_419] : memref<63xf32, #tpu.memory_space<smem>>
    %1266 = vector.broadcast %1265 : f32 to vector<16x38xf32>
    %1267 = arith.mulf %1266, %1252 : vector<16x38xf32>
    %1268 = arith.addf %1264, %1267 : vector<16x38xf32>
    %c26_420 = arith.constant 26 : index
    %1269 = memref.load %arg3[%c26_420] : memref<63xf32, #tpu.memory_space<smem>>
    %1270 = vector.broadcast %1269 : f32 to vector<16x38xf32>
    %1271 = arith.mulf %1270, %1251 : vector<16x38xf32>
    %1272 = arith.addf %1250, %1271 : vector<16x38xf32>
    %c26_421 = arith.constant 26 : index
    %1273 = memref.load %arg5[%c26_421] : memref<63xf32, #tpu.memory_space<smem>>
    %1274 = vector.broadcast %1273 : f32 to vector<16x38xf32>
    %1275 = arith.mulf %1274, %1252 : vector<16x38xf32>
    %1276 = arith.addf %1272, %1275 : vector<16x38xf32>
    %1277 = vector.extract_strided_slice %827 {offsets = [3, 0], sizes = [16, 38], strides = [1, 1]} : vector<22x38xf32> to vector<16x38xf32>
    %1278 = vector.extract_strided_slice %831 {offsets = [0, 3], sizes = [16, 38], strides = [1, 1]} : vector<16x44xf32> to vector<16x38xf32>
    %c33_422 = arith.constant 33 : index
    %1279 = memref.load %arg3[%c33_422] : memref<63xf32, #tpu.memory_space<smem>>
    %1280 = vector.broadcast %1279 : f32 to vector<16x38xf32>
    %1281 = arith.mulf %1280, %1277 : vector<16x38xf32>
    %1282 = arith.addf %1260, %1281 : vector<16x38xf32>
    %c33_423 = arith.constant 33 : index
    %1283 = memref.load %arg5[%c33_423] : memref<63xf32, #tpu.memory_space<smem>>
    %1284 = vector.broadcast %1283 : f32 to vector<16x38xf32>
    %1285 = arith.mulf %1284, %1278 : vector<16x38xf32>
    %1286 = arith.addf %1282, %1285 : vector<16x38xf32>
    %c34_424 = arith.constant 34 : index
    %1287 = memref.load %arg3[%c34_424] : memref<63xf32, #tpu.memory_space<smem>>
    %1288 = vector.broadcast %1287 : f32 to vector<16x38xf32>
    %1289 = arith.mulf %1288, %1277 : vector<16x38xf32>
    %1290 = arith.addf %1268, %1289 : vector<16x38xf32>
    %c34_425 = arith.constant 34 : index
    %1291 = memref.load %arg5[%c34_425] : memref<63xf32, #tpu.memory_space<smem>>
    %1292 = vector.broadcast %1291 : f32 to vector<16x38xf32>
    %1293 = arith.mulf %1292, %1278 : vector<16x38xf32>
    %1294 = arith.addf %1290, %1293 : vector<16x38xf32>
    %c35_426 = arith.constant 35 : index
    %1295 = memref.load %arg3[%c35_426] : memref<63xf32, #tpu.memory_space<smem>>
    %1296 = vector.broadcast %1295 : f32 to vector<16x38xf32>
    %1297 = arith.mulf %1296, %1277 : vector<16x38xf32>
    %1298 = arith.addf %1276, %1297 : vector<16x38xf32>
    %c35_427 = arith.constant 35 : index
    %1299 = memref.load %arg5[%c35_427] : memref<63xf32, #tpu.memory_space<smem>>
    %1300 = vector.broadcast %1299 : f32 to vector<16x38xf32>
    %1301 = arith.mulf %1300, %1278 : vector<16x38xf32>
    %1302 = arith.addf %1298, %1301 : vector<16x38xf32>
    %1303 = vector.extract_strided_slice %827 {offsets = [4, 0], sizes = [16, 38], strides = [1, 1]} : vector<22x38xf32> to vector<16x38xf32>
    %1304 = vector.extract_strided_slice %831 {offsets = [0, 4], sizes = [16, 38], strides = [1, 1]} : vector<16x44xf32> to vector<16x38xf32>
    %c42_428 = arith.constant 42 : index
    %1305 = memref.load %arg3[%c42_428] : memref<63xf32, #tpu.memory_space<smem>>
    %1306 = vector.broadcast %1305 : f32 to vector<16x38xf32>
    %1307 = arith.mulf %1306, %1303 : vector<16x38xf32>
    %1308 = arith.addf %1286, %1307 : vector<16x38xf32>
    %c42_429 = arith.constant 42 : index
    %1309 = memref.load %arg5[%c42_429] : memref<63xf32, #tpu.memory_space<smem>>
    %1310 = vector.broadcast %1309 : f32 to vector<16x38xf32>
    %1311 = arith.mulf %1310, %1304 : vector<16x38xf32>
    %1312 = arith.addf %1308, %1311 : vector<16x38xf32>
    %c43_430 = arith.constant 43 : index
    %1313 = memref.load %arg3[%c43_430] : memref<63xf32, #tpu.memory_space<smem>>
    %1314 = vector.broadcast %1313 : f32 to vector<16x38xf32>
    %1315 = arith.mulf %1314, %1303 : vector<16x38xf32>
    %1316 = arith.addf %1294, %1315 : vector<16x38xf32>
    %c43_431 = arith.constant 43 : index
    %1317 = memref.load %arg5[%c43_431] : memref<63xf32, #tpu.memory_space<smem>>
    %1318 = vector.broadcast %1317 : f32 to vector<16x38xf32>
    %1319 = arith.mulf %1318, %1304 : vector<16x38xf32>
    %1320 = arith.addf %1316, %1319 : vector<16x38xf32>
    %c44_432 = arith.constant 44 : index
    %1321 = memref.load %arg3[%c44_432] : memref<63xf32, #tpu.memory_space<smem>>
    %1322 = vector.broadcast %1321 : f32 to vector<16x38xf32>
    %1323 = arith.mulf %1322, %1303 : vector<16x38xf32>
    %1324 = arith.addf %1302, %1323 : vector<16x38xf32>
    %c44_433 = arith.constant 44 : index
    %1325 = memref.load %arg5[%c44_433] : memref<63xf32, #tpu.memory_space<smem>>
    %1326 = vector.broadcast %1325 : f32 to vector<16x38xf32>
    %1327 = arith.mulf %1326, %1304 : vector<16x38xf32>
    %1328 = arith.addf %1324, %1327 : vector<16x38xf32>
    %1329 = vector.extract_strided_slice %827 {offsets = [5, 0], sizes = [16, 38], strides = [1, 1]} : vector<22x38xf32> to vector<16x38xf32>
    %1330 = vector.extract_strided_slice %831 {offsets = [0, 5], sizes = [16, 38], strides = [1, 1]} : vector<16x44xf32> to vector<16x38xf32>
    %c51_434 = arith.constant 51 : index
    %1331 = memref.load %arg3[%c51_434] : memref<63xf32, #tpu.memory_space<smem>>
    %1332 = vector.broadcast %1331 : f32 to vector<16x38xf32>
    %1333 = arith.mulf %1332, %1329 : vector<16x38xf32>
    %1334 = arith.addf %1312, %1333 : vector<16x38xf32>
    %c51_435 = arith.constant 51 : index
    %1335 = memref.load %arg5[%c51_435] : memref<63xf32, #tpu.memory_space<smem>>
    %1336 = vector.broadcast %1335 : f32 to vector<16x38xf32>
    %1337 = arith.mulf %1336, %1330 : vector<16x38xf32>
    %1338 = arith.addf %1334, %1337 : vector<16x38xf32>
    %c52_436 = arith.constant 52 : index
    %1339 = memref.load %arg3[%c52_436] : memref<63xf32, #tpu.memory_space<smem>>
    %1340 = vector.broadcast %1339 : f32 to vector<16x38xf32>
    %1341 = arith.mulf %1340, %1329 : vector<16x38xf32>
    %1342 = arith.addf %1320, %1341 : vector<16x38xf32>
    %c52_437 = arith.constant 52 : index
    %1343 = memref.load %arg5[%c52_437] : memref<63xf32, #tpu.memory_space<smem>>
    %1344 = vector.broadcast %1343 : f32 to vector<16x38xf32>
    %1345 = arith.mulf %1344, %1330 : vector<16x38xf32>
    %1346 = arith.addf %1342, %1345 : vector<16x38xf32>
    %c53_438 = arith.constant 53 : index
    %1347 = memref.load %arg3[%c53_438] : memref<63xf32, #tpu.memory_space<smem>>
    %1348 = vector.broadcast %1347 : f32 to vector<16x38xf32>
    %1349 = arith.mulf %1348, %1329 : vector<16x38xf32>
    %1350 = arith.addf %1328, %1349 : vector<16x38xf32>
    %c53_439 = arith.constant 53 : index
    %1351 = memref.load %arg5[%c53_439] : memref<63xf32, #tpu.memory_space<smem>>
    %1352 = vector.broadcast %1351 : f32 to vector<16x38xf32>
    %1353 = arith.mulf %1352, %1330 : vector<16x38xf32>
    %1354 = arith.addf %1350, %1353 : vector<16x38xf32>
    %1355 = vector.extract_strided_slice %827 {offsets = [6, 0], sizes = [16, 38], strides = [1, 1]} : vector<22x38xf32> to vector<16x38xf32>
    %1356 = vector.extract_strided_slice %831 {offsets = [0, 6], sizes = [16, 38], strides = [1, 1]} : vector<16x44xf32> to vector<16x38xf32>
    %c60_440 = arith.constant 60 : index
    %1357 = memref.load %arg3[%c60_440] : memref<63xf32, #tpu.memory_space<smem>>
    %1358 = vector.broadcast %1357 : f32 to vector<16x38xf32>
    %1359 = arith.mulf %1358, %1355 : vector<16x38xf32>
    %1360 = arith.addf %1338, %1359 : vector<16x38xf32>
    %c60_441 = arith.constant 60 : index
    %1361 = memref.load %arg5[%c60_441] : memref<63xf32, #tpu.memory_space<smem>>
    %1362 = vector.broadcast %1361 : f32 to vector<16x38xf32>
    %1363 = arith.mulf %1362, %1356 : vector<16x38xf32>
    %1364 = arith.addf %1360, %1363 : vector<16x38xf32>
    %c61_442 = arith.constant 61 : index
    %1365 = memref.load %arg3[%c61_442] : memref<63xf32, #tpu.memory_space<smem>>
    %1366 = vector.broadcast %1365 : f32 to vector<16x38xf32>
    %1367 = arith.mulf %1366, %1355 : vector<16x38xf32>
    %1368 = arith.addf %1346, %1367 : vector<16x38xf32>
    %c61_443 = arith.constant 61 : index
    %1369 = memref.load %arg5[%c61_443] : memref<63xf32, #tpu.memory_space<smem>>
    %1370 = vector.broadcast %1369 : f32 to vector<16x38xf32>
    %1371 = arith.mulf %1370, %1356 : vector<16x38xf32>
    %1372 = arith.addf %1368, %1371 : vector<16x38xf32>
    %c62_444 = arith.constant 62 : index
    %1373 = memref.load %arg3[%c62_444] : memref<63xf32, #tpu.memory_space<smem>>
    %1374 = vector.broadcast %1373 : f32 to vector<16x38xf32>
    %1375 = arith.mulf %1374, %1355 : vector<16x38xf32>
    %1376 = arith.addf %1354, %1375 : vector<16x38xf32>
    %c62_445 = arith.constant 62 : index
    %1377 = memref.load %arg5[%c62_445] : memref<63xf32, #tpu.memory_space<smem>>
    %1378 = vector.broadcast %1377 : f32 to vector<16x38xf32>
    %1379 = arith.mulf %1378, %1356 : vector<16x38xf32>
    %1380 = arith.addf %1376, %1379 : vector<16x38xf32>
    %1381 = vector.extract_strided_slice %1364 {offsets = [0, 0], sizes = [16, 16], strides = [1, 1]} : vector<16x38xf32> to vector<16x16xf32>
    %c0_446 = arith.constant 0 : index
    %c0_447 = arith.constant 0 : index
    %c0_448 = arith.constant 0 : index
    %c0_449 = arith.constant 0 : index
    %1382 = vector.load %arg6[%c0_446, %c0_447, %c0_448, %c0_449] : memref<2x3x16x16xf32, #tpu.memory_space<vmem>>, vector<1x1x16x16xf32>
    %1383 = vector.shape_cast %1382 : vector<1x1x16x16xf32> to vector<16x16xf32>
    %1384 = vector.shape_cast %1381 : vector<16x16xf32> to vector<1x1x16x16xf32>
    tpu.vector_store %arg6[%c0_446, %c0_447, %c0_448, %c0_449], %1384 {strides = array<i32>} : memref<2x3x16x16xf32, #tpu.memory_space<vmem>>, vector<1x1x16x16xf32>,
    %1385 = vector.extract_strided_slice %1372 {offsets = [0, 0], sizes = [16, 16], strides = [1, 1]} : vector<16x38xf32> to vector<16x16xf32>
    %c0_450 = arith.constant 0 : index
    %c1_451 = arith.constant 1 : index
    %c0_452 = arith.constant 0 : index
    %c0_453 = arith.constant 0 : index
    %1386 = vector.load %arg6[%c0_450, %c1_451, %c0_452, %c0_453] : memref<2x3x16x16xf32, #tpu.memory_space<vmem>>, vector<1x1x16x16xf32>
    %1387 = vector.shape_cast %1386 : vector<1x1x16x16xf32> to vector<16x16xf32>
    %1388 = vector.shape_cast %1385 : vector<16x16xf32> to vector<1x1x16x16xf32>
    tpu.vector_store %arg6[%c0_450, %c1_451, %c0_452, %c0_453], %1388 {strides = array<i32>} : memref<2x3x16x16xf32, #tpu.memory_space<vmem>>, vector<1x1x16x16xf32>,
    %1389 = vector.extract_strided_slice %1380 {offsets = [0, 0], sizes = [16, 16], strides = [1, 1]} : vector<16x38xf32> to vector<16x16xf32>
    %c0_454 = arith.constant 0 : index
    %c2_455 = arith.constant 2 : index
    %c0_456 = arith.constant 0 : index
    %c0_457 = arith.constant 0 : index
    %1390 = vector.load %arg6[%c0_454, %c2_455, %c0_456, %c0_457] : memref<2x3x16x16xf32, #tpu.memory_space<vmem>>, vector<1x1x16x16xf32>
    %1391 = vector.shape_cast %1390 : vector<1x1x16x16xf32> to vector<16x16xf32>
    %1392 = vector.shape_cast %1389 : vector<16x16xf32> to vector<1x1x16x16xf32>
    tpu.vector_store %arg6[%c0_454, %c2_455, %c0_456, %c0_457], %1392 {strides = array<i32>} : memref<2x3x16x16xf32, #tpu.memory_space<vmem>>, vector<1x1x16x16xf32>,
    %1393 = vector.extract_strided_slice %1364 {offsets = [0, 22], sizes = [16, 16], strides = [1, 1]} : vector<16x38xf32> to vector<16x16xf32>
    %c1_458 = arith.constant 1 : index
    %c0_459 = arith.constant 0 : index
    %c0_460 = arith.constant 0 : index
    %c0_461 = arith.constant 0 : index
    %1394 = vector.load %arg6[%c1_458, %c0_459, %c0_460, %c0_461] : memref<2x3x16x16xf32, #tpu.memory_space<vmem>>, vector<1x1x16x16xf32>
    %1395 = vector.shape_cast %1394 : vector<1x1x16x16xf32> to vector<16x16xf32>
    %1396 = vector.shape_cast %1393 : vector<16x16xf32> to vector<1x1x16x16xf32>
    tpu.vector_store %arg6[%c1_458, %c0_459, %c0_460, %c0_461], %1396 {strides = array<i32>} : memref<2x3x16x16xf32, #tpu.memory_space<vmem>>, vector<1x1x16x16xf32>,
    %1397 = vector.extract_strided_slice %1372 {offsets = [0, 22], sizes = [16, 16], strides = [1, 1]} : vector<16x38xf32> to vector<16x16xf32>
    %c1_462 = arith.constant 1 : index
    %c1_463 = arith.constant 1 : index
    %c0_464 = arith.constant 0 : index
    %c0_465 = arith.constant 0 : index
    %1398 = vector.load %arg6[%c1_462, %c1_463, %c0_464, %c0_465] : memref<2x3x16x16xf32, #tpu.memory_space<vmem>>, vector<1x1x16x16xf32>
    %1399 = vector.shape_cast %1398 : vector<1x1x16x16xf32> to vector<16x16xf32>
    %1400 = vector.shape_cast %1397 : vector<16x16xf32> to vector<1x1x16x16xf32>
    tpu.vector_store %arg6[%c1_462, %c1_463, %c0_464, %c0_465], %1400 {strides = array<i32>} : memref<2x3x16x16xf32, #tpu.memory_space<vmem>>, vector<1x1x16x16xf32>,
    %1401 = vector.extract_strided_slice %1380 {offsets = [0, 22], sizes = [16, 16], strides = [1, 1]} : vector<16x38xf32> to vector<16x16xf32>
    %c1_466 = arith.constant 1 : index
    %c2_467 = arith.constant 2 : index
    %c0_468 = arith.constant 0 : index
    %c0_469 = arith.constant 0 : index
    %1402 = vector.load %arg6[%c1_466, %c2_467, %c0_468, %c0_469] : memref<2x3x16x16xf32, #tpu.memory_space<vmem>>, vector<1x1x16x16xf32>
    %1403 = vector.shape_cast %1402 : vector<1x1x16x16xf32> to vector<16x16xf32>
    %1404 = vector.shape_cast %1401 : vector<16x16xf32> to vector<1x1x16x16xf32>
    tpu.vector_store %arg6[%c1_466, %c2_467, %c0_468, %c0_469], %1404 {strides = array<i32>} : memref<2x3x16x16xf32, #tpu.memory_space<vmem>>, vector<1x1x16x16xf32>,
    return
  }
  func.func @transform_0(%arg0: i32) -> (i32, i32, i32, i32) {
    %c0_i32 = arith.constant 0 : i32
    %c0_i32_0 = arith.constant 0 : i32
    %c0_i32_1 = arith.constant 0 : i32
    %c0_i32_2 = arith.constant 0 : i32
    return %arg0, %c0_i32, %c0_i32_0, %c0_i32_1 : i32, i32, i32, i32
  }
  func.func @transform_1(%arg0: i32) -> i32 {
    %c0_i32 = arith.constant 0 : i32
    %c0_i32_0 = arith.constant 0 : i32
    return %c0_i32 : i32
  }
  func.func @transform_2(%arg0: i32) -> i32 {
    %c0_i32 = arith.constant 0 : i32
    %c0_i32_0 = arith.constant 0 : i32
    return %c0_i32 : i32
  }
  func.func @transform_3(%arg0: i32) -> i32 {
    %c0_i32 = arith.constant 0 : i32
    %c0_i32_0 = arith.constant 0 : i32
    return %c0_i32 : i32
  }
  func.func @transform_4(%arg0: i32) -> i32 {
    %c0_i32 = arith.constant 0 : i32
    %c0_i32_0 = arith.constant 0 : i32
    return %c0_i32 : i32
  }
  func.func @transform_5(%arg0: i32) -> (i32, i32, i32, i32) {
    %c0_i32 = arith.constant 0 : i32
    %c0_i32_0 = arith.constant 0 : i32
    %c0_i32_1 = arith.constant 0 : i32
    %c0_i32_2 = arith.constant 0 : i32
    return %arg0, %c0_i32, %c0_i32_0, %c0_i32_1 : i32, i32, i32, i32
  }
}

</mosaic_0001>

<llo_original>
// kernel: tpu_custom_call.1
$region0: #{tpu_custom_call.1}
  #allocation0 [shape = 'u32[]', space=smem, size = 0x4, offset = 0x4, fixed_abs, tag = 'smem constant byte address 0x4 - core index']
  #allocation1 [shape = 'u32[72,128]{1,0:T(1,128)}', space=vmem, size = 0x9000, scoped, tag = 'internal scratch']
  #allocation2 [shape = 'f32[4,22,44]{2,1,0:T(8,128)}', space=vmem, size = 0xc000, scoped, tag = 'scratch operand']
  %s0 = inlined_call_operand.hbm [shape: f32[2,4,16,16], index: 0, kind: input, shape index: {}]
  %s1 = inlined_call_operand.hbm [shape: f32[84], index: 1, kind: input, shape index: {}]
  %s2 = inlined_call_operand.vmem [shape: f32[63], index: 2, kind: input, shape index: {}]
  %s3 = inlined_call_operand.vmem [shape: f32[84], index: 3, kind: input, shape index: {}]
  %s4 = inlined_call_operand.vmem [shape: f32[63], index: 4, kind: input, shape index: {}]
  %s5 = inlined_call_operand.hbm [shape: f32[2,3,16,16], index: 5, kind: output, shape index: {}]
  %s6 = sld [smem:[#allocation0]]
  $region50: #{tpu_custom_call.1} parent=0
    _
  %s8 = ssub.s32 1, %s6
  %s9 = scalar_select 0, %s8, %s6
  $region1: #{tpu_custom_call.1} parent=0
    #allocation3 [shape = 'u8[65536]{0}', space=vmem, size = 0x10000, scoped, tag = 'input window, operand 0, single buffered']
    #allocation4 [shape = 's32[1]{0}', space=sflag, size = 0x4, scoped, tag = 'scoped memory for tpu_custom_call.1']
    #allocation5 [shape = 's32[1]{0}', space=sflag, size = 0x4, scoped, tag = 'scoped memory for tpu_custom_call.1']
    #allocation6 [shape = 's32[1]{0}', space=sflag, size = 0x4, scoped, tag = 'scoped memory for tpu_custom_call.1']
    #allocation7 [shape = 's32[1]{0}', space=sflag, size = 0x4, scoped, tag = 'scoped memory for tpu_custom_call.1']
    #allocation8 [shape = 'u8[512]{0}', space=smem, size = 0x200, scoped, tag = 'input window, operand 1, single buffered']
    #allocation9 [shape = 'u8[512]{0}', space=smem, size = 0x200, scoped, tag = 'input window, operand 2, single buffered']
    #allocation10 [shape = 'u8[512]{0}', space=smem, size = 0x200, scoped, tag = 'input window, operand 3, single buffered']
    #allocation11 [shape = 's32[1]{0}', space=sflag, size = 0x4, scoped, tag = 'scoped memory for tpu_custom_call.1']
    #allocation12 [shape = 'u8[512]{0}', space=smem, size = 0x200, scoped, tag = 'input window, operand 4, single buffered']
    #allocation13 [shape = 'u8[49152]{0}', space=vmem, size = 0xc000, scoped, tag = 'output window, operand 0, single buffered']
    %10 = vsyncpa [#allocation4], 0
    %11 = vsyncpa [#allocation6], 0
    %12 = vsyncpa [#allocation7], 0
    %13 = vsyncpa [#allocation11], 0
    %14 = vsyncpa [#allocation5], 0
    // Predicated region
    $region2: #{tpu_custom_call.1} parent=1 // pred_check
      _
    $region3: #{tpu_custom_call.1} parent=1 // pred_check_branch
      %16 = sbr.rel (0) target = $region5
    $region4: #{tpu_custom_call.1} parent=1 // pred_region
      %18 = vsyncadd [#allocation4], 0
      %s19 = sshll.u32 %s0, 4
      %s20 = int_to_ptr.hbm [resolvable:$true] %s19
      %s21 = sshll.u32 [#allocation3], 4
      %s22 = int_to_ptr.vmem [resolvable:$true] %s21
      %27 = dma.hbm_to_vmem [thread:$0]  %s20, 2048, %s22, [#allocation4], 128, 128, 8
    $region5: #{tpu_custom_call.1} parent=1 // pred_fallthru
      _
    // Predicated region
    $region6: #{tpu_custom_call.1} parent=1 // pred_check
      _
    $region7: #{tpu_custom_call.1} parent=1 // pred_check_branch
      %29 = sbr.rel (0) target = $region9
    $region8: #{tpu_custom_call.1} parent=1 // pred_region
      %31 = vsyncadd [#allocation6], 0
      %s33 = sshll.u32 %s1, 4
      %s34 = int_to_ptr.hbm [resolvable:$true] %s33
      %36 = dma.hbm_to_smem %s34, 16, [#allocation8], [#allocation6]
    $region9: #{tpu_custom_call.1} parent=1 // pred_fallthru
      _
    // Predicated region
    $region10: #{tpu_custom_call.1} parent=1 // pred_check
      _
    $region11: #{tpu_custom_call.1} parent=1 // pred_check_branch
      %38 = sbr.rel (0) target = $region13
    $region12: #{tpu_custom_call.1} parent=1 // pred_region
      %40 = vsyncadd [#allocation7], 0
      %s42 = sshll.u32 %s2, 4
      %s43 = int_to_ptr.vmem [resolvable:$true] %s42
      %45 = dma.vmem_to_smem %s43, 16, [#allocation9], [#allocation7]
    $region13: #{tpu_custom_call.1} parent=1 // pred_fallthru
      _
    // Predicated region
    $region14: #{tpu_custom_call.1} parent=1 // pred_check
      _
    $region15: #{tpu_custom_call.1} parent=1 // pred_check_branch
      %47 = sbr.rel (0) target = $region17
    $region16: #{tpu_custom_call.1} parent=1 // pred_region
      %49 = vsyncadd [#allocation11], 0
      %s51 = sshll.u32 %s3, 4
      %s52 = int_to_ptr.vmem [resolvable:$true] %s51
      %54 = dma.vmem_to_smem %s52, 16, [#allocation10], [#allocation11]
    $region17: #{tpu_custom_call.1} parent=1 // pred_fallthru
      _
    // Predicated region
    $region18: #{tpu_custom_call.1} parent=1 // pred_check
      _
    $region19: #{tpu_custom_call.1} parent=1 // pred_check_branch
      %56 = sbr.rel (0) target = $region21
    $region20: #{tpu_custom_call.1} parent=1 // pred_region
      %58 = vsyncadd [#allocation11], 0
      %s60 = sshll.u32 %s4, 4
      %s61 = int_to_ptr.vmem [resolvable:$true] %s60
      %63 = dma.vmem_to_smem %s61, 16, [#allocation12], [#allocation11]
    $region21: #{tpu_custom_call.1} parent=1 // pred_fallthru
      _
    // Predicated region
    $region22: #{tpu_custom_call.1} parent=1 // pred_check
      _
    $region23: #{tpu_custom_call.1} parent=1 // pred_check_branch
      %65 = sbr.rel (0) target = $region25
    $region24: #{tpu_custom_call.1} parent=1 // pred_region
      %67 = dma.done [#allocation4], 2048
    $region25: #{tpu_custom_call.1} parent=1 // pred_fallthru
      _
    // Predicated region
    $region26: #{tpu_custom_call.1} parent=1 // pred_check
      _
    $region27: #{tpu_custom_call.1} parent=1 // pred_check_branch
      %69 = sbr.rel (0) target = $region29
    $region28: #{tpu_custom_call.1} parent=1 // pred_region
      %71 = dma.done [#allocation6], 16
    $region29: #{tpu_custom_call.1} parent=1 // pred_fallthru
      _
    // Predicated region
    $region30: #{tpu_custom_call.1} parent=1 // pred_check
      _
    $region31: #{tpu_custom_call.1} parent=1 // pred_check_branch
      %73 = sbr.rel (0) target = $region33
    $region32: #{tpu_custom_call.1} parent=1 // pred_region
      %75 = dma.done [#allocation7], 16
    $region33: #{tpu_custom_call.1} parent=1 // pred_fallthru
      _
    // Predicated region
    $region34: #{tpu_custom_call.1} parent=1 // pred_check
      _
    $region35: #{tpu_custom_call.1} parent=1 // pred_check_branch
      %77 = sbr.rel (0) target = $region37
    $region36: #{tpu_custom_call.1} parent=1 // pred_region
      %79 = dma.done [#allocation11], 16
    $region37: #{tpu_custom_call.1} parent=1 // pred_fallthru
      _
    // Predicated region
    $region38: #{tpu_custom_call.1} parent=1 // pred_check
      _
    $region39: #{tpu_custom_call.1} parent=1 // pred_check_branch
      %81 = sbr.rel (0) target = $region41
    $region40: #{tpu_custom_call.1} parent=1 // pred_region
      %83 = dma.done [#allocation11], 16
    $region41: #{tpu_custom_call.1} parent=1 // pred_fallthru
      _
    %84 = sfence
    %vm85 = vcmask 359424
    %86 = vst.msk [vmem:[#allocation2] sm:$0xff] %vm85, 0.0
    %87 = vst.msk [vmem:[#allocation2 + $0x8] sm:$0xff] %vm85, 0.0
    %vm88 = vcmask 357376
    %89 = vst.msk [vmem:[#allocation2 + $0x10] sm:$0x3f] %vm88, 0.0
    %90 = vst.msk [vmem:[#allocation2 + $0x18] sm:$0xff] %vm85, 0.0
    %91 = vst.msk [vmem:[#allocation2 + $0x20] sm:$0xff] %vm85, 0.0
    %92 = vst.msk [vmem:[#allocation2 + $0x28] sm:$0x3f] %vm88, 0.0
    %93 = vst.msk [vmem:[#allocation2 + $0x30] sm:$0xff] %vm85, 0.0
    %94 = vst.msk [vmem:[#allocation2 + $0x38] sm:$0xff] %vm85, 0.0
    %95 = vst.msk [vmem:[#allocation2 + $0x40] sm:$0x3f] %vm88, 0.0
    %96 = vst.msk [vmem:[#allocation2 + $0x48] sm:$0xff] %vm85, 0.0
    %97 = vst.msk [vmem:[#allocation2 + $0x50] sm:$0xff] %vm85, 0.0
    %98 = vst.msk [vmem:[#allocation2 + $0x58] sm:$0x3f] %vm88, 0.0
    %v99 = vld [vmem:[#allocation3] sm:$0xff]
    %v100 = vld [vmem:[#allocation3 + $0x8] sm:$0xff]
    %103 = vrot.lane.b32.xlu0 %v99, 3
    %v104 = vpop.permute.xlu0 %103
    %105 = vrot.lane.b32.xlu0 %v100, 3
    %v106 = vpop.permute.xlu0 %105
    %vm109 = vcmask 154648
    %110 = vst.msk [vmem:[#allocation2 + $0x3] sm:$0xff] %vm109, %v104
    %111 = vst.msk [vmem:[#allocation2 + $0xb] sm:$0xff] %vm109, %v106
    %s112 = scalar_lea.vmem [#allocation3], 16
    %v113 = vld [vmem:[%s112] sm:$0xff]
    %v114 = vld [vmem:[%s112 + $0x8] sm:$0xff]
    %117 = vrot.lane.b32.xlu0 %v113, 3
    %v118 = vpop.permute.xlu0 %117
    %119 = vrot.lane.b32.xlu0 %v114, 3
    %v120 = vpop.permute.xlu0 %119
    %s123 = scalar_lea.vmem [#allocation2], 24
    %124 = vst.msk [vmem:[%s123 + $0x3] sm:$0xff] %vm109, %v118
    %125 = vst.msk [vmem:[%s123 + $0xb] sm:$0xff] %vm109, %v120
    %s126 = scalar_lea.vmem [#allocation3], 32
    %v127 = vld [vmem:[%s126] sm:$0xff]
    %v128 = vld [vmem:[%s126 + $0x8] sm:$0xff]
    %131 = vrot.lane.b32.xlu0 %v127, 3
    %v132 = vpop.permute.xlu0 %131
    %133 = vrot.lane.b32.xlu0 %v128, 3
    %v134 = vpop.permute.xlu0 %133
    %s137 = scalar_lea.vmem [#allocation2], 48
    %138 = vst.msk [vmem:[%s137 + $0x3] sm:$0xff] %vm109, %v132
    %139 = vst.msk [vmem:[%s137 + $0xb] sm:$0xff] %vm109, %v134
    %s140 = scalar_lea.vmem [#allocation3], 48
    %v141 = vld [vmem:[%s140] sm:$0xff]
    %v142 = vld [vmem:[%s140 + $0x8] sm:$0xff]
    %145 = vrot.lane.b32.xlu0 %v141, 3
    %v146 = vpop.permute.xlu0 %145
    %147 = vrot.lane.b32.xlu0 %v142, 3
    %v148 = vpop.permute.xlu0 %147
    %s151 = scalar_lea.vmem [#allocation2], 72
    %152 = vst.msk [vmem:[%s151 + $0x3] sm:$0xff] %vm109, %v146
    %153 = vst.msk [vmem:[%s151 + $0xb] sm:$0xff] %vm109, %v148
    %s154 = scalar_lea.vmem [#allocation3], 64
    %v155 = vld [vmem:[%s154] sm:$0xff]
    %v156 = vld [vmem:[%s154 + $0x8] sm:$0xff]
    %159 = vrot.lane.b32.xlu0 %v155, 25
    %v160 = vpop.permute.xlu0 %159
    %161 = vrot.lane.b32.xlu0 %v156, 25
    %v162 = vpop.permute.xlu0 %161
    %vm165 = vcmask 335048
    %166 = vst.msk [vmem:[#allocation2 + $0x3] sm:$0xff] %vm165, %v160
    %167 = vst.msk [vmem:[#allocation2 + $0xb] sm:$0xff] %vm165, %v162
    %s168 = scalar_lea.vmem [#allocation3], 80
    %v169 = vld [vmem:[%s168] sm:$0xff]
    %v170 = vld [vmem:[%s168 + $0x8] sm:$0xff]
    %173 = vrot.lane.b32.xlu0 %v169, 25
    %v174 = vpop.permute.xlu0 %173
    %175 = vrot.lane.b32.xlu0 %v170, 25
    %v176 = vpop.permute.xlu0 %175
    %179 = vst.msk [vmem:[%s123 + $0x3] sm:$0xff] %vm165, %v174
    %180 = vst.msk [vmem:[%s123 + $0xb] sm:$0xff] %vm165, %v176
    %s181 = scalar_lea.vmem [#allocation3], 96
    %v182 = vld [vmem:[%s181] sm:$0xff]
    %v183 = vld [vmem:[%s181 + $0x8] sm:$0xff]
    %186 = vrot.lane.b32.xlu0 %v182, 25
    %v187 = vpop.permute.xlu0 %186
    %188 = vrot.lane.b32.xlu0 %v183, 25
    %v189 = vpop.permute.xlu0 %188
    %192 = vst.msk [vmem:[%s137 + $0x3] sm:$0xff] %vm165, %v187
    %193 = vst.msk [vmem:[%s137 + $0xb] sm:$0xff] %vm165, %v189
    %s194 = scalar_lea.vmem [#allocation3], 112
    %v195 = vld [vmem:[%s194] sm:$0xff]
    %v196 = vld [vmem:[%s194 + $0x8] sm:$0xff]
    %199 = vrot.lane.b32.xlu0 %v195, 25
    %v200 = vpop.permute.xlu0 %199
    %201 = vrot.lane.b32.xlu0 %v196, 25
    %v202 = vpop.permute.xlu0 %201
    %205 = vst.msk [vmem:[%s151 + $0x3] sm:$0xff] %vm165, %v200
    %206 = vst.msk [vmem:[%s151 + $0xb] sm:$0xff] %vm165, %v202
    %v207 = vld [vmem:[#allocation2] sm:$0xff]
    %v208 = vld [vmem:[#allocation2 + $0x8] sm:$0xff]
    %v209 = vld [vmem:[#allocation2 + $0x10] sm:$0x3f]
    %s210 = sld [smem:[#allocation8]]
    %v211 = vstv %s210
    %v212 = vmul.f32 %v211, %v207
    %v213 = vmul.f32 %v211, %v208
    %v214 = vmul.f32 %v211, %v209
    %v215 = vadd.f32 %v212, 0.0
    %v216 = vadd.f32 %v213, 0.0
    %v217 = vadd.f32 %v214, 0.0
    %s218 = sld [smem:[#allocation10]]
    %v219 = vstv %s218
    %v220 = vmul.f32 %v219, %v207
    %v221 = vmul.f32 %v219, %v208
    %v222 = vadd.f32 %v220, 0.0
    %v223 = vadd.f32 %v221, 0.0
    %s224 = sld [smem:[#allocation8 + $0x1]]
    %v225 = vstv %s224
    %v226 = vmul.f32 %v225, %v207
    %v227 = vmul.f32 %v225, %v208
    %v228 = vmul.f32 %v225, %v209
    %v229 = vadd.f32 %v226, 0.0
    %v230 = vadd.f32 %v227, 0.0
    %v231 = vadd.f32 %v228, 0.0
    %s232 = sld [smem:[#allocation10 + $0x1]]
    %v233 = vstv %s232
    %v234 = vmul.f32 %v233, %v207
    %v235 = vmul.f32 %v233, %v208
    %v236 = vadd.f32 %v234, 0.0
    %v237 = vadd.f32 %v235, 0.0
    %s238 = sld [smem:[#allocation8 + $0x2]]
    %v239 = vstv %s238
    %v240 = vmul.f32 %v239, %v207
    %v241 = vmul.f32 %v239, %v208
    %v242 = vmul.f32 %v239, %v209
    %v243 = vadd.f32 %v240, 0.0
    %v244 = vadd.f32 %v241, 0.0
    %v245 = vadd.f32 %v242, 0.0
    %s246 = sld [smem:[#allocation10 + $0x2]]
    %v247 = vstv %s246
    %v248 = vmul.f32 %v247, %v207
    %v249 = vmul.f32 %v247, %v208
    %v250 = vadd.f32 %v248, 0.0
    %v251 = vadd.f32 %v249, 0.0
    %v252 = vld [vmem:[#allocation2 + $0x1] sm:$0xff]
    %v253 = vld [vmem:[#allocation2 + $0x9] sm:$0xff]
    %s254 = sld [smem:[#allocation8 + $0xc]]
    %v255 = vstv %s254
    %v256 = vmul.f32 %v255, %v207
    %v257 = vmul.f32 %v255, %v208
    %v258 = vmul.f32 %v255, %v209
    %262 = vrot.lane.b32.xlu0 %v256, 127
    %v263 = vpop.permute.xlu0 %262
    %264 = vrot.lane.b32.xlu0 %v257, 127
    %v265 = vpop.permute.xlu0 %264
    %266 = vrot.lane.b32.xlu0 %v258, 127
    %v267 = vpop.permute.xlu0 %266
    %v271 = vadd.f32 %v215, %v263
    %v272 = vadd.f32 %v216, %v265
    %v273 = vadd.f32 %v217, %v267
    %s274 = sld [smem:[#allocation10 + $0xc]]
    %v275 = vstv %s274
    %v276 = vmul.f32 %v275, %v252
    %v277 = vmul.f32 %v275, %v253
    %v278 = vadd.f32 %v222, %v276
    %v279 = vadd.f32 %v223, %v277
    %s280 = sld [smem:[#allocation8 + $0xd]]
    %v281 = vstv %s280
    %v282 = vmul.f32 %v281, %v207
    %v283 = vmul.f32 %v281, %v208
    %v284 = vmul.f32 %v281, %v209
    %288 = vrot.lane.b32.xlu0 %v282, 127
    %v289 = vpop.permute.xlu0 %288
    %290 = vrot.lane.b32.xlu0 %v283, 127
    %v291 = vpop.permute.xlu0 %290
    %292 = vrot.lane.b32.xlu0 %v284, 127
    %v293 = vpop.permute.xlu0 %292
    %v297 = vadd.f32 %v229, %v289
    %v298 = vadd.f32 %v230, %v291
    %v299 = vadd.f32 %v231, %v293
    %s300 = sld [smem:[#allocation10 + $0xd]]
    %v301 = vstv %s300
    %v302 = vmul.f32 %v301, %v252
    %v303 = vmul.f32 %v301, %v253
    %v304 = vadd.f32 %v236, %v302
    %v305 = vadd.f32 %v237, %v303
    %s306 = sld [smem:[#allocation8 + $0xe]]
    %v307 = vstv %s306
    %v308 = vmul.f32 %v307, %v207
    %v309 = vmul.f32 %v307, %v208
    %v310 = vmul.f32 %v307, %v209
    %314 = vrot.lane.b32.xlu0 %v308, 127
    %v315 = vpop.permute.xlu0 %314
    %316 = vrot.lane.b32.xlu0 %v309, 127
    %v317 = vpop.permute.xlu0 %316
    %318 = vrot.lane.b32.xlu0 %v310, 127
    %v319 = vpop.permute.xlu0 %318
    %v323 = vadd.f32 %v243, %v315
    %v324 = vadd.f32 %v244, %v317
    %v325 = vadd.f32 %v245, %v319
    %s326 = sld [smem:[#allocation10 + $0xe]]
    %v327 = vstv %s326
    %v328 = vmul.f32 %v327, %v252
    %v329 = vmul.f32 %v327, %v253
    %v330 = vadd.f32 %v250, %v328
    %v331 = vadd.f32 %v251, %v329
    %v332 = vld [vmem:[#allocation2 + $0x2] sm:$0xff]
    %v333 = vld [vmem:[#allocation2 + $0xa] sm:$0xff]
    %s334 = sld [smem:[#allocation8 + $0x18]]
    %v335 = vstv %s334
    %v336 = vmul.f32 %v335, %v207
    %v337 = vmul.f32 %v335, %v208
    %v338 = vmul.f32 %v335, %v209
    %342 = vrot.lane.b32.xlu0 %v336, 126
    %v343 = vpop.permute.xlu0 %342
    %344 = vrot.lane.b32.xlu0 %v337, 126
    %v345 = vpop.permute.xlu0 %344
    %346 = vrot.lane.b32.xlu0 %v338, 126
    %v347 = vpop.permute.xlu0 %346
    %v351 = vadd.f32 %v271, %v343
    %v352 = vadd.f32 %v272, %v345
    %v353 = vadd.f32 %v273, %v347
    %s354 = sld [smem:[#allocation10 + $0x18]]
    %v355 = vstv %s354
    %v356 = vmul.f32 %v355, %v332
    %v357 = vmul.f32 %v355, %v333
    %v358 = vadd.f32 %v278, %v356
    %v359 = vadd.f32 %v279, %v357
    %s360 = sld [smem:[#allocation8 + $0x19]]
    %v361 = vstv %s360
    %v362 = vmul.f32 %v361, %v207
    %v363 = vmul.f32 %v361, %v208
    %v364 = vmul.f32 %v361, %v209
    %368 = vrot.lane.b32.xlu0 %v362, 126
    %v369 = vpop.permute.xlu0 %368
    %370 = vrot.lane.b32.xlu0 %v363, 126
    %v371 = vpop.permute.xlu0 %370
    %372 = vrot.lane.b32.xlu0 %v364, 126
    %v373 = vpop.permute.xlu0 %372
    %v377 = vadd.f32 %v297, %v369
    %v378 = vadd.f32 %v298, %v371
    %v379 = vadd.f32 %v299, %v373
    %s380 = sld [smem:[#allocation10 + $0x19]]
    %v381 = vstv %s380
    %v382 = vmul.f32 %v381, %v332
    %v383 = vmul.f32 %v381, %v333
    %v384 = vadd.f32 %v304, %v382
    %v385 = vadd.f32 %v305, %v383
    %s386 = sld [smem:[#allocation8 + $0x1a]]
    %v387 = vstv %s386
    %v388 = vmul.f32 %v387, %v207
    %v389 = vmul.f32 %v387, %v208
    %v390 = vmul.f32 %v387, %v209
    %394 = vrot.lane.b32.xlu0 %v388, 126
    %v395 = vpop.permute.xlu0 %394
    %396 = vrot.lane.b32.xlu0 %v389, 126
    %v397 = vpop.permute.xlu0 %396
    %398 = vrot.lane.b32.xlu0 %v390, 126
    %v399 = vpop.permute.xlu0 %398
    %v403 = vadd.f32 %v323, %v395
    %v404 = vadd.f32 %v324, %v397
    %v405 = vadd.f32 %v325, %v399
    %s406 = sld [smem:[#allocation10 + $0x1a]]
    %v407 = vstv %s406
    %v408 = vmul.f32 %v407, %v332
    %v409 = vmul.f32 %v407, %v333
    %v410 = vadd.f32 %v330, %v408
    %v411 = vadd.f32 %v331, %v409
    %v412 = vld [vmem:[#allocation2 + $0x3] sm:$0xff]
    %v413 = vld [vmem:[#allocation2 + $0xb] sm:$0xff]
    %s414 = sld [smem:[#allocation8 + $0x24]]
    %v415 = vstv %s414
    %v416 = vmul.f32 %v415, %v207
    %v417 = vmul.f32 %v415, %v208
    %v418 = vmul.f32 %v415, %v209
    %422 = vrot.lane.b32.xlu0 %v416, 125
    %v423 = vpop.permute.xlu0 %422
    %424 = vrot.lane.b32.xlu0 %v417, 125
    %v425 = vpop.permute.xlu0 %424
    %426 = vrot.lane.b32.xlu0 %v418, 125
    %v427 = vpop.permute.xlu0 %426
    %v431 = vadd.f32 %v351, %v423
    %v432 = vadd.f32 %v352, %v425
    %v433 = vadd.f32 %v353, %v427
    %s434 = sld [smem:[#allocation10 + $0x24]]
    %v435 = vstv %s434
    %v436 = vmul.f32 %v435, %v412
    %v437 = vmul.f32 %v435, %v413
    %v438 = vadd.f32 %v358, %v436
    %v439 = vadd.f32 %v359, %v437
    %s440 = sld [smem:[#allocation8 + $0x25]]
    %v441 = vstv %s440
    %v442 = vmul.f32 %v441, %v207
    %v443 = vmul.f32 %v441, %v208
    %v444 = vmul.f32 %v441, %v209
    %448 = vrot.lane.b32.xlu0 %v442, 125
    %v449 = vpop.permute.xlu0 %448
    %450 = vrot.lane.b32.xlu0 %v443, 125
    %v451 = vpop.permute.xlu0 %450
    %452 = vrot.lane.b32.xlu0 %v444, 125
    %v453 = vpop.permute.xlu0 %452
    %v457 = vadd.f32 %v377, %v449
    %v458 = vadd.f32 %v378, %v451
    %v459 = vadd.f32 %v379, %v453
    %s460 = sld [smem:[#allocation10 + $0x25]]
    %v461 = vstv %s460
    %v462 = vmul.f32 %v461, %v412
    %v463 = vmul.f32 %v461, %v413
    %v464 = vadd.f32 %v384, %v462
    %v465 = vadd.f32 %v385, %v463
    %s466 = sld [smem:[#allocation8 + $0x26]]
    %v467 = vstv %s466
    %v468 = vmul.f32 %v467, %v207
    %v469 = vmul.f32 %v467, %v208
    %v470 = vmul.f32 %v467, %v209
    %474 = vrot.lane.b32.xlu0 %v468, 125
    %v475 = vpop.permute.xlu0 %474
    %476 = vrot.lane.b32.xlu0 %v469, 125
    %v477 = vpop.permute.xlu0 %476
    %478 = vrot.lane.b32.xlu0 %v470, 125
    %v479 = vpop.permute.xlu0 %478
    %v483 = vadd.f32 %v403, %v475
    %v484 = vadd.f32 %v404, %v477
    %v485 = vadd.f32 %v405, %v479
    %s486 = sld [smem:[#allocation10 + $0x26]]
    %v487 = vstv %s486
    %v488 = vmul.f32 %v487, %v412
    %v489 = vmul.f32 %v487, %v413
    %v490 = vadd.f32 %v410, %v488
    %v491 = vadd.f32 %v411, %v489
    %v492 = vld [vmem:[#allocation2 + $0x4] sm:$0xff]
    %v493 = vld [vmem:[#allocation2 + $0xc] sm:$0xff]
    %s494 = sld [smem:[#allocation8 + $0x30]]
    %v495 = vstv %s494
    %v496 = vmul.f32 %v495, %v207
    %v497 = vmul.f32 %v495, %v208
    %v498 = vmul.f32 %v495, %v209
    %502 = vrot.lane.b32.xlu0 %v496, 124
    %v503 = vpop.permute.xlu0 %502
    %504 = vrot.lane.b32.xlu0 %v497, 124
    %v505 = vpop.permute.xlu0 %504
    %506 = vrot.lane.b32.xlu0 %v498, 124
    %v507 = vpop.permute.xlu0 %506
    %v511 = vadd.f32 %v431, %v503
    %v512 = vadd.f32 %v432, %v505
    %v513 = vadd.f32 %v433, %v507
    %s514 = sld [smem:[#allocation10 + $0x30]]
    %v515 = vstv %s514
    %v516 = vmul.f32 %v515, %v492
    %v517 = vmul.f32 %v515, %v493
    %v518 = vadd.f32 %v438, %v516
    %v519 = vadd.f32 %v439, %v517
    %s520 = sld [smem:[#allocation8 + $0x31]]
    %v521 = vstv %s520
    %v522 = vmul.f32 %v521, %v207
    %v523 = vmul.f32 %v521, %v208
    %v524 = vmul.f32 %v521, %v209
    %528 = vrot.lane.b32.xlu0 %v522, 124
    %v529 = vpop.permute.xlu0 %528
    %530 = vrot.lane.b32.xlu0 %v523, 124
    %v531 = vpop.permute.xlu0 %530
    %532 = vrot.lane.b32.xlu0 %v524, 124
    %v533 = vpop.permute.xlu0 %532
    %v537 = vadd.f32 %v457, %v529
    %v538 = vadd.f32 %v458, %v531
    %v539 = vadd.f32 %v459, %v533
    %s540 = sld [smem:[#allocation10 + $0x31]]
    %v541 = vstv %s540
    %v542 = vmul.f32 %v541, %v492
    %v543 = vmul.f32 %v541, %v493
    %v544 = vadd.f32 %v464, %v542
    %v545 = vadd.f32 %v465, %v543
    %s546 = sld [smem:[#allocation8 + $0x32]]
    %v547 = vstv %s546
    %v548 = vmul.f32 %v547, %v207
    %v549 = vmul.f32 %v547, %v208
    %v550 = vmul.f32 %v547, %v209
    %554 = vrot.lane.b32.xlu0 %v548, 124
    %v555 = vpop.permute.xlu0 %554
    %556 = vrot.lane.b32.xlu0 %v549, 124
    %v557 = vpop.permute.xlu0 %556
    %558 = vrot.lane.b32.xlu0 %v550, 124
    %v559 = vpop.permute.xlu0 %558
    %v563 = vadd.f32 %v483, %v555
    %v564 = vadd.f32 %v484, %v557
    %v565 = vadd.f32 %v485, %v559
    %s566 = sld [smem:[#allocation10 + $0x32]]
    %v567 = vstv %s566
    %v568 = vmul.f32 %v567, %v492
    %v569 = vmul.f32 %v567, %v493
    %v570 = vadd.f32 %v490, %v568
    %v571 = vadd.f32 %v491, %v569
    %v572 = vld [vmem:[#allocation2 + $0x5] sm:$0xff]
    %v573 = vld [vmem:[#allocation2 + $0xd] sm:$0xff]
    %s574 = sld [smem:[#allocation8 + $0x3c]]
    %v575 = vstv %s574
    %v576 = vmul.f32 %v575, %v207
    %v577 = vmul.f32 %v575, %v208
    %v578 = vmul.f32 %v575, %v209
    %582 = vrot.lane.b32.xlu0 %v576, 123
    %v583 = vpop.permute.xlu0 %582
    %584 = vrot.lane.b32.xlu0 %v577, 123
    %v585 = vpop.permute.xlu0 %584
    %586 = vrot.lane.b32.xlu0 %v578, 123
    %v587 = vpop.permute.xlu0 %586
    %v591 = vadd.f32 %v511, %v583
    %v592 = vadd.f32 %v512, %v585
    %v593 = vadd.f32 %v513, %v587
    %s594 = sld [smem:[#allocation10 + $0x3c]]
    %v595 = vstv %s594
    %v596 = vmul.f32 %v595, %v572
    %v597 = vmul.f32 %v595, %v573
    %v598 = vadd.f32 %v518, %v596
    %v599 = vadd.f32 %v519, %v597
    %s600 = sld [smem:[#allocation8 + $0x3d]]
    %v601 = vstv %s600
    %v602 = vmul.f32 %v601, %v207
    %v603 = vmul.f32 %v601, %v208
    %v604 = vmul.f32 %v601, %v209
    %608 = vrot.lane.b32.xlu0 %v602, 123
    %v609 = vpop.permute.xlu0 %608
    %610 = vrot.lane.b32.xlu0 %v603, 123
    %v611 = vpop.permute.xlu0 %610
    %612 = vrot.lane.b32.xlu0 %v604, 123
    %v613 = vpop.permute.xlu0 %612
    %v617 = vadd.f32 %v537, %v609
    %v618 = vadd.f32 %v538, %v611
    %v619 = vadd.f32 %v539, %v613
    %s620 = sld [smem:[#allocation10 + $0x3d]]
    %v621 = vstv %s620
    %v622 = vmul.f32 %v621, %v572
    %v623 = vmul.f32 %v621, %v573
    %v624 = vadd.f32 %v544, %v622
    %v625 = vadd.f32 %v545, %v623
    %s626 = sld [smem:[#allocation8 + $0x3e]]
    %v627 = vstv %s626
    %v628 = vmul.f32 %v627, %v207
    %v629 = vmul.f32 %v627, %v208
    %v630 = vmul.f32 %v627, %v209
    %634 = vrot.lane.b32.xlu0 %v628, 123
    %v635 = vpop.permute.xlu0 %634
    %636 = vrot.lane.b32.xlu0 %v629, 123
    %v637 = vpop.permute.xlu0 %636
    %638 = vrot.lane.b32.xlu0 %v630, 123
    %v639 = vpop.permute.xlu0 %638
    %v643 = vadd.f32 %v563, %v635
    %v644 = vadd.f32 %v564, %v637
    %v645 = vadd.f32 %v565, %v639
    %s646 = sld [smem:[#allocation10 + $0x3e]]
    %v647 = vstv %s646
    %v648 = vmul.f32 %v647, %v572
    %v649 = vmul.f32 %v647, %v573
    %v650 = vadd.f32 %v570, %v648
    %v651 = vadd.f32 %v571, %v649
    %v652 = vld [vmem:[#allocation2 + $0x6] sm:$0xff]
    %v653 = vld [vmem:[#allocation2 + $0xe] sm:$0xff]
    %s654 = sld [smem:[#allocation8 + $0x48]]
    %v655 = vstv %s654
    %v656 = vmul.f32 %v655, %v207
    %v657 = vmul.f32 %v655, %v208
    %v658 = vmul.f32 %v655, %v209
    %662 = vrot.lane.b32.xlu0 %v656, 122
    %v663 = vpop.permute.xlu0 %662
    %664 = vrot.lane.b32.xlu0 %v657, 122
    %v665 = vpop.permute.xlu0 %664
    %666 = vrot.lane.b32.xlu0 %v658, 122
    %v667 = vpop.permute.xlu0 %666
    %v671 = vadd.f32 %v591, %v663
    %v672 = vadd.f32 %v592, %v665
    %v673 = vadd.f32 %v593, %v667
    %s674 = sld [smem:[#allocation10 + $0x48]]
    %v675 = vstv %s674
    %v676 = vmul.f32 %v675, %v652
    %v677 = vmul.f32 %v675, %v653
    %v678 = vadd.f32 %v598, %v676
    %v679 = vadd.f32 %v599, %v677
    %s680 = sld [smem:[#allocation8 + $0x49]]
    %v681 = vstv %s680
    %v682 = vmul.f32 %v681, %v207
    %v683 = vmul.f32 %v681, %v208
    %v684 = vmul.f32 %v681, %v209
    %688 = vrot.lane.b32.xlu0 %v682, 122
    %v689 = vpop.permute.xlu0 %688
    %690 = vrot.lane.b32.xlu0 %v683, 122
    %v691 = vpop.permute.xlu0 %690
    %692 = vrot.lane.b32.xlu0 %v684, 122
    %v693 = vpop.permute.xlu0 %692
    %v697 = vadd.f32 %v617, %v689
    %v698 = vadd.f32 %v618, %v691
    %v699 = vadd.f32 %v619, %v693
    %s700 = sld [smem:[#allocation10 + $0x49]]
    %v701 = vstv %s700
    %v702 = vmul.f32 %v701, %v652
    %v703 = vmul.f32 %v701, %v653
    %v704 = vadd.f32 %v624, %v702
    %v705 = vadd.f32 %v625, %v703
    %s706 = sld [smem:[#allocation8 + $0x4a]]
    %v707 = vstv %s706
    %v708 = vmul.f32 %v707, %v207
    %v709 = vmul.f32 %v707, %v208
    %v710 = vmul.f32 %v707, %v209
    %714 = vrot.lane.b32.xlu0 %v708, 122
    %v715 = vpop.permute.xlu0 %714
    %716 = vrot.lane.b32.xlu0 %v709, 122
    %v717 = vpop.permute.xlu0 %716
    %718 = vrot.lane.b32.xlu0 %v710, 122
    %v719 = vpop.permute.xlu0 %718
    %v723 = vadd.f32 %v643, %v715
    %v724 = vadd.f32 %v644, %v717
    %v725 = vadd.f32 %v645, %v719
    %s726 = sld [smem:[#allocation10 + $0x4a]]
    %v727 = vstv %s726
    %v728 = vmul.f32 %v727, %v652
    %v729 = vmul.f32 %v727, %v653
    %v730 = vadd.f32 %v650, %v728
    %v731 = vadd.f32 %v651, %v729
    %v732 = vld [vmem:[%s123] sm:$0xff]
    %v733 = vld [vmem:[%s123 + $0x8] sm:$0xff]
    %v734 = vld [vmem:[%s123 + $0x10] sm:$0x3f]
    %s735 = sld [smem:[#allocation8 + $0x3]]
    %v736 = vstv %s735
    %v737 = vmul.f32 %v736, %v732
    %v738 = vmul.f32 %v736, %v733
    %v739 = vmul.f32 %v736, %v734
    %v740 = vadd.f32 %v671, %v737
    %v741 = vadd.f32 %v672, %v738
    %v742 = vadd.f32 %v673, %v739
    %s743 = sld [smem:[#allocation10 + $0x3]]
    %v744 = vstv %s743
    %v745 = vmul.f32 %v744, %v732
    %v746 = vmul.f32 %v744, %v733
    %v747 = vadd.f32 %v678, %v745
    %v748 = vadd.f32 %v679, %v746
    %s749 = sld [smem:[#allocation8 + $0x4]]
    %v750 = vstv %s749
    %v751 = vmul.f32 %v750, %v732
    %v752 = vmul.f32 %v750, %v733
    %v753 = vmul.f32 %v750, %v734
    %v754 = vadd.f32 %v697, %v751
    %v755 = vadd.f32 %v698, %v752
    %v756 = vadd.f32 %v699, %v753
    %s757 = sld [smem:[#allocation10 + $0x4]]
    %v758 = vstv %s757
    %v759 = vmul.f32 %v758, %v732
    %v760 = vmul.f32 %v758, %v733
    %v761 = vadd.f32 %v704, %v759
    %v762 = vadd.f32 %v705, %v760
    %s763 = sld [smem:[#allocation8 + $0x5]]
    %v764 = vstv %s763
    %v765 = vmul.f32 %v764, %v732
    %v766 = vmul.f32 %v764, %v733
    %v767 = vmul.f32 %v764, %v734
    %v768 = vadd.f32 %v723, %v765
    %v769 = vadd.f32 %v724, %v766
    %v770 = vadd.f32 %v725, %v767
    %s771 = sld [smem:[#allocation10 + $0x5]]
    %v772 = vstv %s771
    %v773 = vmul.f32 %v772, %v732
    %v774 = vmul.f32 %v772, %v733
    %v775 = vadd.f32 %v730, %v773
    %v776 = vadd.f32 %v731, %v774
    %v777 = vld [vmem:[%s123 + $0x1] sm:$0xff]
    %v778 = vld [vmem:[%s123 + $0x9] sm:$0xff]
    %s779 = sld [smem:[#allocation8 + $0xf]]
    %v780 = vstv %s779
    %v781 = vmul.f32 %v780, %v732
    %v782 = vmul.f32 %v780, %v733
    %v783 = vmul.f32 %v780, %v734
    %787 = vrot.lane.b32.xlu0 %v781, 127
    %v788 = vpop.permute.xlu0 %787
    %789 = vrot.lane.b32.xlu0 %v782, 127
    %v790 = vpop.permute.xlu0 %789
    %791 = vrot.lane.b32.xlu0 %v783, 127
    %v792 = vpop.permute.xlu0 %791
    %v796 = vadd.f32 %v740, %v788
    %v797 = vadd.f32 %v741, %v790
    %v798 = vadd.f32 %v742, %v792
    %s799 = sld [smem:[#allocation10 + $0xf]]
    %v800 = vstv %s799
    %v801 = vmul.f32 %v800, %v777
    %v802 = vmul.f32 %v800, %v778
    %v803 = vadd.f32 %v747, %v801
    %v804 = vadd.f32 %v748, %v802
    %s805 = sld [smem:[#allocation8 + $0x10]]
    %v806 = vstv %s805
    %v807 = vmul.f32 %v806, %v732
    %v808 = vmul.f32 %v806, %v733
    %v809 = vmul.f32 %v806, %v734
    %813 = vrot.lane.b32.xlu0 %v807, 127
    %v814 = vpop.permute.xlu0 %813
    %815 = vrot.lane.b32.xlu0 %v808, 127
    %v816 = vpop.permute.xlu0 %815
    %817 = vrot.lane.b32.xlu0 %v809, 127
    %v818 = vpop.permute.xlu0 %817
    %v822 = vadd.f32 %v754, %v814
    %v823 = vadd.f32 %v755, %v816
    %v824 = vadd.f32 %v756, %v818
    %s825 = sld [smem:[#allocation10 + $0x10]]
    %v826 = vstv %s825
    %v827 = vmul.f32 %v826, %v777
    %v828 = vmul.f32 %v826, %v778
    %v829 = vadd.f32 %v761, %v827
    %v830 = vadd.f32 %v762, %v828
    %s831 = sld [smem:[#allocation8 + $0x11]]
    %v832 = vstv %s831
    %v833 = vmul.f32 %v832, %v732
    %v834 = vmul.f32 %v832, %v733
    %v835 = vmul.f32 %v832, %v734
    %839 = vrot.lane.b32.xlu0 %v833, 127
    %v840 = vpop.permute.xlu0 %839
    %841 = vrot.lane.b32.xlu0 %v834, 127
    %v842 = vpop.permute.xlu0 %841
    %843 = vrot.lane.b32.xlu0 %v835, 127
    %v844 = vpop.permute.xlu0 %843
    %v848 = vadd.f32 %v768, %v840
    %v849 = vadd.f32 %v769, %v842
    %v850 = vadd.f32 %v770, %v844
    %s851 = sld [smem:[#allocation10 + $0x11]]
    %v852 = vstv %s851
    %v853 = vmul.f32 %v852, %v777
    %v854 = vmul.f32 %v852, %v778
    %v855 = vadd.f32 %v775, %v853
    %v856 = vadd.f32 %v776, %v854
    %v857 = vld [vmem:[%s123 + $0x2] sm:$0xff]
    %v858 = vld [vmem:[%s123 + $0xa] sm:$0xff]
    %s859 = sld [smem:[#allocation8 + $0x1b]]
    %v860 = vstv %s859
    %v861 = vmul.f32 %v860, %v732
    %v862 = vmul.f32 %v860, %v733
    %v863 = vmul.f32 %v860, %v734
    %867 = vrot.lane.b32.xlu0 %v861, 126
    %v868 = vpop.permute.xlu0 %867
    %869 = vrot.lane.b32.xlu0 %v862, 126
    %v870 = vpop.permute.xlu0 %869
    %871 = vrot.lane.b32.xlu0 %v863, 126
    %v872 = vpop.permute.xlu0 %871
    %v876 = vadd.f32 %v796, %v868
    %v877 = vadd.f32 %v797, %v870
    %v878 = vadd.f32 %v798, %v872
    %s879 = sld [smem:[#allocation10 + $0x1b]]
    %v880 = vstv %s879
    %v881 = vmul.f32 %v880, %v857
    %v882 = vmul.f32 %v880, %v858
    %v883 = vadd.f32 %v803, %v881
    %v884 = vadd.f32 %v804, %v882
    %s885 = sld [smem:[#allocation8 + $0x1c]]
    %v886 = vstv %s885
    %v887 = vmul.f32 %v886, %v732
    %v888 = vmul.f32 %v886, %v733
    %v889 = vmul.f32 %v886, %v734
    %893 = vrot.lane.b32.xlu0 %v887, 126
    %v894 = vpop.permute.xlu0 %893
    %895 = vrot.lane.b32.xlu0 %v888, 126
    %v896 = vpop.permute.xlu0 %895
    %897 = vrot.lane.b32.xlu0 %v889, 126
    %v898 = vpop.permute.xlu0 %897
    %v902 = vadd.f32 %v822, %v894
    %v903 = vadd.f32 %v823, %v896
    %v904 = vadd.f32 %v824, %v898
    %s905 = sld [smem:[#allocation10 + $0x1c]]
    %v906 = vstv %s905
    %v907 = vmul.f32 %v906, %v857
    %v908 = vmul.f32 %v906, %v858
    %v909 = vadd.f32 %v829, %v907
    %v910 = vadd.f32 %v830, %v908
    %s911 = sld [smem:[#allocation8 + $0x1d]]
    %v912 = vstv %s911
    %v913 = vmul.f32 %v912, %v732
    %v914 = vmul.f32 %v912, %v733
    %v915 = vmul.f32 %v912, %v734
    %919 = vrot.lane.b32.xlu0 %v913, 126
    %v920 = vpop.permute.xlu0 %919
    %921 = vrot.lane.b32.xlu0 %v914, 126
    %v922 = vpop.permute.xlu0 %921
    %923 = vrot.lane.b32.xlu0 %v915, 126
    %v924 = vpop.permute.xlu0 %923
    %v928 = vadd.f32 %v848, %v920
    %v929 = vadd.f32 %v849, %v922
    %v930 = vadd.f32 %v850, %v924
    %s931 = sld [smem:[#allocation10 + $0x1d]]
    %v932 = vstv %s931
    %v933 = vmul.f32 %v932, %v857
    %v934 = vmul.f32 %v932, %v858
    %v935 = vadd.f32 %v855, %v933
    %v936 = vadd.f32 %v856, %v934
    %v937 = vld [vmem:[%s123 + $0x3] sm:$0xff]
    %v938 = vld [vmem:[%s123 + $0xb] sm:$0xff]
    %s939 = sld [smem:[#allocation8 + $0x27]]
    %v940 = vstv %s939
    %v941 = vmul.f32 %v940, %v732
    %v942 = vmul.f32 %v940, %v733
    %v943 = vmul.f32 %v940, %v734
    %947 = vrot.lane.b32.xlu0 %v941, 125
    %v948 = vpop.permute.xlu0 %947
    %949 = vrot.lane.b32.xlu0 %v942, 125
    %v950 = vpop.permute.xlu0 %949
    %951 = vrot.lane.b32.xlu0 %v943, 125
    %v952 = vpop.permute.xlu0 %951
    %v956 = vadd.f32 %v876, %v948
    %v957 = vadd.f32 %v877, %v950
    %v958 = vadd.f32 %v878, %v952
    %s959 = sld [smem:[#allocation10 + $0x27]]
    %v960 = vstv %s959
    %v961 = vmul.f32 %v960, %v937
    %v962 = vmul.f32 %v960, %v938
    %v963 = vadd.f32 %v883, %v961
    %v964 = vadd.f32 %v884, %v962
    %s965 = sld [smem:[#allocation8 + $0x28]]
    %v966 = vstv %s965
    %v967 = vmul.f32 %v966, %v732
    %v968 = vmul.f32 %v966, %v733
    %v969 = vmul.f32 %v966, %v734
    %973 = vrot.lane.b32.xlu0 %v967, 125
    %v974 = vpop.permute.xlu0 %973
    %975 = vrot.lane.b32.xlu0 %v968, 125
    %v976 = vpop.permute.xlu0 %975
    %977 = vrot.lane.b32.xlu0 %v969, 125
    %v978 = vpop.permute.xlu0 %977
    %v982 = vadd.f32 %v902, %v974
    %v983 = vadd.f32 %v903, %v976
    %v984 = vadd.f32 %v904, %v978
    %s985 = sld [smem:[#allocation10 + $0x28]]
    %v986 = vstv %s985
    %v987 = vmul.f32 %v986, %v937
    %v988 = vmul.f32 %v986, %v938
    %v989 = vadd.f32 %v909, %v987
    %v990 = vadd.f32 %v910, %v988
    %s991 = sld [smem:[#allocation8 + $0x29]]
    %v992 = vstv %s991
    %v993 = vmul.f32 %v992, %v732
    %v994 = vmul.f32 %v992, %v733
    %v995 = vmul.f32 %v992, %v734
    %999 = vrot.lane.b32.xlu0 %v993, 125
    %v1000 = vpop.permute.xlu0 %999
    %1001 = vrot.lane.b32.xlu0 %v994, 125
    %v1002 = vpop.permute.xlu0 %1001
    %1003 = vrot.lane.b32.xlu0 %v995, 125
    %v1004 = vpop.permute.xlu0 %1003
    %v1008 = vadd.f32 %v928, %v1000
    %v1009 = vadd.f32 %v929, %v1002
    %v1010 = vadd.f32 %v930, %v1004
    %s1011 = sld [smem:[#allocation10 + $0x29]]
    %v1012 = vstv %s1011
    %v1013 = vmul.f32 %v1012, %v937
    %v1014 = vmul.f32 %v1012, %v938
    %v1015 = vadd.f32 %v935, %v1013
    %v1016 = vadd.f32 %v936, %v1014
    %v1017 = vld [vmem:[%s123 + $0x4] sm:$0xff]
    %v1018 = vld [vmem:[%s123 + $0xc] sm:$0xff]
    %s1019 = sld [smem:[#allocation8 + $0x33]]
    %v1020 = vstv %s1019
    %v1021 = vmul.f32 %v1020, %v732
    %v1022 = vmul.f32 %v1020, %v733
    %v1023 = vmul.f32 %v1020, %v734
    %1027 = vrot.lane.b32.xlu0 %v1021, 124
    %v1028 = vpop.permute.xlu0 %1027
    %1029 = vrot.lane.b32.xlu0 %v1022, 124
    %v1030 = vpop.permute.xlu0 %1029
    %1031 = vrot.lane.b32.xlu0 %v1023, 124
    %v1032 = vpop.permute.xlu0 %1031
    %v1036 = vadd.f32 %v956, %v1028
    %v1037 = vadd.f32 %v957, %v1030
    %v1038 = vadd.f32 %v958, %v1032
    %s1039 = sld [smem:[#allocation10 + $0x33]]
    %v1040 = vstv %s1039
    %v1041 = vmul.f32 %v1040, %v1017
    %v1042 = vmul.f32 %v1040, %v1018
    %v1043 = vadd.f32 %v963, %v1041
    %v1044 = vadd.f32 %v964, %v1042
    %s1045 = sld [smem:[#allocation8 + $0x34]]
    %v1046 = vstv %s1045
    %v1047 = vmul.f32 %v1046, %v732
    %v1048 = vmul.f32 %v1046, %v733
    %v1049 = vmul.f32 %v1046, %v734
    %1053 = vrot.lane.b32.xlu0 %v1047, 124
    %v1054 = vpop.permute.xlu0 %1053
    %1055 = vrot.lane.b32.xlu0 %v1048, 124
    %v1056 = vpop.permute.xlu0 %1055
    %1057 = vrot.lane.b32.xlu0 %v1049, 124
    %v1058 = vpop.permute.xlu0 %1057
    %v1062 = vadd.f32 %v982, %v1054
    %v1063 = vadd.f32 %v983, %v1056
    %v1064 = vadd.f32 %v984, %v1058
    %s1065 = sld [smem:[#allocation10 + $0x34]]
    %v1066 = vstv %s1065
    %v1067 = vmul.f32 %v1066, %v1017
    %v1068 = vmul.f32 %v1066, %v1018
    %v1069 = vadd.f32 %v989, %v1067
    %v1070 = vadd.f32 %v990, %v1068
    %s1071 = sld [smem:[#allocation8 + $0x35]]
    %v1072 = vstv %s1071
    %v1073 = vmul.f32 %v1072, %v732
    %v1074 = vmul.f32 %v1072, %v733
    %v1075 = vmul.f32 %v1072, %v734
    %1079 = vrot.lane.b32.xlu0 %v1073, 124
    %v1080 = vpop.permute.xlu0 %1079
    %1081 = vrot.lane.b32.xlu0 %v1074, 124
    %v1082 = vpop.permute.xlu0 %1081
    %1083 = vrot.lane.b32.xlu0 %v1075, 124
    %v1084 = vpop.permute.xlu0 %1083
    %v1088 = vadd.f32 %v1008, %v1080
    %v1089 = vadd.f32 %v1009, %v1082
    %v1090 = vadd.f32 %v1010, %v1084
    %s1091 = sld [smem:[#allocation10 + $0x35]]
    %v1092 = vstv %s1091
    %v1093 = vmul.f32 %v1092, %v1017
    %v1094 = vmul.f32 %v1092, %v1018
    %v1095 = vadd.f32 %v1015, %v1093
    %v1096 = vadd.f32 %v1016, %v1094
    %v1097 = vld [vmem:[%s123 + $0x5] sm:$0xff]
    %v1098 = vld [vmem:[%s123 + $0xd] sm:$0xff]
    %s1099 = sld [smem:[#allocation8 + $0x3f]]
    %v1100 = vstv %s1099
    %v1101 = vmul.f32 %v1100, %v732
    %v1102 = vmul.f32 %v1100, %v733
    %v1103 = vmul.f32 %v1100, %v734
    %1107 = vrot.lane.b32.xlu0 %v1101, 123
    %v1108 = vpop.permute.xlu0 %1107
    %1109 = vrot.lane.b32.xlu0 %v1102, 123
    %v1110 = vpop.permute.xlu0 %1109
    %1111 = vrot.lane.b32.xlu0 %v1103, 123
    %v1112 = vpop.permute.xlu0 %1111
    %v1116 = vadd.f32 %v1036, %v1108
    %v1117 = vadd.f32 %v1037, %v1110
    %v1118 = vadd.f32 %v1038, %v1112
    %s1119 = sld [smem:[#allocation10 + $0x3f]]
    %v1120 = vstv %s1119
    %v1121 = vmul.f32 %v1120, %v1097
    %v1122 = vmul.f32 %v1120, %v1098
    %v1123 = vadd.f32 %v1043, %v1121
    %v1124 = vadd.f32 %v1044, %v1122
    %s1125 = sld [smem:[#allocation8 + $0x40]]
    %v1126 = vstv %s1125
    %v1127 = vmul.f32 %v1126, %v732
    %v1128 = vmul.f32 %v1126, %v733
    %v1129 = vmul.f32 %v1126, %v734
    %1133 = vrot.lane.b32.xlu0 %v1127, 123
    %v1134 = vpop.permute.xlu0 %1133
    %1135 = vrot.lane.b32.xlu0 %v1128, 123
    %v1136 = vpop.permute.xlu0 %1135
    %1137 = vrot.lane.b32.xlu0 %v1129, 123
    %v1138 = vpop.permute.xlu0 %1137
    %v1142 = vadd.f32 %v1062, %v1134
    %v1143 = vadd.f32 %v1063, %v1136
    %v1144 = vadd.f32 %v1064, %v1138
    %s1145 = sld [smem:[#allocation10 + $0x40]]
    %v1146 = vstv %s1145
    %v1147 = vmul.f32 %v1146, %v1097
    %v1148 = vmul.f32 %v1146, %v1098
    %v1149 = vadd.f32 %v1069, %v1147
    %v1150 = vadd.f32 %v1070, %v1148
    %s1151 = sld [smem:[#allocation8 + $0x41]]
    %v1152 = vstv %s1151
    %v1153 = vmul.f32 %v1152, %v732
    %v1154 = vmul.f32 %v1152, %v733
    %v1155 = vmul.f32 %v1152, %v734
    %1159 = vrot.lane.b32.xlu0 %v1153, 123
    %v1160 = vpop.permute.xlu0 %1159
    %1161 = vrot.lane.b32.xlu0 %v1154, 123
    %v1162 = vpop.permute.xlu0 %1161
    %1163 = vrot.lane.b32.xlu0 %v1155, 123
    %v1164 = vpop.permute.xlu0 %1163
    %v1168 = vadd.f32 %v1088, %v1160
    %v1169 = vadd.f32 %v1089, %v1162
    %v1170 = vadd.f32 %v1090, %v1164
    %s1171 = sld [smem:[#allocation10 + $0x41]]
    %v1172 = vstv %s1171
    %v1173 = vmul.f32 %v1172, %v1097
    %v1174 = vmul.f32 %v1172, %v1098
    %v1175 = vadd.f32 %v1095, %v1173
    %v1176 = vadd.f32 %v1096, %v1174
    %v1177 = vld [vmem:[%s123 + $0x6] sm:$0xff]
    %v1178 = vld [vmem:[%s123 + $0xe] sm:$0xff]
    %s1179 = sld [smem:[#allocation8 + $0x4b]]
    %v1180 = vstv %s1179
    %v1181 = vmul.f32 %v1180, %v732
    %v1182 = vmul.f32 %v1180, %v733
    %v1183 = vmul.f32 %v1180, %v734
    %1187 = vrot.lane.b32.xlu0 %v1181, 122
    %v1188 = vpop.permute.xlu0 %1187
    %1189 = vrot.lane.b32.xlu0 %v1182, 122
    %v1190 = vpop.permute.xlu0 %1189
    %1191 = vrot.lane.b32.xlu0 %v1183, 122
    %v1192 = vpop.permute.xlu0 %1191
    %v1196 = vadd.f32 %v1116, %v1188
    %v1197 = vadd.f32 %v1117, %v1190
    %v1198 = vadd.f32 %v1118, %v1192
    %s1199 = sld [smem:[#allocation10 + $0x4b]]
    %v1200 = vstv %s1199
    %v1201 = vmul.f32 %v1200, %v1177
    %v1202 = vmul.f32 %v1200, %v1178
    %v1203 = vadd.f32 %v1123, %v1201
    %v1204 = vadd.f32 %v1124, %v1202
    %s1205 = sld [smem:[#allocation8 + $0x4c]]
    %v1206 = vstv %s1205
    %v1207 = vmul.f32 %v1206, %v732
    %v1208 = vmul.f32 %v1206, %v733
    %v1209 = vmul.f32 %v1206, %v734
    %1213 = vrot.lane.b32.xlu0 %v1207, 122
    %v1214 = vpop.permute.xlu0 %1213
    %1215 = vrot.lane.b32.xlu0 %v1208, 122
    %v1216 = vpop.permute.xlu0 %1215
    %1217 = vrot.lane.b32.xlu0 %v1209, 122
    %v1218 = vpop.permute.xlu0 %1217
    %v1222 = vadd.f32 %v1142, %v1214
    %v1223 = vadd.f32 %v1143, %v1216
    %v1224 = vadd.f32 %v1144, %v1218
    %s1225 = sld [smem:[#allocation10 + $0x4c]]
    %v1226 = vstv %s1225
    %v1227 = vmul.f32 %v1226, %v1177
    %v1228 = vmul.f32 %v1226, %v1178
    %v1229 = vadd.f32 %v1149, %v1227
    %v1230 = vadd.f32 %v1150, %v1228
    %s1231 = sld [smem:[#allocation8 + $0x4d]]
    %v1232 = vstv %s1231
    %v1233 = vmul.f32 %v1232, %v732
    %v1234 = vmul.f32 %v1232, %v733
    %v1235 = vmul.f32 %v1232, %v734
    %1239 = vrot.lane.b32.xlu0 %v1233, 122
    %v1240 = vpop.permute.xlu0 %1239
    %1241 = vrot.lane.b32.xlu0 %v1234, 122
    %v1242 = vpop.permute.xlu0 %1241
    %1243 = vrot.lane.b32.xlu0 %v1235, 122
    %v1244 = vpop.permute.xlu0 %1243
    %v1248 = vadd.f32 %v1168, %v1240
    %v1249 = vadd.f32 %v1169, %v1242
    %v1250 = vadd.f32 %v1170, %v1244
    %s1251 = sld [smem:[#allocation10 + $0x4d]]
    %v1252 = vstv %s1251
    %v1253 = vmul.f32 %v1252, %v1177
    %v1254 = vmul.f32 %v1252, %v1178
    %v1255 = vadd.f32 %v1175, %v1253
    %v1256 = vadd.f32 %v1176, %v1254
    %v1257 = vld [vmem:[%s137] sm:$0xff]
    %v1258 = vld [vmem:[%s137 + $0x8] sm:$0xff]
    %v1259 = vld [vmem:[%s137 + $0x10] sm:$0x3f]
    %s1260 = sld [smem:[#allocation8 + $0x6]]
    %v1261 = vstv %s1260
    %v1262 = vmul.f32 %v1261, %v1257
    %v1263 = vmul.f32 %v1261, %v1258
    %v1264 = vmul.f32 %v1261, %v1259
    %v1265 = vadd.f32 %v1196, %v1262
    %v1266 = vadd.f32 %v1197, %v1263
    %v1267 = vadd.f32 %v1198, %v1264
    %s1268 = sld [smem:[#allocation10 + $0x6]]
    %v1269 = vstv %s1268
    %v1270 = vmul.f32 %v1269, %v1257
    %v1271 = vmul.f32 %v1269, %v1258
    %v1272 = vadd.f32 %v1203, %v1270
    %v1273 = vadd.f32 %v1204, %v1271
    %s1274 = sld [smem:[#allocation8 + $0x7]]
    %v1275 = vstv %s1274
    %v1276 = vmul.f32 %v1275, %v1257
    %v1277 = vmul.f32 %v1275, %v1258
    %v1278 = vmul.f32 %v1275, %v1259
    %v1279 = vadd.f32 %v1222, %v1276
    %v1280 = vadd.f32 %v1223, %v1277
    %v1281 = vadd.f32 %v1224, %v1278
    %s1282 = sld [smem:[#allocation10 + $0x7]]
    %v1283 = vstv %s1282
    %v1284 = vmul.f32 %v1283, %v1257
    %v1285 = vmul.f32 %v1283, %v1258
    %v1286 = vadd.f32 %v1229, %v1284
    %v1287 = vadd.f32 %v1230, %v1285
    %s1288 = sld [smem:[#allocation8 + $0x8]]
    %v1289 = vstv %s1288
    %v1290 = vmul.f32 %v1289, %v1257
    %v1291 = vmul.f32 %v1289, %v1258
    %v1292 = vmul.f32 %v1289, %v1259
    %v1293 = vadd.f32 %v1248, %v1290
    %v1294 = vadd.f32 %v1249, %v1291
    %v1295 = vadd.f32 %v1250, %v1292
    %s1296 = sld [smem:[#allocation10 + $0x8]]
    %v1297 = vstv %s1296
    %v1298 = vmul.f32 %v1297, %v1257
    %v1299 = vmul.f32 %v1297, %v1258
    %v1300 = vadd.f32 %v1255, %v1298
    %v1301 = vadd.f32 %v1256, %v1299
    %v1302 = vld [vmem:[%s137 + $0x1] sm:$0xff]
    %v1303 = vld [vmem:[%s137 + $0x9] sm:$0xff]
    %s1304 = sld [smem:[#allocation8 + $0x12]]
    %v1305 = vstv %s1304
    %v1306 = vmul.f32 %v1305, %v1257
    %v1307 = vmul.f32 %v1305, %v1258
    %v1308 = vmul.f32 %v1305, %v1259
    %1312 = vrot.lane.b32.xlu0 %v1306, 127
    %v1313 = vpop.permute.xlu0 %1312
    %1314 = vrot.lane.b32.xlu0 %v1307, 127
    %v1315 = vpop.permute.xlu0 %1314
    %1316 = vrot.lane.b32.xlu0 %v1308, 127
    %v1317 = vpop.permute.xlu0 %1316
    %v1321 = vadd.f32 %v1265, %v1313
    %v1322 = vadd.f32 %v1266, %v1315
    %v1323 = vadd.f32 %v1267, %v1317
    %s1324 = sld [smem:[#allocation10 + $0x12]]
    %v1325 = vstv %s1324
    %v1326 = vmul.f32 %v1325, %v1302
    %v1327 = vmul.f32 %v1325, %v1303
    %v1328 = vadd.f32 %v1272, %v1326
    %v1329 = vadd.f32 %v1273, %v1327
    %s1330 = sld [smem:[#allocation8 + $0x13]]
    %v1331 = vstv %s1330
    %v1332 = vmul.f32 %v1331, %v1257
    %v1333 = vmul.f32 %v1331, %v1258
    %v1334 = vmul.f32 %v1331, %v1259
    %1338 = vrot.lane.b32.xlu0 %v1332, 127
    %v1339 = vpop.permute.xlu0 %1338
    %1340 = vrot.lane.b32.xlu0 %v1333, 127
    %v1341 = vpop.permute.xlu0 %1340
    %1342 = vrot.lane.b32.xlu0 %v1334, 127
    %v1343 = vpop.permute.xlu0 %1342
    %v1347 = vadd.f32 %v1279, %v1339
    %v1348 = vadd.f32 %v1280, %v1341
    %v1349 = vadd.f32 %v1281, %v1343
    %s1350 = sld [smem:[#allocation10 + $0x13]]
    %v1351 = vstv %s1350
    %v1352 = vmul.f32 %v1351, %v1302
    %v1353 = vmul.f32 %v1351, %v1303
    %v1354 = vadd.f32 %v1286, %v1352
    %v1355 = vadd.f32 %v1287, %v1353
    %s1356 = sld [smem:[#allocation8 + $0x14]]
    %v1357 = vstv %s1356
    %v1358 = vmul.f32 %v1357, %v1257
    %v1359 = vmul.f32 %v1357, %v1258
    %v1360 = vmul.f32 %v1357, %v1259
    %1364 = vrot.lane.b32.xlu0 %v1358, 127
    %v1365 = vpop.permute.xlu0 %1364
    %1366 = vrot.lane.b32.xlu0 %v1359, 127
    %v1367 = vpop.permute.xlu0 %1366
    %1368 = vrot.lane.b32.xlu0 %v1360, 127
    %v1369 = vpop.permute.xlu0 %1368
    %v1373 = vadd.f32 %v1293, %v1365
    %v1374 = vadd.f32 %v1294, %v1367
    %v1375 = vadd.f32 %v1295, %v1369
    %s1376 = sld [smem:[#allocation10 + $0x14]]
    %v1377 = vstv %s1376
    %v1378 = vmul.f32 %v1377, %v1302
    %v1379 = vmul.f32 %v1377, %v1303
    %v1380 = vadd.f32 %v1300, %v1378
    %v1381 = vadd.f32 %v1301, %v1379
    %v1382 = vld [vmem:[%s137 + $0x2] sm:$0xff]
    %v1383 = vld [vmem:[%s137 + $0xa] sm:$0xff]
    %s1384 = sld [smem:[#allocation8 + $0x1e]]
    %v1385 = vstv %s1384
    %v1386 = vmul.f32 %v1385, %v1257
    %v1387 = vmul.f32 %v1385, %v1258
    %v1388 = vmul.f32 %v1385, %v1259
    %1392 = vrot.lane.b32.xlu0 %v1386, 126
    %v1393 = vpop.permute.xlu0 %1392
    %1394 = vrot.lane.b32.xlu0 %v1387, 126
    %v1395 = vpop.permute.xlu0 %1394
    %1396 = vrot.lane.b32.xlu0 %v1388, 126
    %v1397 = vpop.permute.xlu0 %1396
    %v1401 = vadd.f32 %v1321, %v1393
    %v1402 = vadd.f32 %v1322, %v1395
    %v1403 = vadd.f32 %v1323, %v1397
    %s1404 = sld [smem:[#allocation10 + $0x1e]]
    %v1405 = vstv %s1404
    %v1406 = vmul.f32 %v1405, %v1382
    %v1407 = vmul.f32 %v1405, %v1383
    %v1408 = vadd.f32 %v1328, %v1406
    %v1409 = vadd.f32 %v1329, %v1407
    %s1410 = sld [smem:[#allocation8 + $0x1f]]
    %v1411 = vstv %s1410
    %v1412 = vmul.f32 %v1411, %v1257
    %v1413 = vmul.f32 %v1411, %v1258
    %v1414 = vmul.f32 %v1411, %v1259
    %1418 = vrot.lane.b32.xlu0 %v1412, 126
    %v1419 = vpop.permute.xlu0 %1418
    %1420 = vrot.lane.b32.xlu0 %v1413, 126
    %v1421 = vpop.permute.xlu0 %1420
    %1422 = vrot.lane.b32.xlu0 %v1414, 126
    %v1423 = vpop.permute.xlu0 %1422
    %v1427 = vadd.f32 %v1347, %v1419
    %v1428 = vadd.f32 %v1348, %v1421
    %v1429 = vadd.f32 %v1349, %v1423
    %s1430 = sld [smem:[#allocation10 + $0x1f]]
    %v1431 = vstv %s1430
    %v1432 = vmul.f32 %v1431, %v1382
    %v1433 = vmul.f32 %v1431, %v1383
    %v1434 = vadd.f32 %v1354, %v1432
    %v1435 = vadd.f32 %v1355, %v1433
    %s1436 = sld [smem:[#allocation8 + $0x20]]
    %v1437 = vstv %s1436
    %v1438 = vmul.f32 %v1437, %v1257
    %v1439 = vmul.f32 %v1437, %v1258
    %v1440 = vmul.f32 %v1437, %v1259
    %1444 = vrot.lane.b32.xlu0 %v1438, 126
    %v1445 = vpop.permute.xlu0 %1444
    %1446 = vrot.lane.b32.xlu0 %v1439, 126
    %v1447 = vpop.permute.xlu0 %1446
    %1448 = vrot.lane.b32.xlu0 %v1440, 126
    %v1449 = vpop.permute.xlu0 %1448
    %v1453 = vadd.f32 %v1373, %v1445
    %v1454 = vadd.f32 %v1374, %v1447
    %v1455 = vadd.f32 %v1375, %v1449
    %s1456 = sld [smem:[#allocation10 + $0x20]]
    %v1457 = vstv %s1456
    %v1458 = vmul.f32 %v1457, %v1382
    %v1459 = vmul.f32 %v1457, %v1383
    %v1460 = vadd.f32 %v1380, %v1458
    %v1461 = vadd.f32 %v1381, %v1459
    %v1462 = vld [vmem:[%s137 + $0x3] sm:$0xff]
    %v1463 = vld [vmem:[%s137 + $0xb] sm:$0xff]
    %s1464 = sld [smem:[#allocation8 + $0x2a]]
    %v1465 = vstv %s1464
    %v1466 = vmul.f32 %v1465, %v1257
    %v1467 = vmul.f32 %v1465, %v1258
    %v1468 = vmul.f32 %v1465, %v1259
    %1472 = vrot.lane.b32.xlu0 %v1466, 125
    %v1473 = vpop.permute.xlu0 %1472
    %1474 = vrot.lane.b32.xlu0 %v1467, 125
    %v1475 = vpop.permute.xlu0 %1474
    %1476 = vrot.lane.b32.xlu0 %v1468, 125
    %v1477 = vpop.permute.xlu0 %1476
    %v1481 = vadd.f32 %v1401, %v1473
    %v1482 = vadd.f32 %v1402, %v1475
    %v1483 = vadd.f32 %v1403, %v1477
    %s1484 = sld [smem:[#allocation10 + $0x2a]]
    %v1485 = vstv %s1484
    %v1486 = vmul.f32 %v1485, %v1462
    %v1487 = vmul.f32 %v1485, %v1463
    %v1488 = vadd.f32 %v1408, %v1486
    %v1489 = vadd.f32 %v1409, %v1487
    %s1490 = sld [smem:[#allocation8 + $0x2b]]
    %v1491 = vstv %s1490
    %v1492 = vmul.f32 %v1491, %v1257
    %v1493 = vmul.f32 %v1491, %v1258
    %v1494 = vmul.f32 %v1491, %v1259
    %1498 = vrot.lane.b32.xlu0 %v1492, 125
    %v1499 = vpop.permute.xlu0 %1498
    %1500 = vrot.lane.b32.xlu0 %v1493, 125
    %v1501 = vpop.permute.xlu0 %1500
    %1502 = vrot.lane.b32.xlu0 %v1494, 125
    %v1503 = vpop.permute.xlu0 %1502
    %v1507 = vadd.f32 %v1427, %v1499
    %v1508 = vadd.f32 %v1428, %v1501
    %v1509 = vadd.f32 %v1429, %v1503
    %s1510 = sld [smem:[#allocation10 + $0x2b]]
    %v1511 = vstv %s1510
    %v1512 = vmul.f32 %v1511, %v1462
    %v1513 = vmul.f32 %v1511, %v1463
    %v1514 = vadd.f32 %v1434, %v1512
    %v1515 = vadd.f32 %v1435, %v1513
    %s1516 = sld [smem:[#allocation8 + $0x2c]]
    %v1517 = vstv %s1516
    %v1518 = vmul.f32 %v1517, %v1257
    %v1519 = vmul.f32 %v1517, %v1258
    %v1520 = vmul.f32 %v1517, %v1259
    %1524 = vrot.lane.b32.xlu0 %v1518, 125
    %v1525 = vpop.permute.xlu0 %1524
    %1526 = vrot.lane.b32.xlu0 %v1519, 125
    %v1527 = vpop.permute.xlu0 %1526
    %1528 = vrot.lane.b32.xlu0 %v1520, 125
    %v1529 = vpop.permute.xlu0 %1528
    %v1533 = vadd.f32 %v1453, %v1525
    %v1534 = vadd.f32 %v1454, %v1527
    %v1535 = vadd.f32 %v1455, %v1529
    %s1536 = sld [smem:[#allocation10 + $0x2c]]
    %v1537 = vstv %s1536
    %v1538 = vmul.f32 %v1537, %v1462
    %v1539 = vmul.f32 %v1537, %v1463
    %v1540 = vadd.f32 %v1460, %v1538
    %v1541 = vadd.f32 %v1461, %v1539
    %v1542 = vld [vmem:[%s137 + $0x4] sm:$0xff]
    %v1543 = vld [vmem:[%s137 + $0xc] sm:$0xff]
    %s1544 = sld [smem:[#allocation8 + $0x36]]
    %v1545 = vstv %s1544
    %v1546 = vmul.f32 %v1545, %v1257
    %v1547 = vmul.f32 %v1545, %v1258
    %v1548 = vmul.f32 %v1545, %v1259
    %1552 = vrot.lane.b32.xlu0 %v1546, 124
    %v1553 = vpop.permute.xlu0 %1552
    %1554 = vrot.lane.b32.xlu0 %v1547, 124
    %v1555 = vpop.permute.xlu0 %1554
    %1556 = vrot.lane.b32.xlu0 %v1548, 124
    %v1557 = vpop.permute.xlu0 %1556
    %v1561 = vadd.f32 %v1481, %v1553
    %v1562 = vadd.f32 %v1482, %v1555
    %v1563 = vadd.f32 %v1483, %v1557
    %s1564 = sld [smem:[#allocation10 + $0x36]]
    %v1565 = vstv %s1564
    %v1566 = vmul.f32 %v1565, %v1542
    %v1567 = vmul.f32 %v1565, %v1543
    %v1568 = vadd.f32 %v1488, %v1566
    %v1569 = vadd.f32 %v1489, %v1567
    %s1570 = sld [smem:[#allocation8 + $0x37]]
    %v1571 = vstv %s1570
    %v1572 = vmul.f32 %v1571, %v1257
    %v1573 = vmul.f32 %v1571, %v1258
    %v1574 = vmul.f32 %v1571, %v1259
    %1578 = vrot.lane.b32.xlu0 %v1572, 124
    %v1579 = vpop.permute.xlu0 %1578
    %1580 = vrot.lane.b32.xlu0 %v1573, 124
    %v1581 = vpop.permute.xlu0 %1580
    %1582 = vrot.lane.b32.xlu0 %v1574, 124
    %v1583 = vpop.permute.xlu0 %1582
    %v1587 = vadd.f32 %v1507, %v1579
    %v1588 = vadd.f32 %v1508, %v1581
    %v1589 = vadd.f32 %v1509, %v1583
    %s1590 = sld [smem:[#allocation10 + $0x37]]
    %v1591 = vstv %s1590
    %v1592 = vmul.f32 %v1591, %v1542
    %v1593 = vmul.f32 %v1591, %v1543
    %v1594 = vadd.f32 %v1514, %v1592
    %v1595 = vadd.f32 %v1515, %v1593
    %s1596 = sld [smem:[#allocation8 + $0x38]]
    %v1597 = vstv %s1596
    %v1598 = vmul.f32 %v1597, %v1257
    %v1599 = vmul.f32 %v1597, %v1258
    %v1600 = vmul.f32 %v1597, %v1259
    %1604 = vrot.lane.b32.xlu0 %v1598, 124
    %v1605 = vpop.permute.xlu0 %1604
    %1606 = vrot.lane.b32.xlu0 %v1599, 124
    %v1607 = vpop.permute.xlu0 %1606
    %1608 = vrot.lane.b32.xlu0 %v1600, 124
    %v1609 = vpop.permute.xlu0 %1608
    %v1613 = vadd.f32 %v1533, %v1605
    %v1614 = vadd.f32 %v1534, %v1607
    %v1615 = vadd.f32 %v1535, %v1609
    %s1616 = sld [smem:[#allocation10 + $0x38]]
    %v1617 = vstv %s1616
    %v1618 = vmul.f32 %v1617, %v1542
    %v1619 = vmul.f32 %v1617, %v1543
    %v1620 = vadd.f32 %v1540, %v1618
    %v1621 = vadd.f32 %v1541, %v1619
    %v1622 = vld [vmem:[%s137 + $0x5] sm:$0xff]
    %v1623 = vld [vmem:[%s137 + $0xd] sm:$0xff]
    %s1624 = sld [smem:[#allocation8 + $0x42]]
    %v1625 = vstv %s1624
    %v1626 = vmul.f32 %v1625, %v1257
    %v1627 = vmul.f32 %v1625, %v1258
    %v1628 = vmul.f32 %v1625, %v1259
    %1632 = vrot.lane.b32.xlu0 %v1626, 123
    %v1633 = vpop.permute.xlu0 %1632
    %1634 = vrot.lane.b32.xlu0 %v1627, 123
    %v1635 = vpop.permute.xlu0 %1634
    %1636 = vrot.lane.b32.xlu0 %v1628, 123
    %v1637 = vpop.permute.xlu0 %1636
    %v1641 = vadd.f32 %v1561, %v1633
    %v1642 = vadd.f32 %v1562, %v1635
    %v1643 = vadd.f32 %v1563, %v1637
    %s1644 = sld [smem:[#allocation10 + $0x42]]
    %v1645 = vstv %s1644
    %v1646 = vmul.f32 %v1645, %v1622
    %v1647 = vmul.f32 %v1645, %v1623
    %v1648 = vadd.f32 %v1568, %v1646
    %v1649 = vadd.f32 %v1569, %v1647
    %s1650 = sld [smem:[#allocation8 + $0x43]]
    %v1651 = vstv %s1650
    %v1652 = vmul.f32 %v1651, %v1257
    %v1653 = vmul.f32 %v1651, %v1258
    %v1654 = vmul.f32 %v1651, %v1259
    %1658 = vrot.lane.b32.xlu0 %v1652, 123
    %v1659 = vpop.permute.xlu0 %1658
    %1660 = vrot.lane.b32.xlu0 %v1653, 123
    %v1661 = vpop.permute.xlu0 %1660
    %1662 = vrot.lane.b32.xlu0 %v1654, 123
    %v1663 = vpop.permute.xlu0 %1662
    %v1667 = vadd.f32 %v1587, %v1659
    %v1668 = vadd.f32 %v1588, %v1661
    %v1669 = vadd.f32 %v1589, %v1663
    %s1670 = sld [smem:[#allocation10 + $0x43]]
    %v1671 = vstv %s1670
    %v1672 = vmul.f32 %v1671, %v1622
    %v1673 = vmul.f32 %v1671, %v1623
    %v1674 = vadd.f32 %v1594, %v1672
    %v1675 = vadd.f32 %v1595, %v1673
    %s1676 = sld [smem:[#allocation8 + $0x44]]
    %v1677 = vstv %s1676
    %v1678 = vmul.f32 %v1677, %v1257
    %v1679 = vmul.f32 %v1677, %v1258
    %v1680 = vmul.f32 %v1677, %v1259
    %1684 = vrot.lane.b32.xlu0 %v1678, 123
    %v1685 = vpop.permute.xlu0 %1684
    %1686 = vrot.lane.b32.xlu0 %v1679, 123
    %v1687 = vpop.permute.xlu0 %1686
    %1688 = vrot.lane.b32.xlu0 %v1680, 123
    %v1689 = vpop.permute.xlu0 %1688
    %v1693 = vadd.f32 %v1613, %v1685
    %v1694 = vadd.f32 %v1614, %v1687
    %v1695 = vadd.f32 %v1615, %v1689
    %s1696 = sld [smem:[#allocation10 + $0x44]]
    %v1697 = vstv %s1696
    %v1698 = vmul.f32 %v1697, %v1622
    %v1699 = vmul.f32 %v1697, %v1623
    %v1700 = vadd.f32 %v1620, %v1698
    %v1701 = vadd.f32 %v1621, %v1699
    %v1702 = vld [vmem:[%s137 + $0x6] sm:$0xff]
    %v1703 = vld [vmem:[%s137 + $0xe] sm:$0xff]
    %s1704 = sld [smem:[#allocation8 + $0x4e]]
    %v1705 = vstv %s1704
    %v1706 = vmul.f32 %v1705, %v1257
    %v1707 = vmul.f32 %v1705, %v1258
    %v1708 = vmul.f32 %v1705, %v1259
    %1712 = vrot.lane.b32.xlu0 %v1706, 122
    %v1713 = vpop.permute.xlu0 %1712
    %1714 = vrot.lane.b32.xlu0 %v1707, 122
    %v1715 = vpop.permute.xlu0 %1714
    %1716 = vrot.lane.b32.xlu0 %v1708, 122
    %v1717 = vpop.permute.xlu0 %1716
    %v1721 = vadd.f32 %v1641, %v1713
    %v1722 = vadd.f32 %v1642, %v1715
    %v1723 = vadd.f32 %v1643, %v1717
    %s1724 = sld [smem:[#allocation10 + $0x4e]]
    %v1725 = vstv %s1724
    %v1726 = vmul.f32 %v1725, %v1702
    %v1727 = vmul.f32 %v1725, %v1703
    %v1728 = vadd.f32 %v1648, %v1726
    %v1729 = vadd.f32 %v1649, %v1727
    %s1730 = sld [smem:[#allocation8 + $0x4f]]
    %v1731 = vstv %s1730
    %v1732 = vmul.f32 %v1731, %v1257
    %v1733 = vmul.f32 %v1731, %v1258
    %v1734 = vmul.f32 %v1731, %v1259
    %1738 = vrot.lane.b32.xlu0 %v1732, 122
    %v1739 = vpop.permute.xlu0 %1738
    %1740 = vrot.lane.b32.xlu0 %v1733, 122
    %v1741 = vpop.permute.xlu0 %1740
    %1742 = vrot.lane.b32.xlu0 %v1734, 122
    %v1743 = vpop.permute.xlu0 %1742
    %v1747 = vadd.f32 %v1667, %v1739
    %v1748 = vadd.f32 %v1668, %v1741
    %v1749 = vadd.f32 %v1669, %v1743
    %s1750 = sld [smem:[#allocation10 + $0x4f]]
    %v1751 = vstv %s1750
    %v1752 = vmul.f32 %v1751, %v1702
    %v1753 = vmul.f32 %v1751, %v1703
    %v1754 = vadd.f32 %v1674, %v1752
    %v1755 = vadd.f32 %v1675, %v1753
    %s1756 = sld [smem:[#allocation8 + $0x50]]
    %v1757 = vstv %s1756
    %v1758 = vmul.f32 %v1757, %v1257
    %v1759 = vmul.f32 %v1757, %v1258
    %v1760 = vmul.f32 %v1757, %v1259
    %1764 = vrot.lane.b32.xlu0 %v1758, 122
    %v1765 = vpop.permute.xlu0 %1764
    %1766 = vrot.lane.b32.xlu0 %v1759, 122
    %v1767 = vpop.permute.xlu0 %1766
    %1768 = vrot.lane.b32.xlu0 %v1760, 122
    %v1769 = vpop.permute.xlu0 %1768
    %v1773 = vadd.f32 %v1693, %v1765
    %v1774 = vadd.f32 %v1694, %v1767
    %v1775 = vadd.f32 %v1695, %v1769
    %s1776 = sld [smem:[#allocation10 + $0x50]]
    %v1777 = vstv %s1776
    %v1778 = vmul.f32 %v1777, %v1702
    %v1779 = vmul.f32 %v1777, %v1703
    %v1780 = vadd.f32 %v1700, %v1778
    %v1781 = vadd.f32 %v1701, %v1779
    %v1782 = vld [vmem:[%s151] sm:$0xff]
    %v1783 = vld [vmem:[%s151 + $0x8] sm:$0xff]
    %v1784 = vld [vmem:[%s151 + $0x10] sm:$0x3f]
    %s1785 = sld [smem:[#allocation8 + $0x9]]
    %v1786 = vstv %s1785
    %v1787 = vmul.f32 %v1786, %v1782
    %v1788 = vmul.f32 %v1786, %v1783
    %v1789 = vmul.f32 %v1786, %v1784
    %v1790 = vadd.f32 %v1721, %v1787
    %v1791 = vadd.f32 %v1722, %v1788
    %v1792 = vadd.f32 %v1723, %v1789
    %s1793 = sld [smem:[#allocation10 + $0x9]]
    %v1794 = vstv %s1793
    %v1795 = vmul.f32 %v1794, %v1782
    %v1796 = vmul.f32 %v1794, %v1783
    %v1797 = vadd.f32 %v1728, %v1795
    %v1798 = vadd.f32 %v1729, %v1796
    %s1799 = sld [smem:[#allocation8 + $0xa]]
    %v1800 = vstv %s1799
    %v1801 = vmul.f32 %v1800, %v1782
    %v1802 = vmul.f32 %v1800, %v1783
    %v1803 = vmul.f32 %v1800, %v1784
    %v1804 = vadd.f32 %v1747, %v1801
    %v1805 = vadd.f32 %v1748, %v1802
    %v1806 = vadd.f32 %v1749, %v1803
    %s1807 = sld [smem:[#allocation10 + $0xa]]
    %v1808 = vstv %s1807
    %v1809 = vmul.f32 %v1808, %v1782
    %v1810 = vmul.f32 %v1808, %v1783
    %v1811 = vadd.f32 %v1754, %v1809
    %v1812 = vadd.f32 %v1755, %v1810
    %s1813 = sld [smem:[#allocation8 + $0xb]]
    %v1814 = vstv %s1813
    %v1815 = vmul.f32 %v1814, %v1782
    %v1816 = vmul.f32 %v1814, %v1783
    %v1817 = vmul.f32 %v1814, %v1784
    %v1818 = vadd.f32 %v1773, %v1815
    %v1819 = vadd.f32 %v1774, %v1816
    %v1820 = vadd.f32 %v1775, %v1817
    %s1821 = sld [smem:[#allocation10 + $0xb]]
    %v1822 = vstv %s1821
    %v1823 = vmul.f32 %v1822, %v1782
    %v1824 = vmul.f32 %v1822, %v1783
    %v1825 = vadd.f32 %v1780, %v1823
    %v1826 = vadd.f32 %v1781, %v1824
    %v1827 = vld [vmem:[%s151 + $0x1] sm:$0xff]
    %v1828 = vld [vmem:[%s151 + $0x9] sm:$0xff]
    %s1829 = sld [smem:[#allocation8 + $0x15]]
    %v1830 = vstv %s1829
    %v1831 = vmul.f32 %v1830, %v1782
    %v1832 = vmul.f32 %v1830, %v1783
    %v1833 = vmul.f32 %v1830, %v1784
    %1837 = vrot.lane.b32.xlu0 %v1831, 127
    %v1838 = vpop.permute.xlu0 %1837
    %1839 = vrot.lane.b32.xlu0 %v1832, 127
    %v1840 = vpop.permute.xlu0 %1839
    %1841 = vrot.lane.b32.xlu0 %v1833, 127
    %v1842 = vpop.permute.xlu0 %1841
    %v1846 = vadd.f32 %v1790, %v1838
    %v1847 = vadd.f32 %v1791, %v1840
    %v1848 = vadd.f32 %v1792, %v1842
    %s1849 = sld [smem:[#allocation10 + $0x15]]
    %v1850 = vstv %s1849
    %v1851 = vmul.f32 %v1850, %v1827
    %v1852 = vmul.f32 %v1850, %v1828
    %v1853 = vadd.f32 %v1797, %v1851
    %v1854 = vadd.f32 %v1798, %v1852
    %s1855 = sld [smem:[#allocation8 + $0x16]]
    %v1856 = vstv %s1855
    %v1857 = vmul.f32 %v1856, %v1782
    %v1858 = vmul.f32 %v1856, %v1783
    %v1859 = vmul.f32 %v1856, %v1784
    %1863 = vrot.lane.b32.xlu0 %v1857, 127
    %v1864 = vpop.permute.xlu0 %1863
    %1865 = vrot.lane.b32.xlu0 %v1858, 127
    %v1866 = vpop.permute.xlu0 %1865
    %1867 = vrot.lane.b32.xlu0 %v1859, 127
    %v1868 = vpop.permute.xlu0 %1867
    %v1872 = vadd.f32 %v1804, %v1864
    %v1873 = vadd.f32 %v1805, %v1866
    %v1874 = vadd.f32 %v1806, %v1868
    %s1875 = sld [smem:[#allocation10 + $0x16]]
    %v1876 = vstv %s1875
    %v1877 = vmul.f32 %v1876, %v1827
    %v1878 = vmul.f32 %v1876, %v1828
    %v1879 = vadd.f32 %v1811, %v1877
    %v1880 = vadd.f32 %v1812, %v1878
    %s1881 = sld [smem:[#allocation8 + $0x17]]
    %v1882 = vstv %s1881
    %v1883 = vmul.f32 %v1882, %v1782
    %v1884 = vmul.f32 %v1882, %v1783
    %v1885 = vmul.f32 %v1882, %v1784
    %1889 = vrot.lane.b32.xlu0 %v1883, 127
    %v1890 = vpop.permute.xlu0 %1889
    %1891 = vrot.lane.b32.xlu0 %v1884, 127
    %v1892 = vpop.permute.xlu0 %1891
    %1893 = vrot.lane.b32.xlu0 %v1885, 127
    %v1894 = vpop.permute.xlu0 %1893
    %v1898 = vadd.f32 %v1818, %v1890
    %v1899 = vadd.f32 %v1819, %v1892
    %v1900 = vadd.f32 %v1820, %v1894
    %s1901 = sld [smem:[#allocation10 + $0x17]]
    %v1902 = vstv %s1901
    %v1903 = vmul.f32 %v1902, %v1827
    %v1904 = vmul.f32 %v1902, %v1828
    %v1905 = vadd.f32 %v1825, %v1903
    %v1906 = vadd.f32 %v1826, %v1904
    %v1907 = vld [vmem:[%s151 + $0x2] sm:$0xff]
    %v1908 = vld [vmem:[%s151 + $0xa] sm:$0xff]
    %s1909 = sld [smem:[#allocation8 + $0x21]]
    %v1910 = vstv %s1909
    %v1911 = vmul.f32 %v1910, %v1782
    %v1912 = vmul.f32 %v1910, %v1783
    %v1913 = vmul.f32 %v1910, %v1784
    %1917 = vrot.lane.b32.xlu0 %v1911, 126
    %v1918 = vpop.permute.xlu0 %1917
    %1919 = vrot.lane.b32.xlu0 %v1912, 126
    %v1920 = vpop.permute.xlu0 %1919
    %1921 = vrot.lane.b32.xlu0 %v1913, 126
    %v1922 = vpop.permute.xlu0 %1921
    %v1926 = vadd.f32 %v1846, %v1918
    %v1927 = vadd.f32 %v1847, %v1920
    %v1928 = vadd.f32 %v1848, %v1922
    %s1929 = sld [smem:[#allocation10 + $0x21]]
    %v1930 = vstv %s1929
    %v1931 = vmul.f32 %v1930, %v1907
    %v1932 = vmul.f32 %v1930, %v1908
    %v1933 = vadd.f32 %v1853, %v1931
    %v1934 = vadd.f32 %v1854, %v1932
    %s1935 = sld [smem:[#allocation8 + $0x22]]
    %v1936 = vstv %s1935
    %v1937 = vmul.f32 %v1936, %v1782
    %v1938 = vmul.f32 %v1936, %v1783
    %v1939 = vmul.f32 %v1936, %v1784
    %1943 = vrot.lane.b32.xlu0 %v1937, 126
    %v1944 = vpop.permute.xlu0 %1943
    %1945 = vrot.lane.b32.xlu0 %v1938, 126
    %v1946 = vpop.permute.xlu0 %1945
    %1947 = vrot.lane.b32.xlu0 %v1939, 126
    %v1948 = vpop.permute.xlu0 %1947
    %v1952 = vadd.f32 %v1872, %v1944
    %v1953 = vadd.f32 %v1873, %v1946
    %v1954 = vadd.f32 %v1874, %v1948
    %s1955 = sld [smem:[#allocation10 + $0x22]]
    %v1956 = vstv %s1955
    %v1957 = vmul.f32 %v1956, %v1907
    %v1958 = vmul.f32 %v1956, %v1908
    %v1959 = vadd.f32 %v1879, %v1957
    %v1960 = vadd.f32 %v1880, %v1958
    %s1961 = sld [smem:[#allocation8 + $0x23]]
    %v1962 = vstv %s1961
    %v1963 = vmul.f32 %v1962, %v1782
    %v1964 = vmul.f32 %v1962, %v1783
    %v1965 = vmul.f32 %v1962, %v1784
    %1969 = vrot.lane.b32.xlu0 %v1963, 126
    %v1970 = vpop.permute.xlu0 %1969
    %1971 = vrot.lane.b32.xlu0 %v1964, 126
    %v1972 = vpop.permute.xlu0 %1971
    %1973 = vrot.lane.b32.xlu0 %v1965, 126
    %v1974 = vpop.permute.xlu0 %1973
    %v1978 = vadd.f32 %v1898, %v1970
    %v1979 = vadd.f32 %v1899, %v1972
    %v1980 = vadd.f32 %v1900, %v1974
    %s1981 = sld [smem:[#allocation10 + $0x23]]
    %v1982 = vstv %s1981
    %v1983 = vmul.f32 %v1982, %v1907
    %v1984 = vmul.f32 %v1982, %v1908
    %v1985 = vadd.f32 %v1905, %v1983
    %v1986 = vadd.f32 %v1906, %v1984
    %v1987 = vld [vmem:[%s151 + $0x3] sm:$0xff]
    %v1988 = vld [vmem:[%s151 + $0xb] sm:$0xff]
    %s1989 = sld [smem:[#allocation8 + $0x2d]]
    %v1990 = vstv %s1989
    %v1991 = vmul.f32 %v1990, %v1782
    %v1992 = vmul.f32 %v1990, %v1783
    %v1993 = vmul.f32 %v1990, %v1784
    %1997 = vrot.lane.b32.xlu0 %v1991, 125
    %v1998 = vpop.permute.xlu0 %1997
    %1999 = vrot.lane.b32.xlu0 %v1992, 125
    %v2000 = vpop.permute.xlu0 %1999
    %2001 = vrot.lane.b32.xlu0 %v1993, 125
    %v2002 = vpop.permute.xlu0 %2001
    %v2006 = vadd.f32 %v1926, %v1998
    %v2007 = vadd.f32 %v1927, %v2000
    %v2008 = vadd.f32 %v1928, %v2002
    %s2009 = sld [smem:[#allocation10 + $0x2d]]
    %v2010 = vstv %s2009
    %v2011 = vmul.f32 %v2010, %v1987
    %v2012 = vmul.f32 %v2010, %v1988
    %v2013 = vadd.f32 %v1933, %v2011
    %v2014 = vadd.f32 %v1934, %v2012
    %s2015 = sld [smem:[#allocation8 + $0x2e]]
    %v2016 = vstv %s2015
    %v2017 = vmul.f32 %v2016, %v1782
    %v2018 = vmul.f32 %v2016, %v1783
    %v2019 = vmul.f32 %v2016, %v1784
    %2023 = vrot.lane.b32.xlu0 %v2017, 125
    %v2024 = vpop.permute.xlu0 %2023
    %2025 = vrot.lane.b32.xlu0 %v2018, 125
    %v2026 = vpop.permute.xlu0 %2025
    %2027 = vrot.lane.b32.xlu0 %v2019, 125
    %v2028 = vpop.permute.xlu0 %2027
    %v2032 = vadd.f32 %v1952, %v2024
    %v2033 = vadd.f32 %v1953, %v2026
    %v2034 = vadd.f32 %v1954, %v2028
    %s2035 = sld [smem:[#allocation10 + $0x2e]]
    %v2036 = vstv %s2035
    %v2037 = vmul.f32 %v2036, %v1987
    %v2038 = vmul.f32 %v2036, %v1988
    %v2039 = vadd.f32 %v1959, %v2037
    %v2040 = vadd.f32 %v1960, %v2038
    %s2041 = sld [smem:[#allocation8 + $0x2f]]
    %v2042 = vstv %s2041
    %v2043 = vmul.f32 %v2042, %v1782
    %v2044 = vmul.f32 %v2042, %v1783
    %v2045 = vmul.f32 %v2042, %v1784
    %2049 = vrot.lane.b32.xlu0 %v2043, 125
    %v2050 = vpop.permute.xlu0 %2049
    %2051 = vrot.lane.b32.xlu0 %v2044, 125
    %v2052 = vpop.permute.xlu0 %2051
    %2053 = vrot.lane.b32.xlu0 %v2045, 125
    %v2054 = vpop.permute.xlu0 %2053
    %v2058 = vadd.f32 %v1978, %v2050
    %v2059 = vadd.f32 %v1979, %v2052
    %v2060 = vadd.f32 %v1980, %v2054
    %s2061 = sld [smem:[#allocation10 + $0x2f]]
    %v2062 = vstv %s2061
    %v2063 = vmul.f32 %v2062, %v1987
    %v2064 = vmul.f32 %v2062, %v1988
    %v2065 = vadd.f32 %v1985, %v2063
    %v2066 = vadd.f32 %v1986, %v2064
    %v2067 = vld [vmem:[%s151 + $0x4] sm:$0xff]
    %v2068 = vld [vmem:[%s151 + $0xc] sm:$0xff]
    %s2069 = sld [smem:[#allocation8 + $0x39]]
    %v2070 = vstv %s2069
    %v2071 = vmul.f32 %v2070, %v1782
    %v2072 = vmul.f32 %v2070, %v1783
    %v2073 = vmul.f32 %v2070, %v1784
    %2077 = vrot.lane.b32.xlu0 %v2071, 124
    %v2078 = vpop.permute.xlu0 %2077
    %2079 = vrot.lane.b32.xlu0 %v2072, 124
    %v2080 = vpop.permute.xlu0 %2079
    %2081 = vrot.lane.b32.xlu0 %v2073, 124
    %v2082 = vpop.permute.xlu0 %2081
    %v2086 = vadd.f32 %v2006, %v2078
    %v2087 = vadd.f32 %v2007, %v2080
    %v2088 = vadd.f32 %v2008, %v2082
    %s2089 = sld [smem:[#allocation10 + $0x39]]
    %v2090 = vstv %s2089
    %v2091 = vmul.f32 %v2090, %v2067
    %v2092 = vmul.f32 %v2090, %v2068
    %v2093 = vadd.f32 %v2013, %v2091
    %v2094 = vadd.f32 %v2014, %v2092
    %s2095 = sld [smem:[#allocation8 + $0x3a]]
    %v2096 = vstv %s2095
    %v2097 = vmul.f32 %v2096, %v1782
    %v2098 = vmul.f32 %v2096, %v1783
    %v2099 = vmul.f32 %v2096, %v1784
    %2103 = vrot.lane.b32.xlu0 %v2097, 124
    %v2104 = vpop.permute.xlu0 %2103
    %2105 = vrot.lane.b32.xlu0 %v2098, 124
    %v2106 = vpop.permute.xlu0 %2105
    %2107 = vrot.lane.b32.xlu0 %v2099, 124
    %v2108 = vpop.permute.xlu0 %2107
    %v2112 = vadd.f32 %v2032, %v2104
    %v2113 = vadd.f32 %v2033, %v2106
    %v2114 = vadd.f32 %v2034, %v2108
    %s2115 = sld [smem:[#allocation10 + $0x3a]]
    %v2116 = vstv %s2115
    %v2117 = vmul.f32 %v2116, %v2067
    %v2118 = vmul.f32 %v2116, %v2068
    %v2119 = vadd.f32 %v2039, %v2117
    %v2120 = vadd.f32 %v2040, %v2118
    %s2121 = sld [smem:[#allocation8 + $0x3b]]
    %v2122 = vstv %s2121
    %v2123 = vmul.f32 %v2122, %v1782
    %v2124 = vmul.f32 %v2122, %v1783
    %v2125 = vmul.f32 %v2122, %v1784
    %2129 = vrot.lane.b32.xlu0 %v2123, 124
    %v2130 = vpop.permute.xlu0 %2129
    %2131 = vrot.lane.b32.xlu0 %v2124, 124
    %v2132 = vpop.permute.xlu0 %2131
    %2133 = vrot.lane.b32.xlu0 %v2125, 124
    %v2134 = vpop.permute.xlu0 %2133
    %v2138 = vadd.f32 %v2058, %v2130
    %v2139 = vadd.f32 %v2059, %v2132
    %v2140 = vadd.f32 %v2060, %v2134
    %s2141 = sld [smem:[#allocation10 + $0x3b]]
    %v2142 = vstv %s2141
    %v2143 = vmul.f32 %v2142, %v2067
    %v2144 = vmul.f32 %v2142, %v2068
    %v2145 = vadd.f32 %v2065, %v2143
    %v2146 = vadd.f32 %v2066, %v2144
    %v2147 = vld [vmem:[%s151 + $0x5] sm:$0xff]
    %v2148 = vld [vmem:[%s151 + $0xd] sm:$0xff]
    %s2149 = sld [smem:[#allocation8 + $0x45]]
    %v2150 = vstv %s2149
    %v2151 = vmul.f32 %v2150, %v1782
    %v2152 = vmul.f32 %v2150, %v1783
    %v2153 = vmul.f32 %v2150, %v1784
    %2157 = vrot.lane.b32.xlu0 %v2151, 123
    %v2158 = vpop.permute.xlu0 %2157
    %2159 = vrot.lane.b32.xlu0 %v2152, 123
    %v2160 = vpop.permute.xlu0 %2159
    %2161 = vrot.lane.b32.xlu0 %v2153, 123
    %v2162 = vpop.permute.xlu0 %2161
    %v2166 = vadd.f32 %v2086, %v2158
    %v2167 = vadd.f32 %v2087, %v2160
    %v2168 = vadd.f32 %v2088, %v2162
    %s2169 = sld [smem:[#allocation10 + $0x45]]
    %v2170 = vstv %s2169
    %v2171 = vmul.f32 %v2170, %v2147
    %v2172 = vmul.f32 %v2170, %v2148
    %v2173 = vadd.f32 %v2093, %v2171
    %v2174 = vadd.f32 %v2094, %v2172
    %s2175 = sld [smem:[#allocation8 + $0x46]]
    %v2176 = vstv %s2175
    %v2177 = vmul.f32 %v2176, %v1782
    %v2178 = vmul.f32 %v2176, %v1783
    %v2179 = vmul.f32 %v2176, %v1784
    %2183 = vrot.lane.b32.xlu0 %v2177, 123
    %v2184 = vpop.permute.xlu0 %2183
    %2185 = vrot.lane.b32.xlu0 %v2178, 123
    %v2186 = vpop.permute.xlu0 %2185
    %2187 = vrot.lane.b32.xlu0 %v2179, 123
    %v2188 = vpop.permute.xlu0 %2187
    %v2192 = vadd.f32 %v2112, %v2184
    %v2193 = vadd.f32 %v2113, %v2186
    %v2194 = vadd.f32 %v2114, %v2188
    %s2195 = sld [smem:[#allocation10 + $0x46]]
    %v2196 = vstv %s2195
    %v2197 = vmul.f32 %v2196, %v2147
    %v2198 = vmul.f32 %v2196, %v2148
    %v2199 = vadd.f32 %v2119, %v2197
    %v2200 = vadd.f32 %v2120, %v2198
    %s2201 = sld [smem:[#allocation8 + $0x47]]
    %v2202 = vstv %s2201
    %v2203 = vmul.f32 %v2202, %v1782
    %v2204 = vmul.f32 %v2202, %v1783
    %v2205 = vmul.f32 %v2202, %v1784
    %2209 = vrot.lane.b32.xlu0 %v2203, 123
    %v2210 = vpop.permute.xlu0 %2209
    %2211 = vrot.lane.b32.xlu0 %v2204, 123
    %v2212 = vpop.permute.xlu0 %2211
    %2213 = vrot.lane.b32.xlu0 %v2205, 123
    %v2214 = vpop.permute.xlu0 %2213
    %v2218 = vadd.f32 %v2138, %v2210
    %v2219 = vadd.f32 %v2139, %v2212
    %v2220 = vadd.f32 %v2140, %v2214
    %s2221 = sld [smem:[#allocation10 + $0x47]]
    %v2222 = vstv %s2221
    %v2223 = vmul.f32 %v2222, %v2147
    %v2224 = vmul.f32 %v2222, %v2148
    %v2225 = vadd.f32 %v2145, %v2223
    %v2226 = vadd.f32 %v2146, %v2224
    %v2227 = vld [vmem:[%s151 + $0x6] sm:$0xff]
    %v2228 = vld [vmem:[%s151 + $0xe] sm:$0xff]
    %s2229 = sld [smem:[#allocation8 + $0x51]]
    %v2230 = vstv %s2229
    %v2231 = vmul.f32 %v2230, %v1782
    %v2232 = vmul.f32 %v2230, %v1783
    %v2233 = vmul.f32 %v2230, %v1784
    %2237 = vrot.lane.b32.xlu0 %v2231, 122
    %v2238 = vpop.permute.xlu0 %2237
    %2239 = vrot.lane.b32.xlu0 %v2232, 122
    %v2240 = vpop.permute.xlu0 %2239
    %2241 = vrot.lane.b32.xlu0 %v2233, 122
    %v2242 = vpop.permute.xlu0 %2241
    %v2246 = vadd.f32 %v2166, %v2238
    %v2247 = vadd.f32 %v2167, %v2240
    %v2248 = vadd.f32 %v2168, %v2242
    %s2249 = sld [smem:[#allocation10 + $0x51]]
    %v2250 = vstv %s2249
    %v2251 = vmul.f32 %v2250, %v2227
    %v2252 = vmul.f32 %v2250, %v2228
    %v2253 = vadd.f32 %v2173, %v2251
    %v2254 = vadd.f32 %v2174, %v2252
    %s2255 = sld [smem:[#allocation8 + $0x52]]
    %v2256 = vstv %s2255
    %v2257 = vmul.f32 %v2256, %v1782
    %v2258 = vmul.f32 %v2256, %v1783
    %v2259 = vmul.f32 %v2256, %v1784
    %2263 = vrot.lane.b32.xlu0 %v2257, 122
    %v2264 = vpop.permute.xlu0 %2263
    %2265 = vrot.lane.b32.xlu0 %v2258, 122
    %v2266 = vpop.permute.xlu0 %2265
    %2267 = vrot.lane.b32.xlu0 %v2259, 122
    %v2268 = vpop.permute.xlu0 %2267
    %v2272 = vadd.f32 %v2192, %v2264
    %v2273 = vadd.f32 %v2193, %v2266
    %v2274 = vadd.f32 %v2194, %v2268
    %s2275 = sld [smem:[#allocation10 + $0x52]]
    %v2276 = vstv %s2275
    %v2277 = vmul.f32 %v2276, %v2227
    %v2278 = vmul.f32 %v2276, %v2228
    %v2279 = vadd.f32 %v2199, %v2277
    %v2280 = vadd.f32 %v2200, %v2278
    %s2281 = sld [smem:[#allocation8 + $0x53]]
    %v2282 = vstv %s2281
    %v2283 = vmul.f32 %v2282, %v1782
    %v2284 = vmul.f32 %v2282, %v1783
    %v2285 = vmul.f32 %v2282, %v1784
    %2289 = vrot.lane.b32.xlu0 %v2283, 122
    %v2290 = vpop.permute.xlu0 %2289
    %2291 = vrot.lane.b32.xlu0 %v2284, 122
    %v2292 = vpop.permute.xlu0 %2291
    %2293 = vrot.lane.b32.xlu0 %v2285, 122
    %v2294 = vpop.permute.xlu0 %2293
    %v2298 = vadd.f32 %v2218, %v2290
    %v2299 = vadd.f32 %v2219, %v2292
    %v2300 = vadd.f32 %v2220, %v2294
    %s2301 = sld [smem:[#allocation10 + $0x53]]
    %v2302 = vstv %s2301
    %v2303 = vmul.f32 %v2302, %v2227
    %v2304 = vmul.f32 %v2302, %v2228
    %v2305 = vadd.f32 %v2225, %v2303
    %v2306 = vadd.f32 %v2226, %v2304
    %s2307 = sld [smem:[#allocation9]]
    %v2308 = vstv %s2307
    %v2309 = vmul.f32 %v2308, %v2246
    %v2310 = vmul.f32 %v2308, %v2247
    %v2311 = vadd.f32 %v2309, 0.0
    %v2312 = vadd.f32 %v2310, 0.0
    %s2313 = sld [smem:[#allocation12]]
    %v2314 = vstv %s2313
    %v2315 = vmul.f32 %v2314, %v2253
    %v2316 = vmul.f32 %v2314, %v2254
    %v2317 = vadd.f32 %v2311, %v2315
    %v2318 = vadd.f32 %v2312, %v2316
    %s2319 = sld [smem:[#allocation9 + $0x1]]
    %v2320 = vstv %s2319
    %v2321 = vmul.f32 %v2320, %v2246
    %v2322 = vmul.f32 %v2320, %v2247
    %v2323 = vadd.f32 %v2321, 0.0
    %v2324 = vadd.f32 %v2322, 0.0
    %s2325 = sld [smem:[#allocation12 + $0x1]]
    %v2326 = vstv %s2325
    %v2327 = vmul.f32 %v2326, %v2253
    %v2328 = vmul.f32 %v2326, %v2254
    %v2329 = vadd.f32 %v2323, %v2327
    %v2330 = vadd.f32 %v2324, %v2328
    %s2331 = sld [smem:[#allocation9 + $0x2]]
    %v2332 = vstv %s2331
    %v2333 = vmul.f32 %v2332, %v2246
    %v2334 = vmul.f32 %v2332, %v2247
    %v2335 = vadd.f32 %v2333, 0.0
    %v2336 = vadd.f32 %v2334, 0.0
    %s2337 = sld [smem:[#allocation12 + $0x2]]
    %v2338 = vstv %s2337
    %v2339 = vmul.f32 %v2338, %v2253
    %v2340 = vmul.f32 %v2338, %v2254
    %v2341 = vadd.f32 %v2335, %v2339
    %v2342 = vadd.f32 %v2336, %v2340
    %s2343 = sld [smem:[#allocation9 + $0x9]]
    %v2344 = vstv %s2343
    %v2345 = vmul.f32 %v2344, %v2246
    %v2346 = vmul.f32 %v2344, %v2247
    %v2347 = vmul.f32 %v2344, %v2248
    %vm2351 = vcmask 1046528
    %v2352 = vrot.slane %v2345, 1
    %v2353 = vrot.slane %v2346, 1
    %v2354 = vsel %vm2351, %v2352, %v2353
    %v2355 = vrot.slane %v2347, 1
    %v2356 = vsel %vm2351, %v2353, %v2355
    %v2359 = vadd.f32 %v2317, %v2354
    %v2360 = vadd.f32 %v2318, %v2356
    %s2361 = sld [smem:[#allocation12 + $0x9]]
    %v2362 = vstv %s2361
    %v2363 = vmul.f32 %v2362, %v2253
    %v2364 = vmul.f32 %v2362, %v2254
    %2367 = vrot.lane.b32.xlu0 %v2363, 127
    %v2368 = vpop.permute.xlu0 %2367
    %2369 = vrot.lane.b32.xlu0 %v2364, 127
    %v2370 = vpop.permute.xlu0 %2369
    %v2373 = vadd.f32 %v2359, %v2368
    %v2374 = vadd.f32 %v2360, %v2370
    %s2375 = sld [smem:[#allocation9 + $0xa]]
    %v2376 = vstv %s2375
    %v2377 = vmul.f32 %v2376, %v2246
    %v2378 = vmul.f32 %v2376, %v2247
    %v2379 = vmul.f32 %v2376, %v2248
    %v2383 = vrot.slane %v2377, 1
    %v2384 = vrot.slane %v2378, 1
    %v2385 = vsel %vm2351, %v2383, %v2384
    %v2386 = vrot.slane %v2379, 1
    %v2387 = vsel %vm2351, %v2384, %v2386
    %v2390 = vadd.f32 %v2329, %v2385
    %v2391 = vadd.f32 %v2330, %v2387
    %s2392 = sld [smem:[#allocation12 + $0xa]]
    %v2393 = vstv %s2392
    %v2394 = vmul.f32 %v2393, %v2253
    %v2395 = vmul.f32 %v2393, %v2254
    %2398 = vrot.lane.b32.xlu0 %v2394, 127
    %v2399 = vpop.permute.xlu0 %2398
    %2400 = vrot.lane.b32.xlu0 %v2395, 127
    %v2401 = vpop.permute.xlu0 %2400
    %v2404 = vadd.f32 %v2390, %v2399
    %v2405 = vadd.f32 %v2391, %v2401
    %s2406 = sld [smem:[#allocation9 + $0xb]]
    %v2407 = vstv %s2406
    %v2408 = vmul.f32 %v2407, %v2246
    %v2409 = vmul.f32 %v2407, %v2247
    %v2410 = vmul.f32 %v2407, %v2248
    %v2414 = vrot.slane %v2408, 1
    %v2415 = vrot.slane %v2409, 1
    %v2416 = vsel %vm2351, %v2414, %v2415
    %v2417 = vrot.slane %v2410, 1
    %v2418 = vsel %vm2351, %v2415, %v2417
    %v2421 = vadd.f32 %v2341, %v2416
    %v2422 = vadd.f32 %v2342, %v2418
    %s2423 = sld [smem:[#allocation12 + $0xb]]
    %v2424 = vstv %s2423
    %v2425 = vmul.f32 %v2424, %v2253
    %v2426 = vmul.f32 %v2424, %v2254
    %2429 = vrot.lane.b32.xlu0 %v2425, 127
    %v2430 = vpop.permute.xlu0 %2429
    %2431 = vrot.lane.b32.xlu0 %v2426, 127
    %v2432 = vpop.permute.xlu0 %2431
    %v2435 = vadd.f32 %v2421, %v2430
    %v2436 = vadd.f32 %v2422, %v2432
    %s2437 = sld [smem:[#allocation9 + $0x12]]
    %v2438 = vstv %s2437
    %v2439 = vmul.f32 %v2438, %v2246
    %v2440 = vmul.f32 %v2438, %v2247
    %v2441 = vmul.f32 %v2438, %v2248
    %vm2445 = vcmask 1045504
    %v2446 = vrot.slane %v2439, 2
    %v2447 = vrot.slane %v2440, 2
    %v2448 = vsel %vm2445, %v2446, %v2447
    %v2449 = vrot.slane %v2441, 2
    %v2450 = vsel %vm2445, %v2447, %v2449
    %v2453 = vadd.f32 %v2373, %v2448
    %v2454 = vadd.f32 %v2374, %v2450
    %s2455 = sld [smem:[#allocation12 + $0x12]]
    %v2456 = vstv %s2455
    %v2457 = vmul.f32 %v2456, %v2253
    %v2458 = vmul.f32 %v2456, %v2254
    %2461 = vrot.lane.b32.xlu0 %v2457, 126
    %v2462 = vpop.permute.xlu0 %2461
    %2463 = vrot.lane.b32.xlu0 %v2458, 126
    %v2464 = vpop.permute.xlu0 %2463
    %v2467 = vadd.f32 %v2453, %v2462
    %v2468 = vadd.f32 %v2454, %v2464
    %s2469 = sld [smem:[#allocation9 + $0x13]]
    %v2470 = vstv %s2469
    %v2471 = vmul.f32 %v2470, %v2246
    %v2472 = vmul.f32 %v2470, %v2247
    %v2473 = vmul.f32 %v2470, %v2248
    %v2477 = vrot.slane %v2471, 2
    %v2478 = vrot.slane %v2472, 2
    %v2479 = vsel %vm2445, %v2477, %v2478
    %v2480 = vrot.slane %v2473, 2
    %v2481 = vsel %vm2445, %v2478, %v2480
    %v2484 = vadd.f32 %v2404, %v2479
    %v2485 = vadd.f32 %v2405, %v2481
    %s2486 = sld [smem:[#allocation12 + $0x13]]
    %v2487 = vstv %s2486
    %v2488 = vmul.f32 %v2487, %v2253
    %v2489 = vmul.f32 %v2487, %v2254
    %2492 = vrot.lane.b32.xlu0 %v2488, 126
    %v2493 = vpop.permute.xlu0 %2492
    %2494 = vrot.lane.b32.xlu0 %v2489, 126
    %v2495 = vpop.permute.xlu0 %2494
    %v2498 = vadd.f32 %v2484, %v2493
    %v2499 = vadd.f32 %v2485, %v2495
    %s2500 = sld [smem:[#allocation9 + $0x14]]
    %v2501 = vstv %s2500
    %v2502 = vmul.f32 %v2501, %v2246
    %v2503 = vmul.f32 %v2501, %v2247
    %v2504 = vmul.f32 %v2501, %v2248
    %v2508 = vrot.slane %v2502, 2
    %v2509 = vrot.slane %v2503, 2
    %v2510 = vsel %vm2445, %v2508, %v2509
    %v2511 = vrot.slane %v2504, 2
    %v2512 = vsel %vm2445, %v2509, %v2511
    %v2515 = vadd.f32 %v2435, %v2510
    %v2516 = vadd.f32 %v2436, %v2512
    %s2517 = sld [smem:[#allocation12 + $0x14]]
    %v2518 = vstv %s2517
    %v2519 = vmul.f32 %v2518, %v2253
    %v2520 = vmul.f32 %v2518, %v2254
    %2523 = vrot.lane.b32.xlu0 %v2519, 126
    %v2524 = vpop.permute.xlu0 %2523
    %2525 = vrot.lane.b32.xlu0 %v2520, 126
    %v2526 = vpop.permute.xlu0 %2525
    %v2529 = vadd.f32 %v2515, %v2524
    %v2530 = vadd.f32 %v2516, %v2526
    %s2531 = sld [smem:[#allocation9 + $0x1b]]
    %v2532 = vstv %s2531
    %v2533 = vmul.f32 %v2532, %v2246
    %v2534 = vmul.f32 %v2532, %v2247
    %v2535 = vmul.f32 %v2532, %v2248
    %vm2539 = vcmask 1044480
    %v2540 = vrot.slane %v2533, 3
    %v2541 = vrot.slane %v2534, 3
    %v2542 = vsel %vm2539, %v2540, %v2541
    %v2543 = vrot.slane %v2535, 3
    %v2544 = vsel %vm2539, %v2541, %v2543
    %v2547 = vadd.f32 %v2467, %v2542
    %v2548 = vadd.f32 %v2468, %v2544
    %s2549 = sld [smem:[#allocation12 + $0x1b]]
    %v2550 = vstv %s2549
    %v2551 = vmul.f32 %v2550, %v2253
    %v2552 = vmul.f32 %v2550, %v2254
    %2555 = vrot.lane.b32.xlu0 %v2551, 125
    %v2556 = vpop.permute.xlu0 %2555
    %2557 = vrot.lane.b32.xlu0 %v2552, 125
    %v2558 = vpop.permute.xlu0 %2557
    %v2561 = vadd.f32 %v2547, %v2556
    %v2562 = vadd.f32 %v2548, %v2558
    %s2563 = sld [smem:[#allocation9 + $0x1c]]
    %v2564 = vstv %s2563
    %v2565 = vmul.f32 %v2564, %v2246
    %v2566 = vmul.f32 %v2564, %v2247
    %v2567 = vmul.f32 %v2564, %v2248
    %v2571 = vrot.slane %v2565, 3
    %v2572 = vrot.slane %v2566, 3
    %v2573 = vsel %vm2539, %v2571, %v2572
    %v2574 = vrot.slane %v2567, 3
    %v2575 = vsel %vm2539, %v2572, %v2574
    %v2578 = vadd.f32 %v2498, %v2573
    %v2579 = vadd.f32 %v2499, %v2575
    %s2580 = sld [smem:[#allocation12 + $0x1c]]
    %v2581 = vstv %s2580
    %v2582 = vmul.f32 %v2581, %v2253
    %v2583 = vmul.f32 %v2581, %v2254
    %2586 = vrot.lane.b32.xlu0 %v2582, 125
    %v2587 = vpop.permute.xlu0 %2586
    %2588 = vrot.lane.b32.xlu0 %v2583, 125
    %v2589 = vpop.permute.xlu0 %2588
    %v2592 = vadd.f32 %v2578, %v2587
    %v2593 = vadd.f32 %v2579, %v2589
    %s2594 = sld [smem:[#allocation9 + $0x1d]]
    %v2595 = vstv %s2594
    %v2596 = vmul.f32 %v2595, %v2246
    %v2597 = vmul.f32 %v2595, %v2247
    %v2598 = vmul.f32 %v2595, %v2248
    %v2602 = vrot.slane %v2596, 3
    %v2603 = vrot.slane %v2597, 3
    %v2604 = vsel %vm2539, %v2602, %v2603
    %v2605 = vrot.slane %v2598, 3
    %v2606 = vsel %vm2539, %v2603, %v2605
    %v2609 = vadd.f32 %v2529, %v2604
    %v2610 = vadd.f32 %v2530, %v2606
    %s2611 = sld [smem:[#allocation12 + $0x1d]]
    %v2612 = vstv %s2611
    %v2613 = vmul.f32 %v2612, %v2253
    %v2614 = vmul.f32 %v2612, %v2254
    %2617 = vrot.lane.b32.xlu0 %v2613, 125
    %v2618 = vpop.permute.xlu0 %2617
    %2619 = vrot.lane.b32.xlu0 %v2614, 125
    %v2620 = vpop.permute.xlu0 %2619
    %v2623 = vadd.f32 %v2609, %v2618
    %v2624 = vadd.f32 %v2610, %v2620
    %s2625 = sld [smem:[#allocation9 + $0x24]]
    %v2626 = vstv %s2625
    %v2627 = vmul.f32 %v2626, %v2246
    %v2628 = vmul.f32 %v2626, %v2247
    %v2629 = vmul.f32 %v2626, %v2248
    %vm2633 = vcmask 1043456
    %v2634 = vrot.slane %v2627, 4
    %v2635 = vrot.slane %v2628, 4
    %v2636 = vsel %vm2633, %v2634, %v2635
    %v2637 = vrot.slane %v2629, 4
    %v2638 = vsel %vm2633, %v2635, %v2637
    %v2641 = vadd.f32 %v2561, %v2636
    %v2642 = vadd.f32 %v2562, %v2638
    %s2643 = sld [smem:[#allocation12 + $0x24]]
    %v2644 = vstv %s2643
    %v2645 = vmul.f32 %v2644, %v2253
    %v2646 = vmul.f32 %v2644, %v2254
    %2649 = vrot.lane.b32.xlu0 %v2645, 124
    %v2650 = vpop.permute.xlu0 %2649
    %2651 = vrot.lane.b32.xlu0 %v2646, 124
    %v2652 = vpop.permute.xlu0 %2651
    %v2655 = vadd.f32 %v2641, %v2650
    %v2656 = vadd.f32 %v2642, %v2652
    %s2657 = sld [smem:[#allocation9 + $0x25]]
    %v2658 = vstv %s2657
    %v2659 = vmul.f32 %v2658, %v2246
    %v2660 = vmul.f32 %v2658, %v2247
    %v2661 = vmul.f32 %v2658, %v2248
    %v2665 = vrot.slane %v2659, 4
    %v2666 = vrot.slane %v2660, 4
    %v2667 = vsel %vm2633, %v2665, %v2666
    %v2668 = vrot.slane %v2661, 4
    %v2669 = vsel %vm2633, %v2666, %v2668
    %v2672 = vadd.f32 %v2592, %v2667
    %v2673 = vadd.f32 %v2593, %v2669
    %s2674 = sld [smem:[#allocation12 + $0x25]]
    %v2675 = vstv %s2674
    %v2676 = vmul.f32 %v2675, %v2253
    %v2677 = vmul.f32 %v2675, %v2254
    %2680 = vrot.lane.b32.xlu0 %v2676, 124
    %v2681 = vpop.permute.xlu0 %2680
    %2682 = vrot.lane.b32.xlu0 %v2677, 124
    %v2683 = vpop.permute.xlu0 %2682
    %v2686 = vadd.f32 %v2672, %v2681
    %v2687 = vadd.f32 %v2673, %v2683
    %s2688 = sld [smem:[#allocation9 + $0x26]]
    %v2689 = vstv %s2688
    %v2690 = vmul.f32 %v2689, %v2246
    %v2691 = vmul.f32 %v2689, %v2247
    %v2692 = vmul.f32 %v2689, %v2248
    %v2696 = vrot.slane %v2690, 4
    %v2697 = vrot.slane %v2691, 4
    %v2698 = vsel %vm2633, %v2696, %v2697
    %v2699 = vrot.slane %v2692, 4
    %v2700 = vsel %vm2633, %v2697, %v2699
    %v2703 = vadd.f32 %v2623, %v2698
    %v2704 = vadd.f32 %v2624, %v2700
    %s2705 = sld [smem:[#allocation12 + $0x26]]
    %v2706 = vstv %s2705
    %v2707 = vmul.f32 %v2706, %v2253
    %v2708 = vmul.f32 %v2706, %v2254
    %2711 = vrot.lane.b32.xlu0 %v2707, 124
    %v2712 = vpop.permute.xlu0 %2711
    %2713 = vrot.lane.b32.xlu0 %v2708, 124
    %v2714 = vpop.permute.xlu0 %2713
    %v2717 = vadd.f32 %v2703, %v2712
    %v2718 = vadd.f32 %v2704, %v2714
    %s2719 = sld [smem:[#allocation9 + $0x2d]]
    %v2720 = vstv %s2719
    %v2721 = vmul.f32 %v2720, %v2246
    %v2722 = vmul.f32 %v2720, %v2247
    %v2723 = vmul.f32 %v2720, %v2248
    %vm2727 = vcmask 1042432
    %v2728 = vrot.slane %v2721, 5
    %v2729 = vrot.slane %v2722, 5
    %v2730 = vsel %vm2727, %v2728, %v2729
    %v2731 = vrot.slane %v2723, 5
    %v2732 = vsel %vm2727, %v2729, %v2731
    %v2735 = vadd.f32 %v2655, %v2730
    %v2736 = vadd.f32 %v2656, %v2732
    %s2737 = sld [smem:[#allocation12 + $0x2d]]
    %v2738 = vstv %s2737
    %v2739 = vmul.f32 %v2738, %v2253
    %v2740 = vmul.f32 %v2738, %v2254
    %2743 = vrot.lane.b32.xlu0 %v2739, 123
    %v2744 = vpop.permute.xlu0 %2743
    %2745 = vrot.lane.b32.xlu0 %v2740, 123
    %v2746 = vpop.permute.xlu0 %2745
    %v2749 = vadd.f32 %v2735, %v2744
    %v2750 = vadd.f32 %v2736, %v2746
    %s2751 = sld [smem:[#allocation9 + $0x2e]]
    %v2752 = vstv %s2751
    %v2753 = vmul.f32 %v2752, %v2246
    %v2754 = vmul.f32 %v2752, %v2247
    %v2755 = vmul.f32 %v2752, %v2248
    %v2759 = vrot.slane %v2753, 5
    %v2760 = vrot.slane %v2754, 5
    %v2761 = vsel %vm2727, %v2759, %v2760
    %v2762 = vrot.slane %v2755, 5
    %v2763 = vsel %vm2727, %v2760, %v2762
    %v2766 = vadd.f32 %v2686, %v2761
    %v2767 = vadd.f32 %v2687, %v2763
    %s2768 = sld [smem:[#allocation12 + $0x2e]]
    %v2769 = vstv %s2768
    %v2770 = vmul.f32 %v2769, %v2253
    %v2771 = vmul.f32 %v2769, %v2254
    %2774 = vrot.lane.b32.xlu0 %v2770, 123
    %v2775 = vpop.permute.xlu0 %2774
    %2776 = vrot.lane.b32.xlu0 %v2771, 123
    %v2777 = vpop.permute.xlu0 %2776
    %v2780 = vadd.f32 %v2766, %v2775
    %v2781 = vadd.f32 %v2767, %v2777
    %s2782 = sld [smem:[#allocation9 + $0x2f]]
    %v2783 = vstv %s2782
    %v2784 = vmul.f32 %v2783, %v2246
    %v2785 = vmul.f32 %v2783, %v2247
    %v2786 = vmul.f32 %v2783, %v2248
    %v2790 = vrot.slane %v2784, 5
    %v2791 = vrot.slane %v2785, 5
    %v2792 = vsel %vm2727, %v2790, %v2791
    %v2793 = vrot.slane %v2786, 5
    %v2794 = vsel %vm2727, %v2791, %v2793
    %v2797 = vadd.f32 %v2717, %v2792
    %v2798 = vadd.f32 %v2718, %v2794
    %s2799 = sld [smem:[#allocation12 + $0x2f]]
    %v2800 = vstv %s2799
    %v2801 = vmul.f32 %v2800, %v2253
    %v2802 = vmul.f32 %v2800, %v2254
    %2805 = vrot.lane.b32.xlu0 %v2801, 123
    %v2806 = vpop.permute.xlu0 %2805
    %2807 = vrot.lane.b32.xlu0 %v2802, 123
    %v2808 = vpop.permute.xlu0 %2807
    %v2811 = vadd.f32 %v2797, %v2806
    %v2812 = vadd.f32 %v2798, %v2808
    %s2813 = sld [smem:[#allocation9 + $0x36]]
    %v2814 = vstv %s2813
    %v2815 = vmul.f32 %v2814, %v2246
    %v2816 = vmul.f32 %v2814, %v2247
    %v2817 = vmul.f32 %v2814, %v2248
    %vm2821 = vcmask 1041408
    %v2822 = vrot.slane %v2815, 6
    %v2823 = vrot.slane %v2816, 6
    %v2824 = vsel %vm2821, %v2822, %v2823
    %v2825 = vrot.slane %v2817, 6
    %v2826 = vsel %vm2821, %v2823, %v2825
    %v2829 = vadd.f32 %v2749, %v2824
    %v2830 = vadd.f32 %v2750, %v2826
    %s2831 = sld [smem:[#allocation12 + $0x36]]
    %v2832 = vstv %s2831
    %v2833 = vmul.f32 %v2832, %v2253
    %v2834 = vmul.f32 %v2832, %v2254
    %2837 = vrot.lane.b32.xlu0 %v2833, 122
    %v2838 = vpop.permute.xlu0 %2837
    %2839 = vrot.lane.b32.xlu0 %v2834, 122
    %v2840 = vpop.permute.xlu0 %2839
    %v2843 = vadd.f32 %v2829, %v2838
    %v2844 = vadd.f32 %v2830, %v2840
    %s2845 = sld [smem:[#allocation9 + $0x37]]
    %v2846 = vstv %s2845
    %v2847 = vmul.f32 %v2846, %v2246
    %v2848 = vmul.f32 %v2846, %v2247
    %v2849 = vmul.f32 %v2846, %v2248
    %v2853 = vrot.slane %v2847, 6
    %v2854 = vrot.slane %v2848, 6
    %v2855 = vsel %vm2821, %v2853, %v2854
    %v2856 = vrot.slane %v2849, 6
    %v2857 = vsel %vm2821, %v2854, %v2856
    %v2860 = vadd.f32 %v2780, %v2855
    %v2861 = vadd.f32 %v2781, %v2857
    %s2862 = sld [smem:[#allocation12 + $0x37]]
    %v2863 = vstv %s2862
    %v2864 = vmul.f32 %v2863, %v2253
    %v2865 = vmul.f32 %v2863, %v2254
    %2868 = vrot.lane.b32.xlu0 %v2864, 122
    %v2869 = vpop.permute.xlu0 %2868
    %2870 = vrot.lane.b32.xlu0 %v2865, 122
    %v2871 = vpop.permute.xlu0 %2870
    %v2874 = vadd.f32 %v2860, %v2869
    %v2875 = vadd.f32 %v2861, %v2871
    %s2876 = sld [smem:[#allocation9 + $0x38]]
    %v2877 = vstv %s2876
    %v2878 = vmul.f32 %v2877, %v2246
    %v2879 = vmul.f32 %v2877, %v2247
    %v2880 = vmul.f32 %v2877, %v2248
    %v2884 = vrot.slane %v2878, 6
    %v2885 = vrot.slane %v2879, 6
    %v2886 = vsel %vm2821, %v2884, %v2885
    %v2887 = vrot.slane %v2880, 6
    %v2888 = vsel %vm2821, %v2885, %v2887
    %v2891 = vadd.f32 %v2811, %v2886
    %v2892 = vadd.f32 %v2812, %v2888
    %s2893 = sld [smem:[#allocation12 + $0x38]]
    %v2894 = vstv %s2893
    %v2895 = vmul.f32 %v2894, %v2253
    %v2896 = vmul.f32 %v2894, %v2254
    %2899 = vrot.lane.b32.xlu0 %v2895, 122
    %v2900 = vpop.permute.xlu0 %2899
    %2901 = vrot.lane.b32.xlu0 %v2896, 122
    %v2902 = vpop.permute.xlu0 %2901
    %v2905 = vadd.f32 %v2891, %v2900
    %v2906 = vadd.f32 %v2892, %v2902
    %s2907 = sld [smem:[#allocation9 + $0x3]]
    %v2908 = vstv %s2907
    %v2909 = vmul.f32 %v2908, %v2272
    %v2910 = vmul.f32 %v2908, %v2273
    %v2911 = vadd.f32 %v2843, %v2909
    %v2912 = vadd.f32 %v2844, %v2910
    %s2913 = sld [smem:[#allocation12 + $0x3]]
    %v2914 = vstv %s2913
    %v2915 = vmul.f32 %v2914, %v2279
    %v2916 = vmul.f32 %v2914, %v2280
    %v2917 = vadd.f32 %v2911, %v2915
    %v2918 = vadd.f32 %v2912, %v2916
    %s2919 = sld [smem:[#allocation9 + $0x4]]
    %v2920 = vstv %s2919
    %v2921 = vmul.f32 %v2920, %v2272
    %v2922 = vmul.f32 %v2920, %v2273
    %v2923 = vadd.f32 %v2874, %v2921
    %v2924 = vadd.f32 %v2875, %v2922
    %s2925 = sld [smem:[#allocation12 + $0x4]]
    %v2926 = vstv %s2925
    %v2927 = vmul.f32 %v2926, %v2279
    %v2928 = vmul.f32 %v2926, %v2280
    %v2929 = vadd.f32 %v2923, %v2927
    %v2930 = vadd.f32 %v2924, %v2928
    %s2931 = sld [smem:[#allocation9 + $0x5]]
    %v2932 = vstv %s2931
    %v2933 = vmul.f32 %v2932, %v2272
    %v2934 = vmul.f32 %v2932, %v2273
    %v2935 = vadd.f32 %v2905, %v2933
    %v2936 = vadd.f32 %v2906, %v2934
    %s2937 = sld [smem:[#allocation12 + $0x5]]
    %v2938 = vstv %s2937
    %v2939 = vmul.f32 %v2938, %v2279
    %v2940 = vmul.f32 %v2938, %v2280
    %v2941 = vadd.f32 %v2935, %v2939
    %v2942 = vadd.f32 %v2936, %v2940
    %s2943 = sld [smem:[#allocation9 + $0xc]]
    %v2944 = vstv %s2943
    %v2945 = vmul.f32 %v2944, %v2272
    %v2946 = vmul.f32 %v2944, %v2273
    %v2947 = vmul.f32 %v2944, %v2274
    %v2951 = vrot.slane %v2945, 1
    %v2952 = vrot.slane %v2946, 1
    %v2953 = vsel %vm2351, %v2951, %v2952
    %v2954 = vrot.slane %v2947, 1
    %v2955 = vsel %vm2351, %v2952, %v2954
    %v2958 = vadd.f32 %v2917, %v2953
    %v2959 = vadd.f32 %v2918, %v2955
    %s2960 = sld [smem:[#allocation12 + $0xc]]
    %v2961 = vstv %s2960
    %v2962 = vmul.f32 %v2961, %v2279
    %v2963 = vmul.f32 %v2961, %v2280
    %2966 = vrot.lane.b32.xlu0 %v2962, 127
    %v2967 = vpop.permute.xlu0 %2966
    %2968 = vrot.lane.b32.xlu0 %v2963, 127
    %v2969 = vpop.permute.xlu0 %2968
    %v2972 = vadd.f32 %v2958, %v2967
    %v2973 = vadd.f32 %v2959, %v2969
    %s2974 = sld [smem:[#allocation9 + $0xd]]
    %v2975 = vstv %s2974
    %v2976 = vmul.f32 %v2975, %v2272
    %v2977 = vmul.f32 %v2975, %v2273
    %v2978 = vmul.f32 %v2975, %v2274
    %v2982 = vrot.slane %v2976, 1
    %v2983 = vrot.slane %v2977, 1
    %v2984 = vsel %vm2351, %v2982, %v2983
    %v2985 = vrot.slane %v2978, 1
    %v2986 = vsel %vm2351, %v2983, %v2985
    %v2989 = vadd.f32 %v2929, %v2984
    %v2990 = vadd.f32 %v2930, %v2986
    %s2991 = sld [smem:[#allocation12 + $0xd]]
    %v2992 = vstv %s2991
    %v2993 = vmul.f32 %v2992, %v2279
    %v2994 = vmul.f32 %v2992, %v2280
    %2997 = vrot.lane.b32.xlu0 %v2993, 127
    %v2998 = vpop.permute.xlu0 %2997
    %2999 = vrot.lane.b32.xlu0 %v2994, 127
    %v3000 = vpop.permute.xlu0 %2999
    %v3003 = vadd.f32 %v2989, %v2998
    %v3004 = vadd.f32 %v2990, %v3000
    %s3005 = sld [smem:[#allocation9 + $0xe]]
    %v3006 = vstv %s3005
    %v3007 = vmul.f32 %v3006, %v2272
    %v3008 = vmul.f32 %v3006, %v2273
    %v3009 = vmul.f32 %v3006, %v2274
    %v3013 = vrot.slane %v3007, 1
    %v3014 = vrot.slane %v3008, 1
    %v3015 = vsel %vm2351, %v3013, %v3014
    %v3016 = vrot.slane %v3009, 1
    %v3017 = vsel %vm2351, %v3014, %v3016
    %v3020 = vadd.f32 %v2941, %v3015
    %v3021 = vadd.f32 %v2942, %v3017
    %s3022 = sld [smem:[#allocation12 + $0xe]]
    %v3023 = vstv %s3022
    %v3024 = vmul.f32 %v3023, %v2279
    %v3025 = vmul.f32 %v3023, %v2280
    %3028 = vrot.lane.b32.xlu0 %v3024, 127
    %v3029 = vpop.permute.xlu0 %3028
    %3030 = vrot.lane.b32.xlu0 %v3025, 127
    %v3031 = vpop.permute.xlu0 %3030
    %v3034 = vadd.f32 %v3020, %v3029
    %v3035 = vadd.f32 %v3021, %v3031
    %s3036 = sld [smem:[#allocation9 + $0x15]]
    %v3037 = vstv %s3036
    %v3038 = vmul.f32 %v3037, %v2272
    %v3039 = vmul.f32 %v3037, %v2273
    %v3040 = vmul.f32 %v3037, %v2274
    %v3044 = vrot.slane %v3038, 2
    %v3045 = vrot.slane %v3039, 2
    %v3046 = vsel %vm2445, %v3044, %v3045
    %v3047 = vrot.slane %v3040, 2
    %v3048 = vsel %vm2445, %v3045, %v3047
    %v3051 = vadd.f32 %v2972, %v3046
    %v3052 = vadd.f32 %v2973, %v3048
    %s3053 = sld [smem:[#allocation12 + $0x15]]
    %v3054 = vstv %s3053
    %v3055 = vmul.f32 %v3054, %v2279
    %v3056 = vmul.f32 %v3054, %v2280
    %3059 = vrot.lane.b32.xlu0 %v3055, 126
    %v3060 = vpop.permute.xlu0 %3059
    %3061 = vrot.lane.b32.xlu0 %v3056, 126
    %v3062 = vpop.permute.xlu0 %3061
    %v3065 = vadd.f32 %v3051, %v3060
    %v3066 = vadd.f32 %v3052, %v3062
    %s3067 = sld [smem:[#allocation9 + $0x16]]
    %v3068 = vstv %s3067
    %v3069 = vmul.f32 %v3068, %v2272
    %v3070 = vmul.f32 %v3068, %v2273
    %v3071 = vmul.f32 %v3068, %v2274
    %v3075 = vrot.slane %v3069, 2
    %v3076 = vrot.slane %v3070, 2
    %v3077 = vsel %vm2445, %v3075, %v3076
    %v3078 = vrot.slane %v3071, 2
    %v3079 = vsel %vm2445, %v3076, %v3078
    %v3082 = vadd.f32 %v3003, %v3077
    %v3083 = vadd.f32 %v3004, %v3079
    %s3084 = sld [smem:[#allocation12 + $0x16]]
    %v3085 = vstv %s3084
    %v3086 = vmul.f32 %v3085, %v2279
    %v3087 = vmul.f32 %v3085, %v2280
    %3090 = vrot.lane.b32.xlu0 %v3086, 126
    %v3091 = vpop.permute.xlu0 %3090
    %3092 = vrot.lane.b32.xlu0 %v3087, 126
    %v3093 = vpop.permute.xlu0 %3092
    %v3096 = vadd.f32 %v3082, %v3091
    %v3097 = vadd.f32 %v3083, %v3093
    %s3098 = sld [smem:[#allocation9 + $0x17]]
    %v3099 = vstv %s3098
    %v3100 = vmul.f32 %v3099, %v2272
    %v3101 = vmul.f32 %v3099, %v2273
    %v3102 = vmul.f32 %v3099, %v2274
    %v3106 = vrot.slane %v3100, 2
    %v3107 = vrot.slane %v3101, 2
    %v3108 = vsel %vm2445, %v3106, %v3107
    %v3109 = vrot.slane %v3102, 2
    %v3110 = vsel %vm2445, %v3107, %v3109
    %v3113 = vadd.f32 %v3034, %v3108
    %v3114 = vadd.f32 %v3035, %v3110
    %s3115 = sld [smem:[#allocation12 + $0x17]]
    %v3116 = vstv %s3115
    %v3117 = vmul.f32 %v3116, %v2279
    %v3118 = vmul.f32 %v3116, %v2280
    %3121 = vrot.lane.b32.xlu0 %v3117, 126
    %v3122 = vpop.permute.xlu0 %3121
    %3123 = vrot.lane.b32.xlu0 %v3118, 126
    %v3124 = vpop.permute.xlu0 %3123
    %v3127 = vadd.f32 %v3113, %v3122
    %v3128 = vadd.f32 %v3114, %v3124
    %s3129 = sld [smem:[#allocation9 + $0x1e]]
    %v3130 = vstv %s3129
    %v3131 = vmul.f32 %v3130, %v2272
    %v3132 = vmul.f32 %v3130, %v2273
    %v3133 = vmul.f32 %v3130, %v2274
    %v3137 = vrot.slane %v3131, 3
    %v3138 = vrot.slane %v3132, 3
    %v3139 = vsel %vm2539, %v3137, %v3138
    %v3140 = vrot.slane %v3133, 3
    %v3141 = vsel %vm2539, %v3138, %v3140
    %v3144 = vadd.f32 %v3065, %v3139
    %v3145 = vadd.f32 %v3066, %v3141
    %s3146 = sld [smem:[#allocation12 + $0x1e]]
    %v3147 = vstv %s3146
    %v3148 = vmul.f32 %v3147, %v2279
    %v3149 = vmul.f32 %v3147, %v2280
    %3152 = vrot.lane.b32.xlu0 %v3148, 125
    %v3153 = vpop.permute.xlu0 %3152
    %3154 = vrot.lane.b32.xlu0 %v3149, 125
    %v3155 = vpop.permute.xlu0 %3154
    %v3158 = vadd.f32 %v3144, %v3153
    %v3159 = vadd.f32 %v3145, %v3155
    %s3160 = sld [smem:[#allocation9 + $0x1f]]
    %v3161 = vstv %s3160
    %v3162 = vmul.f32 %v3161, %v2272
    %v3163 = vmul.f32 %v3161, %v2273
    %v3164 = vmul.f32 %v3161, %v2274
    %v3168 = vrot.slane %v3162, 3
    %v3169 = vrot.slane %v3163, 3
    %v3170 = vsel %vm2539, %v3168, %v3169
    %v3171 = vrot.slane %v3164, 3
    %v3172 = vsel %vm2539, %v3169, %v3171
    %v3175 = vadd.f32 %v3096, %v3170
    %v3176 = vadd.f32 %v3097, %v3172
    %s3177 = sld [smem:[#allocation12 + $0x1f]]
    %v3178 = vstv %s3177
    %v3179 = vmul.f32 %v3178, %v2279
    %v3180 = vmul.f32 %v3178, %v2280
    %3183 = vrot.lane.b32.xlu0 %v3179, 125
    %v3184 = vpop.permute.xlu0 %3183
    %3185 = vrot.lane.b32.xlu0 %v3180, 125
    %v3186 = vpop.permute.xlu0 %3185
    %v3189 = vadd.f32 %v3175, %v3184
    %v3190 = vadd.f32 %v3176, %v3186
    %s3191 = sld [smem:[#allocation9 + $0x20]]
    %v3192 = vstv %s3191
    %v3193 = vmul.f32 %v3192, %v2272
    %v3194 = vmul.f32 %v3192, %v2273
    %v3195 = vmul.f32 %v3192, %v2274
    %v3199 = vrot.slane %v3193, 3
    %v3200 = vrot.slane %v3194, 3
    %v3201 = vsel %vm2539, %v3199, %v3200
    %v3202 = vrot.slane %v3195, 3
    %v3203 = vsel %vm2539, %v3200, %v3202
    %v3206 = vadd.f32 %v3127, %v3201
    %v3207 = vadd.f32 %v3128, %v3203
    %s3208 = sld [smem:[#allocation12 + $0x20]]
    %v3209 = vstv %s3208
    %v3210 = vmul.f32 %v3209, %v2279
    %v3211 = vmul.f32 %v3209, %v2280
    %3214 = vrot.lane.b32.xlu0 %v3210, 125
    %v3215 = vpop.permute.xlu0 %3214
    %3216 = vrot.lane.b32.xlu0 %v3211, 125
    %v3217 = vpop.permute.xlu0 %3216
    %v3220 = vadd.f32 %v3206, %v3215
    %v3221 = vadd.f32 %v3207, %v3217
    %s3222 = sld [smem:[#allocation9 + $0x27]]
    %v3223 = vstv %s3222
    %v3224 = vmul.f32 %v3223, %v2272
    %v3225 = vmul.f32 %v3223, %v2273
    %v3226 = vmul.f32 %v3223, %v2274
    %v3230 = vrot.slane %v3224, 4
    %v3231 = vrot.slane %v3225, 4
    %v3232 = vsel %vm2633, %v3230, %v3231
    %v3233 = vrot.slane %v3226, 4
    %v3234 = vsel %vm2633, %v3231, %v3233
    %v3237 = vadd.f32 %v3158, %v3232
    %v3238 = vadd.f32 %v3159, %v3234
    %s3239 = sld [smem:[#allocation12 + $0x27]]
    %v3240 = vstv %s3239
    %v3241 = vmul.f32 %v3240, %v2279
    %v3242 = vmul.f32 %v3240, %v2280
    %3245 = vrot.lane.b32.xlu0 %v3241, 124
    %v3246 = vpop.permute.xlu0 %3245
    %3247 = vrot.lane.b32.xlu0 %v3242, 124
    %v3248 = vpop.permute.xlu0 %3247
    %v3251 = vadd.f32 %v3237, %v3246
    %v3252 = vadd.f32 %v3238, %v3248
    %s3253 = sld [smem:[#allocation9 + $0x28]]
    %v3254 = vstv %s3253
    %v3255 = vmul.f32 %v3254, %v2272
    %v3256 = vmul.f32 %v3254, %v2273
    %v3257 = vmul.f32 %v3254, %v2274
    %v3261 = vrot.slane %v3255, 4
    %v3262 = vrot.slane %v3256, 4
    %v3263 = vsel %vm2633, %v3261, %v3262
    %v3264 = vrot.slane %v3257, 4
    %v3265 = vsel %vm2633, %v3262, %v3264
    %v3268 = vadd.f32 %v3189, %v3263
    %v3269 = vadd.f32 %v3190, %v3265
    %s3270 = sld [smem:[#allocation12 + $0x28]]
    %v3271 = vstv %s3270
    %v3272 = vmul.f32 %v3271, %v2279
    %v3273 = vmul.f32 %v3271, %v2280
    %3276 = vrot.lane.b32.xlu0 %v3272, 124
    %v3277 = vpop.permute.xlu0 %3276
    %3278 = vrot.lane.b32.xlu0 %v3273, 124
    %v3279 = vpop.permute.xlu0 %3278
    %v3282 = vadd.f32 %v3268, %v3277
    %v3283 = vadd.f32 %v3269, %v3279
    %s3284 = sld [smem:[#allocation9 + $0x29]]
    %v3285 = vstv %s3284
    %v3286 = vmul.f32 %v3285, %v2272
    %v3287 = vmul.f32 %v3285, %v2273
    %v3288 = vmul.f32 %v3285, %v2274
    %v3292 = vrot.slane %v3286, 4
    %v3293 = vrot.slane %v3287, 4
    %v3294 = vsel %vm2633, %v3292, %v3293
    %v3295 = vrot.slane %v3288, 4
    %v3296 = vsel %vm2633, %v3293, %v3295
    %v3299 = vadd.f32 %v3220, %v3294
    %v3300 = vadd.f32 %v3221, %v3296
    %s3301 = sld [smem:[#allocation12 + $0x29]]
    %v3302 = vstv %s3301
    %v3303 = vmul.f32 %v3302, %v2279
    %v3304 = vmul.f32 %v3302, %v2280
    %3307 = vrot.lane.b32.xlu0 %v3303, 124
    %v3308 = vpop.permute.xlu0 %3307
    %3309 = vrot.lane.b32.xlu0 %v3304, 124
    %v3310 = vpop.permute.xlu0 %3309
    %v3313 = vadd.f32 %v3299, %v3308
    %v3314 = vadd.f32 %v3300, %v3310
    %s3315 = sld [smem:[#allocation9 + $0x30]]
    %v3316 = vstv %s3315
    %v3317 = vmul.f32 %v3316, %v2272
    %v3318 = vmul.f32 %v3316, %v2273
    %v3319 = vmul.f32 %v3316, %v2274
    %v3323 = vrot.slane %v3317, 5
    %v3324 = vrot.slane %v3318, 5
    %v3325 = vsel %vm2727, %v3323, %v3324
    %v3326 = vrot.slane %v3319, 5
    %v3327 = vsel %vm2727, %v3324, %v3326
    %v3330 = vadd.f32 %v3251, %v3325
    %v3331 = vadd.f32 %v3252, %v3327
    %s3332 = sld [smem:[#allocation12 + $0x30]]
    %v3333 = vstv %s3332
    %v3334 = vmul.f32 %v3333, %v2279
    %v3335 = vmul.f32 %v3333, %v2280
    %3338 = vrot.lane.b32.xlu0 %v3334, 123
    %v3339 = vpop.permute.xlu0 %3338
    %3340 = vrot.lane.b32.xlu0 %v3335, 123
    %v3341 = vpop.permute.xlu0 %3340
    %v3344 = vadd.f32 %v3330, %v3339
    %v3345 = vadd.f32 %v3331, %v3341
    %s3346 = sld [smem:[#allocation9 + $0x31]]
    %v3347 = vstv %s3346
    %v3348 = vmul.f32 %v3347, %v2272
    %v3349 = vmul.f32 %v3347, %v2273
    %v3350 = vmul.f32 %v3347, %v2274
    %v3354 = vrot.slane %v3348, 5
    %v3355 = vrot.slane %v3349, 5
    %v3356 = vsel %vm2727, %v3354, %v3355
    %v3357 = vrot.slane %v3350, 5
    %v3358 = vsel %vm2727, %v3355, %v3357
    %v3361 = vadd.f32 %v3282, %v3356
    %v3362 = vadd.f32 %v3283, %v3358
    %s3363 = sld [smem:[#allocation12 + $0x31]]
    %v3364 = vstv %s3363
    %v3365 = vmul.f32 %v3364, %v2279
    %v3366 = vmul.f32 %v3364, %v2280
    %3369 = vrot.lane.b32.xlu0 %v3365, 123
    %v3370 = vpop.permute.xlu0 %3369
    %3371 = vrot.lane.b32.xlu0 %v3366, 123
    %v3372 = vpop.permute.xlu0 %3371
    %v3375 = vadd.f32 %v3361, %v3370
    %v3376 = vadd.f32 %v3362, %v3372
    %s3377 = sld [smem:[#allocation9 + $0x32]]
    %v3378 = vstv %s3377
    %v3379 = vmul.f32 %v3378, %v2272
    %v3380 = vmul.f32 %v3378, %v2273
    %v3381 = vmul.f32 %v3378, %v2274
    %v3385 = vrot.slane %v3379, 5
    %v3386 = vrot.slane %v3380, 5
    %v3387 = vsel %vm2727, %v3385, %v3386
    %v3388 = vrot.slane %v3381, 5
    %v3389 = vsel %vm2727, %v3386, %v3388
    %v3392 = vadd.f32 %v3313, %v3387
    %v3393 = vadd.f32 %v3314, %v3389
    %s3394 = sld [smem:[#allocation12 + $0x32]]
    %v3395 = vstv %s3394
    %v3396 = vmul.f32 %v3395, %v2279
    %v3397 = vmul.f32 %v3395, %v2280
    %3400 = vrot.lane.b32.xlu0 %v3396, 123
    %v3401 = vpop.permute.xlu0 %3400
    %3402 = vrot.lane.b32.xlu0 %v3397, 123
    %v3403 = vpop.permute.xlu0 %3402
    %v3406 = vadd.f32 %v3392, %v3401
    %v3407 = vadd.f32 %v3393, %v3403
    %s3408 = sld [smem:[#allocation9 + $0x39]]
    %v3409 = vstv %s3408
    %v3410 = vmul.f32 %v3409, %v2272
    %v3411 = vmul.f32 %v3409, %v2273
    %v3412 = vmul.f32 %v3409, %v2274
    %v3416 = vrot.slane %v3410, 6
    %v3417 = vrot.slane %v3411, 6
    %v3418 = vsel %vm2821, %v3416, %v3417
    %v3419 = vrot.slane %v3412, 6
    %v3420 = vsel %vm2821, %v3417, %v3419
    %v3423 = vadd.f32 %v3344, %v3418
    %v3424 = vadd.f32 %v3345, %v3420
    %s3425 = sld [smem:[#allocation12 + $0x39]]
    %v3426 = vstv %s3425
    %v3427 = vmul.f32 %v3426, %v2279
    %v3428 = vmul.f32 %v3426, %v2280
    %3431 = vrot.lane.b32.xlu0 %v3427, 122
    %v3432 = vpop.permute.xlu0 %3431
    %3433 = vrot.lane.b32.xlu0 %v3428, 122
    %v3434 = vpop.permute.xlu0 %3433
    %v3437 = vadd.f32 %v3423, %v3432
    %v3438 = vadd.f32 %v3424, %v3434
    %s3439 = sld [smem:[#allocation9 + $0x3a]]
    %v3440 = vstv %s3439
    %v3441 = vmul.f32 %v3440, %v2272
    %v3442 = vmul.f32 %v3440, %v2273
    %v3443 = vmul.f32 %v3440, %v2274
    %v3447 = vrot.slane %v3441, 6
    %v3448 = vrot.slane %v3442, 6
    %v3449 = vsel %vm2821, %v3447, %v3448
    %v3450 = vrot.slane %v3443, 6
    %v3451 = vsel %vm2821, %v3448, %v3450
    %v3454 = vadd.f32 %v3375, %v3449
    %v3455 = vadd.f32 %v3376, %v3451
    %s3456 = sld [smem:[#allocation12 + $0x3a]]
    %v3457 = vstv %s3456
    %v3458 = vmul.f32 %v3457, %v2279
    %v3459 = vmul.f32 %v3457, %v2280
    %3462 = vrot.lane.b32.xlu0 %v3458, 122
    %v3463 = vpop.permute.xlu0 %3462
    %3464 = vrot.lane.b32.xlu0 %v3459, 122
    %v3465 = vpop.permute.xlu0 %3464
    %v3468 = vadd.f32 %v3454, %v3463
    %v3469 = vadd.f32 %v3455, %v3465
    %s3470 = sld [smem:[#allocation9 + $0x3b]]
    %v3471 = vstv %s3470
    %v3472 = vmul.f32 %v3471, %v2272
    %v3473 = vmul.f32 %v3471, %v2273
    %v3474 = vmul.f32 %v3471, %v2274
    %v3478 = vrot.slane %v3472, 6
    %v3479 = vrot.slane %v3473, 6
    %v3480 = vsel %vm2821, %v3478, %v3479
    %v3481 = vrot.slane %v3474, 6
    %v3482 = vsel %vm2821, %v3479, %v3481
    %v3485 = vadd.f32 %v3406, %v3480
    %v3486 = vadd.f32 %v3407, %v3482
    %s3487 = sld [smem:[#allocation12 + $0x3b]]
    %v3488 = vstv %s3487
    %v3489 = vmul.f32 %v3488, %v2279
    %v3490 = vmul.f32 %v3488, %v2280
    %3493 = vrot.lane.b32.xlu0 %v3489, 122
    %v3494 = vpop.permute.xlu0 %3493
    %3495 = vrot.lane.b32.xlu0 %v3490, 122
    %v3496 = vpop.permute.xlu0 %3495
    %v3499 = vadd.f32 %v3485, %v3494
    %v3500 = vadd.f32 %v3486, %v3496
    %s3501 = sld [smem:[#allocation9 + $0x6]]
    %v3502 = vstv %s3501
    %v3503 = vmul.f32 %v3502, %v2298
    %v3504 = vmul.f32 %v3502, %v2299
    %v3505 = vadd.f32 %v3437, %v3503
    %v3506 = vadd.f32 %v3438, %v3504
    %s3507 = sld [smem:[#allocation12 + $0x6]]
    %v3508 = vstv %s3507
    %v3509 = vmul.f32 %v3508, %v2305
    %v3510 = vmul.f32 %v3508, %v2306
    %v3511 = vadd.f32 %v3505, %v3509
    %v3512 = vadd.f32 %v3506, %v3510
    %s3513 = sld [smem:[#allocation9 + $0x7]]
    %v3514 = vstv %s3513
    %v3515 = vmul.f32 %v3514, %v2298
    %v3516 = vmul.f32 %v3514, %v2299
    %v3517 = vadd.f32 %v3468, %v3515
    %v3518 = vadd.f32 %v3469, %v3516
    %s3519 = sld [smem:[#allocation12 + $0x7]]
    %v3520 = vstv %s3519
    %v3521 = vmul.f32 %v3520, %v2305
    %v3522 = vmul.f32 %v3520, %v2306
    %v3523 = vadd.f32 %v3517, %v3521
    %v3524 = vadd.f32 %v3518, %v3522
    %s3525 = sld [smem:[#allocation9 + $0x8]]
    %v3526 = vstv %s3525
    %v3527 = vmul.f32 %v3526, %v2298
    %v3528 = vmul.f32 %v3526, %v2299
    %v3529 = vadd.f32 %v3499, %v3527
    %v3530 = vadd.f32 %v3500, %v3528
    %s3531 = sld [smem:[#allocation12 + $0x8]]
    %v3532 = vstv %s3531
    %v3533 = vmul.f32 %v3532, %v2305
    %v3534 = vmul.f32 %v3532, %v2306
    %v3535 = vadd.f32 %v3529, %v3533
    %v3536 = vadd.f32 %v3530, %v3534
    %s3537 = sld [smem:[#allocation9 + $0xf]]
    %v3538 = vstv %s3537
    %v3539 = vmul.f32 %v3538, %v2298
    %v3540 = vmul.f32 %v3538, %v2299
    %v3541 = vmul.f32 %v3538, %v2300
    %v3545 = vrot.slane %v3539, 1
    %v3546 = vrot.slane %v3540, 1
    %v3547 = vsel %vm2351, %v3545, %v3546
    %v3548 = vrot.slane %v3541, 1
    %v3549 = vsel %vm2351, %v3546, %v3548
    %v3552 = vadd.f32 %v3511, %v3547
    %v3553 = vadd.f32 %v3512, %v3549
    %s3554 = sld [smem:[#allocation12 + $0xf]]
    %v3555 = vstv %s3554
    %v3556 = vmul.f32 %v3555, %v2305
    %v3557 = vmul.f32 %v3555, %v2306
    %3560 = vrot.lane.b32.xlu0 %v3556, 127
    %v3561 = vpop.permute.xlu0 %3560
    %3562 = vrot.lane.b32.xlu0 %v3557, 127
    %v3563 = vpop.permute.xlu0 %3562
    %v3566 = vadd.f32 %v3552, %v3561
    %v3567 = vadd.f32 %v3553, %v3563
    %s3568 = sld [smem:[#allocation9 + $0x10]]
    %v3569 = vstv %s3568
    %v3570 = vmul.f32 %v3569, %v2298
    %v3571 = vmul.f32 %v3569, %v2299
    %v3572 = vmul.f32 %v3569, %v2300
    %v3576 = vrot.slane %v3570, 1
    %v3577 = vrot.slane %v3571, 1
    %v3578 = vsel %vm2351, %v3576, %v3577
    %v3579 = vrot.slane %v3572, 1
    %v3580 = vsel %vm2351, %v3577, %v3579
    %v3583 = vadd.f32 %v3523, %v3578
    %v3584 = vadd.f32 %v3524, %v3580
    %s3585 = sld [smem:[#allocation12 + $0x10]]
    %v3586 = vstv %s3585
    %v3587 = vmul.f32 %v3586, %v2305
    %v3588 = vmul.f32 %v3586, %v2306
    %3591 = vrot.lane.b32.xlu0 %v3587, 127
    %v3592 = vpop.permute.xlu0 %3591
    %3593 = vrot.lane.b32.xlu0 %v3588, 127
    %v3594 = vpop.permute.xlu0 %3593
    %v3597 = vadd.f32 %v3583, %v3592
    %v3598 = vadd.f32 %v3584, %v3594
    %s3599 = sld [smem:[#allocation9 + $0x11]]
    %v3600 = vstv %s3599
    %v3601 = vmul.f32 %v3600, %v2298
    %v3602 = vmul.f32 %v3600, %v2299
    %v3603 = vmul.f32 %v3600, %v2300
    %v3607 = vrot.slane %v3601, 1
    %v3608 = vrot.slane %v3602, 1
    %v3609 = vsel %vm2351, %v3607, %v3608
    %v3610 = vrot.slane %v3603, 1
    %v3611 = vsel %vm2351, %v3608, %v3610
    %v3614 = vadd.f32 %v3535, %v3609
    %v3615 = vadd.f32 %v3536, %v3611
    %s3616 = sld [smem:[#allocation12 + $0x11]]
    %v3617 = vstv %s3616
    %v3618 = vmul.f32 %v3617, %v2305
    %v3619 = vmul.f32 %v3617, %v2306
    %3622 = vrot.lane.b32.xlu0 %v3618, 127
    %v3623 = vpop.permute.xlu0 %3622
    %3624 = vrot.lane.b32.xlu0 %v3619, 127
    %v3625 = vpop.permute.xlu0 %3624
    %v3628 = vadd.f32 %v3614, %v3623
    %v3629 = vadd.f32 %v3615, %v3625
    %s3630 = sld [smem:[#allocation9 + $0x18]]
    %v3631 = vstv %s3630
    %v3632 = vmul.f32 %v3631, %v2298
    %v3633 = vmul.f32 %v3631, %v2299
    %v3634 = vmul.f32 %v3631, %v2300
    %v3638 = vrot.slane %v3632, 2
    %v3639 = vrot.slane %v3633, 2
    %v3640 = vsel %vm2445, %v3638, %v3639
    %v3641 = vrot.slane %v3634, 2
    %v3642 = vsel %vm2445, %v3639, %v3641
    %v3645 = vadd.f32 %v3566, %v3640
    %v3646 = vadd.f32 %v3567, %v3642
    %s3647 = sld [smem:[#allocation12 + $0x18]]
    %v3648 = vstv %s3647
    %v3649 = vmul.f32 %v3648, %v2305
    %v3650 = vmul.f32 %v3648, %v2306
    %3653 = vrot.lane.b32.xlu0 %v3649, 126
    %v3654 = vpop.permute.xlu0 %3653
    %3655 = vrot.lane.b32.xlu0 %v3650, 126
    %v3656 = vpop.permute.xlu0 %3655
    %v3659 = vadd.f32 %v3645, %v3654
    %v3660 = vadd.f32 %v3646, %v3656
    %s3661 = sld [smem:[#allocation9 + $0x19]]
    %v3662 = vstv %s3661
    %v3663 = vmul.f32 %v3662, %v2298
    %v3664 = vmul.f32 %v3662, %v2299
    %v3665 = vmul.f32 %v3662, %v2300
    %v3669 = vrot.slane %v3663, 2
    %v3670 = vrot.slane %v3664, 2
    %v3671 = vsel %vm2445, %v3669, %v3670
    %v3672 = vrot.slane %v3665, 2
    %v3673 = vsel %vm2445, %v3670, %v3672
    %v3676 = vadd.f32 %v3597, %v3671
    %v3677 = vadd.f32 %v3598, %v3673
    %s3678 = sld [smem:[#allocation12 + $0x19]]
    %v3679 = vstv %s3678
    %v3680 = vmul.f32 %v3679, %v2305
    %v3681 = vmul.f32 %v3679, %v2306
    %3684 = vrot.lane.b32.xlu0 %v3680, 126
    %v3685 = vpop.permute.xlu0 %3684
    %3686 = vrot.lane.b32.xlu0 %v3681, 126
    %v3687 = vpop.permute.xlu0 %3686
    %v3690 = vadd.f32 %v3676, %v3685
    %v3691 = vadd.f32 %v3677, %v3687
    %s3692 = sld [smem:[#allocation9 + $0x1a]]
    %v3693 = vstv %s3692
    %v3694 = vmul.f32 %v3693, %v2298
    %v3695 = vmul.f32 %v3693, %v2299
    %v3696 = vmul.f32 %v3693, %v2300
    %v3700 = vrot.slane %v3694, 2
    %v3701 = vrot.slane %v3695, 2
    %v3702 = vsel %vm2445, %v3700, %v3701
    %v3703 = vrot.slane %v3696, 2
    %v3704 = vsel %vm2445, %v3701, %v3703
    %v3707 = vadd.f32 %v3628, %v3702
    %v3708 = vadd.f32 %v3629, %v3704
    %s3709 = sld [smem:[#allocation12 + $0x1a]]
    %v3710 = vstv %s3709
    %v3711 = vmul.f32 %v3710, %v2305
    %v3712 = vmul.f32 %v3710, %v2306
    %3715 = vrot.lane.b32.xlu0 %v3711, 126
    %v3716 = vpop.permute.xlu0 %3715
    %3717 = vrot.lane.b32.xlu0 %v3712, 126
    %v3718 = vpop.permute.xlu0 %3717
    %v3721 = vadd.f32 %v3707, %v3716
    %v3722 = vadd.f32 %v3708, %v3718
    %s3723 = sld [smem:[#allocation9 + $0x21]]
    %v3724 = vstv %s3723
    %v3725 = vmul.f32 %v3724, %v2298
    %v3726 = vmul.f32 %v3724, %v2299
    %v3727 = vmul.f32 %v3724, %v2300
    %v3731 = vrot.slane %v3725, 3
    %v3732 = vrot.slane %v3726, 3
    %v3733 = vsel %vm2539, %v3731, %v3732
    %v3734 = vrot.slane %v3727, 3
    %v3735 = vsel %vm2539, %v3732, %v3734
    %v3738 = vadd.f32 %v3659, %v3733
    %v3739 = vadd.f32 %v3660, %v3735
    %s3740 = sld [smem:[#allocation12 + $0x21]]
    %v3741 = vstv %s3740
    %v3742 = vmul.f32 %v3741, %v2305
    %v3743 = vmul.f32 %v3741, %v2306
    %3746 = vrot.lane.b32.xlu0 %v3742, 125
    %v3747 = vpop.permute.xlu0 %3746
    %3748 = vrot.lane.b32.xlu0 %v3743, 125
    %v3749 = vpop.permute.xlu0 %3748
    %v3752 = vadd.f32 %v3738, %v3747
    %v3753 = vadd.f32 %v3739, %v3749
    %s3754 = sld [smem:[#allocation9 + $0x22]]
    %v3755 = vstv %s3754
    %v3756 = vmul.f32 %v3755, %v2298
    %v3757 = vmul.f32 %v3755, %v2299
    %v3758 = vmul.f32 %v3755, %v2300
    %v3762 = vrot.slane %v3756, 3
    %v3763 = vrot.slane %v3757, 3
    %v3764 = vsel %vm2539, %v3762, %v3763
    %v3765 = vrot.slane %v3758, 3
    %v3766 = vsel %vm2539, %v3763, %v3765
    %v3769 = vadd.f32 %v3690, %v3764
    %v3770 = vadd.f32 %v3691, %v3766
    %s3771 = sld [smem:[#allocation12 + $0x22]]
    %v3772 = vstv %s3771
    %v3773 = vmul.f32 %v3772, %v2305
    %v3774 = vmul.f32 %v3772, %v2306
    %3777 = vrot.lane.b32.xlu0 %v3773, 125
    %v3778 = vpop.permute.xlu0 %3777
    %3779 = vrot.lane.b32.xlu0 %v3774, 125
    %v3780 = vpop.permute.xlu0 %3779
    %v3783 = vadd.f32 %v3769, %v3778
    %v3784 = vadd.f32 %v3770, %v3780
    %s3785 = sld [smem:[#allocation9 + $0x23]]
    %v3786 = vstv %s3785
    %v3787 = vmul.f32 %v3786, %v2298
    %v3788 = vmul.f32 %v3786, %v2299
    %v3789 = vmul.f32 %v3786, %v2300
    %v3793 = vrot.slane %v3787, 3
    %v3794 = vrot.slane %v3788, 3
    %v3795 = vsel %vm2539, %v3793, %v3794
    %v3796 = vrot.slane %v3789, 3
    %v3797 = vsel %vm2539, %v3794, %v3796
    %v3800 = vadd.f32 %v3721, %v3795
    %v3801 = vadd.f32 %v3722, %v3797
    %s3802 = sld [smem:[#allocation12 + $0x23]]
    %v3803 = vstv %s3802
    %v3804 = vmul.f32 %v3803, %v2305
    %v3805 = vmul.f32 %v3803, %v2306
    %3808 = vrot.lane.b32.xlu0 %v3804, 125
    %v3809 = vpop.permute.xlu0 %3808
    %3810 = vrot.lane.b32.xlu0 %v3805, 125
    %v3811 = vpop.permute.xlu0 %3810
    %v3814 = vadd.f32 %v3800, %v3809
    %v3815 = vadd.f32 %v3801, %v3811
    %s3816 = sld [smem:[#allocation9 + $0x2a]]
    %v3817 = vstv %s3816
    %v3818 = vmul.f32 %v3817, %v2298
    %v3819 = vmul.f32 %v3817, %v2299
    %v3820 = vmul.f32 %v3817, %v2300
    %v3824 = vrot.slane %v3818, 4
    %v3825 = vrot.slane %v3819, 4
    %v3826 = vsel %vm2633, %v3824, %v3825
    %v3827 = vrot.slane %v3820, 4
    %v3828 = vsel %vm2633, %v3825, %v3827
    %v3831 = vadd.f32 %v3752, %v3826
    %v3832 = vadd.f32 %v3753, %v3828
    %s3833 = sld [smem:[#allocation12 + $0x2a]]
    %v3834 = vstv %s3833
    %v3835 = vmul.f32 %v3834, %v2305
    %v3836 = vmul.f32 %v3834, %v2306
    %3839 = vrot.lane.b32.xlu0 %v3835, 124
    %v3840 = vpop.permute.xlu0 %3839
    %3841 = vrot.lane.b32.xlu0 %v3836, 124
    %v3842 = vpop.permute.xlu0 %3841
    %v3845 = vadd.f32 %v3831, %v3840
    %v3846 = vadd.f32 %v3832, %v3842
    %s3847 = sld [smem:[#allocation9 + $0x2b]]
    %v3848 = vstv %s3847
    %v3849 = vmul.f32 %v3848, %v2298
    %v3850 = vmul.f32 %v3848, %v2299
    %v3851 = vmul.f32 %v3848, %v2300
    %v3855 = vrot.slane %v3849, 4
    %v3856 = vrot.slane %v3850, 4
    %v3857 = vsel %vm2633, %v3855, %v3856
    %v3858 = vrot.slane %v3851, 4
    %v3859 = vsel %vm2633, %v3856, %v3858
    %v3862 = vadd.f32 %v3783, %v3857
    %v3863 = vadd.f32 %v3784, %v3859
    %s3864 = sld [smem:[#allocation12 + $0x2b]]
    %v3865 = vstv %s3864
    %v3866 = vmul.f32 %v3865, %v2305
    %v3867 = vmul.f32 %v3865, %v2306
    %3870 = vrot.lane.b32.xlu0 %v3866, 124
    %v3871 = vpop.permute.xlu0 %3870
    %3872 = vrot.lane.b32.xlu0 %v3867, 124
    %v3873 = vpop.permute.xlu0 %3872
    %v3876 = vadd.f32 %v3862, %v3871
    %v3877 = vadd.f32 %v3863, %v3873
    %s3878 = sld [smem:[#allocation9 + $0x2c]]
    %v3879 = vstv %s3878
    %v3880 = vmul.f32 %v3879, %v2298
    %v3881 = vmul.f32 %v3879, %v2299
    %v3882 = vmul.f32 %v3879, %v2300
    %v3886 = vrot.slane %v3880, 4
    %v3887 = vrot.slane %v3881, 4
    %v3888 = vsel %vm2633, %v3886, %v3887
    %v3889 = vrot.slane %v3882, 4
    %v3890 = vsel %vm2633, %v3887, %v3889
    %v3893 = vadd.f32 %v3814, %v3888
    %v3894 = vadd.f32 %v3815, %v3890
    %s3895 = sld [smem:[#allocation12 + $0x2c]]
    %v3896 = vstv %s3895
    %v3897 = vmul.f32 %v3896, %v2305
    %v3898 = vmul.f32 %v3896, %v2306
    %3901 = vrot.lane.b32.xlu0 %v3897, 124
    %v3902 = vpop.permute.xlu0 %3901
    %3903 = vrot.lane.b32.xlu0 %v3898, 124
    %v3904 = vpop.permute.xlu0 %3903
    %v3907 = vadd.f32 %v3893, %v3902
    %v3908 = vadd.f32 %v3894, %v3904
    %s3909 = sld [smem:[#allocation9 + $0x33]]
    %v3910 = vstv %s3909
    %v3911 = vmul.f32 %v3910, %v2298
    %v3912 = vmul.f32 %v3910, %v2299
    %v3913 = vmul.f32 %v3910, %v2300
    %v3917 = vrot.slane %v3911, 5
    %v3918 = vrot.slane %v3912, 5
    %v3919 = vsel %vm2727, %v3917, %v3918
    %v3920 = vrot.slane %v3913, 5
    %v3921 = vsel %vm2727, %v3918, %v3920
    %v3924 = vadd.f32 %v3845, %v3919
    %v3925 = vadd.f32 %v3846, %v3921
    %s3926 = sld [smem:[#allocation12 + $0x33]]
    %v3927 = vstv %s3926
    %v3928 = vmul.f32 %v3927, %v2305
    %v3929 = vmul.f32 %v3927, %v2306
    %3932 = vrot.lane.b32.xlu0 %v3928, 123
    %v3933 = vpop.permute.xlu0 %3932
    %3934 = vrot.lane.b32.xlu0 %v3929, 123
    %v3935 = vpop.permute.xlu0 %3934
    %v3938 = vadd.f32 %v3924, %v3933
    %v3939 = vadd.f32 %v3925, %v3935
    %s3940 = sld [smem:[#allocation9 + $0x34]]
    %v3941 = vstv %s3940
    %v3942 = vmul.f32 %v3941, %v2298
    %v3943 = vmul.f32 %v3941, %v2299
    %v3944 = vmul.f32 %v3941, %v2300
    %v3948 = vrot.slane %v3942, 5
    %v3949 = vrot.slane %v3943, 5
    %v3950 = vsel %vm2727, %v3948, %v3949
    %v3951 = vrot.slane %v3944, 5
    %v3952 = vsel %vm2727, %v3949, %v3951
    %v3955 = vadd.f32 %v3876, %v3950
    %v3956 = vadd.f32 %v3877, %v3952
    %s3957 = sld [smem:[#allocation12 + $0x34]]
    %v3958 = vstv %s3957
    %v3959 = vmul.f32 %v3958, %v2305
    %v3960 = vmul.f32 %v3958, %v2306
    %3963 = vrot.lane.b32.xlu0 %v3959, 123
    %v3964 = vpop.permute.xlu0 %3963
    %3965 = vrot.lane.b32.xlu0 %v3960, 123
    %v3966 = vpop.permute.xlu0 %3965
    %v3969 = vadd.f32 %v3955, %v3964
    %v3970 = vadd.f32 %v3956, %v3966
    %s3971 = sld [smem:[#allocation9 + $0x35]]
    %v3972 = vstv %s3971
    %v3973 = vmul.f32 %v3972, %v2298
    %v3974 = vmul.f32 %v3972, %v2299
    %v3975 = vmul.f32 %v3972, %v2300
    %v3979 = vrot.slane %v3973, 5
    %v3980 = vrot.slane %v3974, 5
    %v3981 = vsel %vm2727, %v3979, %v3980
    %v3982 = vrot.slane %v3975, 5
    %v3983 = vsel %vm2727, %v3980, %v3982
    %v3986 = vadd.f32 %v3907, %v3981
    %v3987 = vadd.f32 %v3908, %v3983
    %s3988 = sld [smem:[#allocation12 + $0x35]]
    %v3989 = vstv %s3988
    %v3990 = vmul.f32 %v3989, %v2305
    %v3991 = vmul.f32 %v3989, %v2306
    %3994 = vrot.lane.b32.xlu0 %v3990, 123
    %v3995 = vpop.permute.xlu0 %3994
    %3996 = vrot.lane.b32.xlu0 %v3991, 123
    %v3997 = vpop.permute.xlu0 %3996
    %v4000 = vadd.f32 %v3986, %v3995
    %v4001 = vadd.f32 %v3987, %v3997
    %s4002 = sld [smem:[#allocation9 + $0x3c]]
    %v4003 = vstv %s4002
    %v4004 = vmul.f32 %v4003, %v2298
    %v4005 = vmul.f32 %v4003, %v2299
    %v4006 = vmul.f32 %v4003, %v2300
    %v4010 = vrot.slane %v4004, 6
    %v4011 = vrot.slane %v4005, 6
    %v4012 = vsel %vm2821, %v4010, %v4011
    %v4013 = vrot.slane %v4006, 6
    %v4014 = vsel %vm2821, %v4011, %v4013
    %v4017 = vadd.f32 %v3938, %v4012
    %v4018 = vadd.f32 %v3939, %v4014
    %s4019 = sld [smem:[#allocation12 + $0x3c]]
    %v4020 = vstv %s4019
    %v4021 = vmul.f32 %v4020, %v2305
    %v4022 = vmul.f32 %v4020, %v2306
    %4025 = vrot.lane.b32.xlu0 %v4021, 122
    %v4026 = vpop.permute.xlu0 %4025
    %4027 = vrot.lane.b32.xlu0 %v4022, 122
    %v4028 = vpop.permute.xlu0 %4027
    %v4031 = vadd.f32 %v4017, %v4026
    %v4032 = vadd.f32 %v4018, %v4028
    %s4033 = sld [smem:[#allocation9 + $0x3d]]
    %v4034 = vstv %s4033
    %v4035 = vmul.f32 %v4034, %v2298
    %v4036 = vmul.f32 %v4034, %v2299
    %v4037 = vmul.f32 %v4034, %v2300
    %v4041 = vrot.slane %v4035, 6
    %v4042 = vrot.slane %v4036, 6
    %v4043 = vsel %vm2821, %v4041, %v4042
    %v4044 = vrot.slane %v4037, 6
    %v4045 = vsel %vm2821, %v4042, %v4044
    %v4048 = vadd.f32 %v3969, %v4043
    %v4049 = vadd.f32 %v3970, %v4045
    %s4050 = sld [smem:[#allocation12 + $0x3d]]
    %v4051 = vstv %s4050
    %v4052 = vmul.f32 %v4051, %v2305
    %v4053 = vmul.f32 %v4051, %v2306
    %4056 = vrot.lane.b32.xlu0 %v4052, 122
    %v4057 = vpop.permute.xlu0 %4056
    %4058 = vrot.lane.b32.xlu0 %v4053, 122
    %v4059 = vpop.permute.xlu0 %4058
    %v4062 = vadd.f32 %v4048, %v4057
    %v4063 = vadd.f32 %v4049, %v4059
    %s4064 = sld [smem:[#allocation9 + $0x3e]]
    %v4065 = vstv %s4064
    %v4066 = vmul.f32 %v4065, %v2298
    %v4067 = vmul.f32 %v4065, %v2299
    %v4068 = vmul.f32 %v4065, %v2300
    %v4072 = vrot.slane %v4066, 6
    %v4073 = vrot.slane %v4067, 6
    %v4074 = vsel %vm2821, %v4072, %v4073
    %v4075 = vrot.slane %v4068, 6
    %v4076 = vsel %vm2821, %v4073, %v4075
    %v4079 = vadd.f32 %v4000, %v4074
    %v4080 = vadd.f32 %v4001, %v4076
    %s4081 = sld [smem:[#allocation12 + $0x3e]]
    %v4082 = vstv %s4081
    %v4083 = vmul.f32 %v4082, %v2305
    %v4084 = vmul.f32 %v4082, %v2306
    %4087 = vrot.lane.b32.xlu0 %v4083, 122
    %v4088 = vpop.permute.xlu0 %4087
    %4089 = vrot.lane.b32.xlu0 %v4084, 122
    %v4090 = vpop.permute.xlu0 %4089
    %v4093 = vadd.f32 %v4079, %v4088
    %v4094 = vadd.f32 %v4080, %v4090
    %vm4095 = vcmask 130048
    %4096 = vst.msk [vmem:[#allocation13] sm:$0xff] %vm4095, %v4031
    %4097 = vst.msk [vmem:[#allocation13 + $0x8] sm:$0xff] %vm4095, %v4032
    %s4098 = scalar_lea.vmem [#allocation13], 16
    %4099 = vst.msk [vmem:[%s4098] sm:$0xff] %vm4095, %v4062
    %4100 = vst.msk [vmem:[%s4098 + $0x8] sm:$0xff] %vm4095, %v4063
    %s4101 = scalar_lea.vmem [#allocation13], 32
    %4102 = vst.msk [vmem:[%s4101] sm:$0xff] %vm4095, %v4093
    %4103 = vst.msk [vmem:[%s4101 + $0x8] sm:$0xff] %vm4095, %v4094
    %4106 = vrot.lane.b32.xlu0 %v4031, 106
    %v4107 = vpop.permute.xlu0 %4106
    %4108 = vrot.lane.b32.xlu0 %v4032, 106
    %v4109 = vpop.permute.xlu0 %4108
    %s4112 = scalar_lea.vmem [#allocation13], 48
    %4113 = vst.msk [vmem:[%s4112] sm:$0xff] %vm4095, %v4107
    %4114 = vst.msk [vmem:[%s4112 + $0x8] sm:$0xff] %vm4095, %v4109
    %4117 = vrot.lane.b32.xlu0 %v4062, 106
    %v4118 = vpop.permute.xlu0 %4117
    %4119 = vrot.lane.b32.xlu0 %v4063, 106
    %v4120 = vpop.permute.xlu0 %4119
    %s4123 = scalar_lea.vmem [#allocation13], 64
    %4124 = vst.msk [vmem:[%s4123] sm:$0xff] %vm4095, %v4118
    %4125 = vst.msk [vmem:[%s4123 + $0x8] sm:$0xff] %vm4095, %v4120
    %4128 = vrot.lane.b32.xlu0 %v4093, 106
    %v4129 = vpop.permute.xlu0 %4128
    %4130 = vrot.lane.b32.xlu0 %v4094, 106
    %v4131 = vpop.permute.xlu0 %4130
    %s4134 = scalar_lea.vmem [#allocation13], 80
    %4135 = vst.msk [vmem:[%s4134] sm:$0xff] %vm4095, %v4129
    %4136 = vst.msk [vmem:[%s4134 + $0x8] sm:$0xff] %vm4095, %v4131
    // Predicated region
    $region42: #{tpu_custom_call.1} parent=1 // pred_check
      _
    $region43: #{tpu_custom_call.1} parent=1 // pred_check_branch
      %4138 = sbr.rel (0) target = $region45
    $region44: #{tpu_custom_call.1} parent=1 // pred_region
      %4140 = vsyncadd [#allocation5], 0
      %s4141 = sshll.u32 [#allocation13], 4
      %s4142 = int_to_ptr.vmem [resolvable:$true] %s4141
      %s4143 = sshll.u32 %s5, 4
      %s4144 = int_to_ptr.hbm [resolvable:$true] %s4143
      %4149 = dma.vmem_to_hbm [thread:$0]  %s4142, 1536, %s4144, [#allocation5], 128, 128, 8
    $region45: #{tpu_custom_call.1} parent=1 // pred_fallthru
      _
    // Predicated region
    $region46: #{tpu_custom_call.1} parent=1 // pred_check
      _
    $region47: #{tpu_custom_call.1} parent=1 // pred_check_branch
      %4151 = sbr.rel (0) target = $region49
    $region48: #{tpu_custom_call.1} parent=1 // pred_region
      %4153 = dma.done [#allocation5], 1536
    $region49: #{tpu_custom_call.1} parent=1 // pred_fallthru
      _
    %4154 = vsyncpa [#allocation4], 1
    %4155 = vsyncpa [#allocation5], 1
    %4156 = vsyncpa [#allocation6], 1
    %4157 = vsyncpa [#allocation7], 1
    %4158 = vsyncpa [#allocation11], 1

</llo_original>
